<compile_context>
chip_gen: v6e
topology: v6e:2x2x1
jax: 0.10.0
libtpu: 0.0.40
codegen_flags: <defaults>
</compile_context>

<pallas_src>
import functools

import jax
import jax.numpy as jnp
from jax import lax
from jax.experimental import pallas as pl
from jax.experimental.pallas import tpu as pltpu

EPS = 1e-5      # PyTorch BatchNorm2d default eps
LANE = 128      # channel padding target (lane-dense matmuls / unmasked stores)
MARGIN = 8      # sublane margin around the conv2 halo scratch


def _round_up(x, m):
    return (x + m - 1) // m * m


def _fold_bn_into_conv(w, conv_bias, bn_stats):
    """Fold inference-mode BatchNorm (and the conv bias) into the conv.

    `w` has its output channels on the last axis (IO / HWIO layouts)."""
    gamma, beta, mean, var = bn_stats
    scale = gamma / jnp.sqrt(var + EPS)
    return w * scale, beta + (conv_bias - mean) * scale


def make_block_params(key, in_channels, intermediate_channel, num_layer=50):
    assert num_layer in (50, 101, 152), "only bottleneck variant implemented"
    expansion = 4
    cout = intermediate_channel * expansion
    ks = jax.random.split(key, 12)

    def w(k, shape, scale=0.1):
        return scale * jax.random.normal(k, shape, jnp.float32)

    def bn(k, c):
        k1, k2, k3, k4 = jax.random.split(k, 4)
        gamma = 1.0 + 0.1 * jax.random.normal(k1, (c,), jnp.float32)
        beta = 0.1 * jax.random.normal(k2, (c,), jnp.float32)
        mean = 0.1 * jax.random.normal(k3, (c,), jnp.float32)
        var = jax.random.uniform(k4, (c,), jnp.float32, minval=0.5, maxval=1.5)
        return (gamma, beta, mean, var)

    p = {}
    p["w1"] = w(ks[0], (in_channels, intermediate_channel))                 # 1x1 conv1 (IO)
    p["b1"] = w(ks[1], (intermediate_channel,))
    p["bn1"] = bn(ks[2], intermediate_channel)
    p["w2"] = w(ks[3], (3, 3, intermediate_channel, intermediate_channel))  # 3x3 conv2 (HWIO)
    p["b2"] = w(ks[4], (intermediate_channel,))
    p["bn2"] = bn(ks[5], intermediate_channel)
    p["w3"] = w(ks[6], (intermediate_channel, cout))                        # 1x1 conv3 (IO)
    p["b3"] = w(ks[7], (cout,))
    p["bn3"] = bn(ks[8], cout)
    p["ws"] = w(ks[9], (in_channels, cout))                                 # 1x1 shortcut (IO)
    p["bs"] = w(ks[10], (cout,))
    p["bns"] = bn(ks[11], cout)
    return p


def _pick_row_tile(H, W, target_rows=512):
    """Largest whole-image-row tile (multiple of W flat rows) that divides H*W,
    is a multiple of 8 sublanes and is <= target_rows."""
    HW = H * W
    best = None
    for rows in range(1, H + 1):
        tq = rows * W
        if HW % tq == 0 and tq % 8 == 0 and tq <= target_rows:
            best = tq
    return best if best is not None else HW


def _block_kernel(x_ref, w1_ref, b1_ref, w2_ref, b2_ref, w3_ref, b3_ref,
                  ws_ref, bs_ref, out_ref, pad_ref, *, W, HW, TQ, cmid):
    EXT = TQ + 2 * W
    j = pl.program_id(1)

    xe = x_ref[0, 0]                                        # (EXT, Cin_p) bf16

    # conv1 (1x1, BN folded into weights) + bias + ReLU over the haloed rows.
    h1 = jnp.dot(xe, w1_ref[...], preferred_element_type=jnp.float32)
    h1 = jnp.maximum(h1 + b1_ref[...], 0.0)
    # Halo rows that fall outside the image must be exact zeros (zero-padding
    # semantics of the 3x3 conv), not conv1(0).
    g = j * TQ - W + lax.broadcasted_iota(jnp.int32, (EXT, 1), 0)
    h1 = jnp.where((g >= 0) & (g < HW), h1, 0.0)

    # Stage h1 into a margin-padded VMEM scratch so every conv2 tap is a plain
    # static-offset slice (no pltpu.roll through the XLU).
    zeros_m = jnp.zeros((MARGIN, cmid), jnp.bfloat16)
    pad_ref[0:MARGIN, :] = zeros_m
    pad_ref[MARGIN + EXT:MARGIN + EXT + MARGIN, :] = zeros_m
    pad_ref[MARGIN:MARGIN + EXT, :] = h1.astype(jnp.bfloat16)

    # conv2 (3x3, pad=1, BN folded): im2col slab -> ONE large-K MXU matmul.
    col = lax.broadcasted_iota(jnp.int32, (TQ, 1), 0) % W
    not_left = col >= 1           # dx = -1 is valid
    not_right = col < W - 1       # dx = +1 is valid
    taps = []
    for t in range(9):
        dy, dx = t // 3 - 1, t % 3 - 1
        tap = pad_ref[pl.ds(MARGIN + W + dy * W + dx, TQ), :]
        if dx == -1:
            tap = jnp.where(not_left, tap, jnp.zeros_like(tap))
        elif dx == 1:
            tap = jnp.where(not_right, tap, jnp.zeros_like(tap))
        taps.append(tap)
    slab = jnp.concatenate(taps, axis=1)                    # (TQ, 9*Cmid_p) bf16
    h2 = jnp.dot(slab, w2_ref[...], preferred_element_type=jnp.float32)
    h2 = jnp.maximum(h2 + b2_ref[...], 0.0).astype(jnp.bfloat16)

    # conv3 (1x1, BN folded) + ReLU (the module applies ReLU *before* the
    # residual add, so conv3 and the shortcut cannot be fused into one matmul).
    h3 = jnp.dot(h2, w3_ref[...], preferred_element_type=jnp.float32)
    h3 = jnp.maximum(h3 + b3_ref[...], 0.0)

    # Shortcut 1x1 conv + BN (no ReLU) on the interior rows, residual add.
    xi = xe[W:W + TQ, :]                                    # (TQ, Cin_p) bf16
    sc = jnp.dot(xi, ws_ref[...], preferred_element_type=jnp.float32) + bs_ref[...]

    out_ref[0] = (h3 + sc).astype(out_ref.dtype)


def block_forward_pallas(x_nchw, p, row_tile=None):
    N, Cin, H, W = x_nchw.shape
    Cmid = p["w1"].shape[1]
    Cout = p["w3"].shape[1]
    HW = H * W

    # Fold BN (+ conv bias) into conv weights/biases at trace time.
    w1, b1 = _fold_bn_into_conv(p["w1"], p["b1"], p["bn1"])
    w2, b2 = _fold_bn_into_conv(p["w2"], p["b2"], p["bn2"])
    w3, b3 = _fold_bn_into_conv(p["w3"], p["b3"], p["bn3"])
    ws, bs = _fold_bn_into_conv(p["ws"], p["bs"], p["bns"])

    # Lane-dense channel padding + bf16 weight casts.
    cin_p, cmid_p, cout_p = (_round_up(c, LANE) for c in (Cin, Cmid, Cout))

    def pad2(a, r, c):
        return jnp.pad(a, ((0, r - a.shape[0]), (0, c - a.shape[1])))

    w1p = pad2(w1, cin_p, cmid_p).astype(jnp.bfloat16)
    w3p = pad2(w3, cmid_p, cout_p).astype(jnp.bfloat16)
    wsp = pad2(ws, cin_p, cout_p).astype(jnp.bfloat16)
    w2p = jnp.pad(w2, ((0, 0), (0, 0), (0, cmid_p - Cmid), (0, cmid_p - Cmid)))
    w2p = w2p.reshape(9 * cmid_p, cmid_p).astype(jnp.bfloat16)  # tap-major K
    b1p = jnp.pad(b1, (0, cmid_p - Cmid)).reshape(1, cmid_p).astype(jnp.float32)
    b2p = jnp.pad(b2, (0, cmid_p - Cmid)).reshape(1, cmid_p).astype(jnp.float32)
    b3p = jnp.pad(b3, (0, cout_p - Cout)).reshape(1, cout_p).astype(jnp.float32)
    bsp = jnp.pad(bs, (0, cout_p - Cout)).reshape(1, cout_p).astype(jnp.float32)

    # Spatial row tiling (whole image rows) with a one-image-row halo.
    TQ = row_tile if row_tile is not None else _pick_row_tile(H, W)
    assert HW % TQ == 0 and TQ % W == 0 and (TQ % 8 == 0 or TQ == HW)
    n_tiles = HW // TQ
    EXT = TQ + 2 * W

    # NCHW -> (N, HW, Cin_p) bf16, then pre-gather overlapping haloed row tiles.
    x = jnp.transpose(x_nchw, (0, 2, 3, 1)).reshape(N, HW, Cin)
    x = jnp.pad(x, ((0, 0), (W, W), (0, cin_p - Cin))).astype(jnp.bfloat16)
    x_halo = jnp.stack(
        [lax.dynamic_slice_in_dim(x, j * TQ, EXT, axis=1) for j in range(n_tiles)],
        axis=1)                                             # (N, n_tiles, EXT, Cin_p)

    kernel = functools.partial(_block_kernel, W=W, HW=HW, TQ=TQ, cmid=cmid_p)

    weights = (w1p, b1p, w2p, b2p, w3p, b3p, wsp, bsp)

    def const_spec(a):
        nd = a.ndim
        return pl.BlockSpec(a.shape, lambda n, j, nd=nd: (0,) * nd)

    flops = 2 * N * HW * (cin_p * cmid_p + 9 * cmid_p * cmid_p
                          + cmid_p * cout_p + cin_p * cout_p)
    bytes_accessed = (x_halo.size * 2
                      + sum(w.size * w.dtype.itemsize for w in weights)
                      + N * HW * cout_p * 4)

    out = pl.pallas_call(
        kernel,
        out_shape=jax.ShapeDtypeStruct((N, HW, cout_p), jnp.float32),
        grid=(N, n_tiles),
        in_specs=[pl.BlockSpec((1, 1, EXT, cin_p), lambda n, j: (n, j, 0, 0))]
                 + [const_spec(w) for w in weights],
        out_specs=pl.BlockSpec((1, TQ, cout_p), lambda n, j: (n, j, 0)),
        scratch_shapes=[pltpu.VMEM((EXT + 2 * MARGIN, cmid_p), jnp.bfloat16)],
        compiler_params=pltpu.CompilerParams(
            dimension_semantics=("parallel", "parallel"),
            vmem_limit_bytes=48 * 1024 * 1024),
        cost_estimate=pl.CostEstimate(flops=flops, transcendentals=0,
                                      bytes_accessed=bytes_accessed),
    )(x_halo, *weights)

    out = out[:, :, :Cout].reshape(N, H, W, Cout)
    return jnp.transpose(out, (0, 3, 1, 2))


def block_forward_ref(x_nchw, p):
    """Pure-JAX reference (lax.conv, f32) of the same eval-mode forward pass."""
    x = jnp.transpose(x_nchw, (0, 2, 3, 1)).astype(jnp.float32)

    def conv(h, w_hwio, b, pad):
        y = lax.conv_general_dilated(
            h, w_hwio, window_strides=(1, 1), padding=pad,
            dimension_numbers=("NHWC", "HWIO", "NHWC"),
            precision=lax.Precision.HIGHEST)
        return y + b

    def bn(h, stats):
        gamma, beta, mean, var = stats
        return (h - mean) / jnp.sqrt(var + EPS) * gamma + beta

    h = jax.nn.relu(bn(conv(x, p["w1"][None, None], p["b1"], "VALID"), p["bn1"]))
    h = jax.nn.relu(bn(conv(h, p["w2"], p["b2"], ((1, 1), (1, 1))), p["bn2"]))
    h = jax.nn.relu(bn(conv(h, p["w3"][None, None], p["b3"], "VALID"), p["bn3"]))
    sc = bn(conv(x, p["ws"][None, None], p["bs"], "VALID"), p["bns"])
    return jnp.transpose(h + sc, (0, 3, 1, 2))


if __name__ == "__main__":
    key = jax.random.PRNGKey(0)
    kx, kp = jax.random.split(key)

    N, Cin, H, W = 2, 4, 16, 16
    Cmid = 8                      # bottleneck: Cout = 4 * Cmid = 32
    x = jax.random.normal(kx, (N, Cin, H, W), jnp.float32)
    params = make_block_params(kp, Cin, Cmid, num_layer=50)

    fwd = jax.jit(functools.partial(block_forward_pallas, row_tile=128))
    out = jax.block_until_ready(fwd(x, params))
    assert out.shape == (N, 4 * Cmid, H, W)

    ref = block_forward_ref(x, params)
    max_err = float(jnp.max(jnp.abs(out - ref)))
    if not jnp.allclose(out, ref, atol=5e-2, rtol=5e-2):
        raise AssertionError(f"Pallas kernel mismatch vs reference, max abs err = {max_err}")
    print("KERNEL_OK")
</pallas_src>

<mosaic_0001>
module attributes {stable_mosaic.version = 11 : i64} {
  func.func @_block_kernel(%arg0: i32, %arg1: i32, %arg2: memref<1x1x160x128xbf16, #tpu.memory_space<vmem>>, %arg3: memref<128x128xbf16, #tpu.memory_space<vmem>>, %arg4: memref<1x128xf32, #tpu.memory_space<vmem>>, %arg5: memref<1152x128xbf16, #tpu.memory_space<vmem>>, %arg6: memref<1x128xf32, #tpu.memory_space<vmem>>, %arg7: memref<128x128xbf16, #tpu.memory_space<vmem>>, %arg8: memref<1x128xf32, #tpu.memory_space<vmem>>, %arg9: memref<128x128xbf16, #tpu.memory_space<vmem>>, %arg10: memref<1x128xf32, #tpu.memory_space<vmem>>, %arg11: memref<1x128x128xf32, #tpu.memory_space<vmem>>, %arg12: memref<176x128xbf16, #tpu.memory_space<vmem>>) attributes {dimension_semantics = [#tpu.dimension_semantics<parallel>, #tpu.dimension_semantics<parallel>], iteration_bounds = array<i64: 2, 2>, scalar_prefetch = 0 : i64, scratch_operands = 1 : i64, tpu.core_type = #tpu.core_type<tc>, window_params = [{transform_indices = @transform_0, window_bounds = array<i64: 1, 1, 160, 128>}, {pipeline_mode = #tpu.pipeline_mode<synchronous>, transform_indices = @transform_1, window_bounds = array<i64: 128, 128>}, {pipeline_mode = #tpu.pipeline_mode<synchronous>, transform_indices = @transform_2, window_bounds = array<i64: 1, 128>}, {pipeline_mode = #tpu.pipeline_mode<synchronous>, transform_indices = @transform_3, window_bounds = array<i64: 1152, 128>}, {pipeline_mode = #tpu.pipeline_mode<synchronous>, transform_indices = @transform_4, window_bounds = array<i64: 1, 128>}, {pipeline_mode = #tpu.pipeline_mode<synchronous>, transform_indices = @transform_5, window_bounds = array<i64: 128, 128>}, {pipeline_mode = #tpu.pipeline_mode<synchronous>, transform_indices = @transform_6, window_bounds = array<i64: 1, 128>}, {pipeline_mode = #tpu.pipeline_mode<synchronous>, transform_indices = @transform_7, window_bounds = array<i64: 128, 128>}, {pipeline_mode = #tpu.pipeline_mode<synchronous>, transform_indices = @transform_8, window_bounds = array<i64: 1, 128>}, {transform_indices = @transform_9, window_bounds = array<i64: 1, 128, 128>}]} {
    %c0 = arith.constant 0 : index
    %c0_0 = arith.constant 0 : index
    %c0_1 = arith.constant 0 : index
    %c0_2 = arith.constant 0 : index
    %0 = vector.load %arg2[%c0, %c0_0, %c0_1, %c0_2] : memref<1x1x160x128xbf16, #tpu.memory_space<vmem>>, vector<1x1x160x128xbf16>
    %1 = vector.shape_cast %0 : vector<1x1x160x128xbf16> to vector<160x128xbf16>
    %c0_3 = arith.constant 0 : index
    %c0_4 = arith.constant 0 : index
    %2 = vector.load %arg3[%c0_3, %c0_4] : memref<128x128xbf16, #tpu.memory_space<vmem>>, vector<128x128xbf16>
    %cst = arith.constant dense<0.000000e+00> : vector<160x128xf32>
    %3 = tpu.matmul %1, %2, %cst {dimension_numbers = #tpu.dot_dimension_numbers<[1], [0], [0], [1], [0, 0, 1, 1], [], []>} : vector<160x128xbf16>, vector<128x128xbf16>, vector<160x128xf32> -> vector<160x128xf32>
    %c0_5 = arith.constant 0 : index
    %c0_6 = arith.constant 0 : index
    %4 = vector.load %arg4[%c0_5, %c0_6] : memref<1x128xf32, #tpu.memory_space<vmem>>, vector<1x128xf32>
    %5 = vector.broadcast %4 : vector<1x128xf32> to vector<160x128xf32>
    %6 = arith.addf %3, %5 : vector<160x128xf32>
    %cst_7 = arith.constant 0.000000e+00 : f32
    %7 = vector.broadcast %cst_7 : f32 to vector<160x128xf32>
    %8 = arith.maximumf %6, %7 : vector<160x128xf32>
    %c128_i32 = arith.constant 128 : i32
    %9 = arith.muli %arg1, %c128_i32 : i32
    %c16_i32 = arith.constant 16 : i32
    %10 = arith.subi %9, %c16_i32 : i32
    %11 = tpu.iota {dimensions = array<i32: 0>} : vector<160x1xi32>
    %12 = vector.broadcast %10 : i32 to vector<160x1xi32>
    %13 = arith.addi %12, %11 : vector<160x1xi32>
    %c0_i32 = arith.constant 0 : i32
    %14 = vector.broadcast %c0_i32 : i32 to vector<160x1xi32>
    %15 = arith.cmpi sge, %13, %14 : vector<160x1xi32>
    %c256_i32 = arith.constant 256 : i32
    %16 = vector.broadcast %c256_i32 : i32 to vector<160x1xi32>
    %17 = arith.cmpi slt, %13, %16 : vector<160x1xi32>
    %18 = arith.andi %15, %17 : vector<160x1xi1>
    %cst_8 = arith.constant 0.000000e+00 : f32
    %19 = vector.shape_cast %18 : vector<160x1xi1> to vector<160x1xi1>
    %20 = vector.broadcast %19 : vector<160x1xi1> to vector<160x128xi1>
    %21 = vector.broadcast %cst_8 : f32 to vector<160x128xf32>
    %22 = arith.select %20, %8, %21 : vector<160x128xi1>, vector<160x128xf32>
    %cst_9 = arith.constant 0.000000e+00 : bf16
    %23 = vector.broadcast %cst_9 : bf16 to vector<8x128xbf16>
    %c0_10 = arith.constant 0 : index
    %c0_11 = arith.constant 0 : index
    %24 = vector.load %arg12[%c0_10, %c0_11] : memref<176x128xbf16, #tpu.memory_space<vmem>>, vector<8x128xbf16>
    tpu.vector_store %arg12[%c0_10, %c0_11], %23 {strides = array<i32>} : memref<176x128xbf16, #tpu.memory_space<vmem>>, vector<8x128xbf16>,
    %c168 = arith.constant 168 : index
    %c0_12 = arith.constant 0 : index
    %25 = vector.load %arg12[%c168, %c0_12] : memref<176x128xbf16, #tpu.memory_space<vmem>>, vector<8x128xbf16>
    tpu.vector_store %arg12[%c168, %c0_12], %23 {strides = array<i32>} : memref<176x128xbf16, #tpu.memory_space<vmem>>, vector<8x128xbf16>,
    %26 = arith.truncf %22 : vector<160x128xf32> to vector<160x128xbf16>
    %c8 = arith.constant 8 : index
    %c0_13 = arith.constant 0 : index
    %27 = vector.load %arg12[%c8, %c0_13] : memref<176x128xbf16, #tpu.memory_space<vmem>>, vector<160x128xbf16>
    tpu.vector_store %arg12[%c8, %c0_13], %26 {strides = array<i32>} : memref<176x128xbf16, #tpu.memory_space<vmem>>, vector<160x128xbf16>,
    %28 = tpu.iota {dimensions = array<i32: 0>} : vector<128x1xi32>
    %c16_i32_14 = arith.constant 16 : i32
    %c0_i32_15 = arith.constant 0 : i32
    %29 = arith.cmpi eq, %c16_i32_14, %c0_i32_15 : i32
    %c1_i32 = arith.constant 1 : i32
    %30 = arith.select %29, %c1_i32, %c16_i32_14 : i32
    %31 = vector.broadcast %30 : i32 to vector<128x1xi32>
    %32 = arith.remsi %28, %31 : vector<128x1xi32>
    %c0_i32_16 = arith.constant 0 : i32
    %33 = vector.broadcast %c0_i32_16 : i32 to vector<128x1xi32>
    %34 = arith.cmpi ne, %32, %33 : vector<128x1xi32>
    %c0_i32_17 = arith.constant 0 : i32
    %35 = vector.broadcast %c0_i32_17 : i32 to vector<128x1xi32>
    %36 = arith.cmpi slt, %32, %35 : vector<128x1xi32>
    %c0_i32_18 = arith.constant 0 : i32
    %37 = arith.cmpi slt, %30, %c0_i32_18 : i32
    %38 = vector.broadcast %37 : i1 to vector<128x1xi1>
    %39 = vector.broadcast %38 : vector<128x1xi1> to vector<128x1xi1>
    %40 = arith.xori %36, %39 : vector<128x1xi1>
    %41 = arith.andi %40, %34 : vector<128x1xi1>
    %42 = vector.broadcast %30 : i32 to vector<128x1xi32>
    %43 = arith.addi %32, %42 : vector<128x1xi32>
    %44 = arith.select %41, %43, %32 : vector<128x1xi1>, vector<128x1xi32>
    %c1_i32_19 = arith.constant 1 : i32
    %45 = vector.broadcast %c1_i32_19 : i32 to vector<128x1xi32>
    %46 = arith.cmpi sge, %44, %45 : vector<128x1xi32>
    %c15_i32 = arith.constant 15 : i32
    %47 = vector.broadcast %c15_i32 : i32 to vector<128x1xi32>
    %48 = arith.cmpi slt, %44, %47 : vector<128x1xi32>
    %c7 = arith.constant 7 : index
    %c0_20 = arith.constant 0 : index
    %49 = vector.load %arg12[%c7, %c0_20] : memref<176x128xbf16, #tpu.memory_space<vmem>>, vector<128x128xbf16>
    %cst_21 = arith.constant 0.000000e+00 : bf16
    %50 = vector.broadcast %cst_21 : bf16 to vector<128x128xbf16>
    %51 = vector.shape_cast %46 : vector<128x1xi1> to vector<128x1xi1>
    %52 = vector.broadcast %51 : vector<128x1xi1> to vector<128x128xi1>
    %53 = arith.select %52, %49, %50 : vector<128x128xi1>, vector<128x128xbf16>
    %c8_22 = arith.constant 8 : index
    %c0_23 = arith.constant 0 : index
    %54 = vector.load %arg12[%c8_22, %c0_23] : memref<176x128xbf16, #tpu.memory_space<vmem>>, vector<128x128xbf16>
    %c9 = arith.constant 9 : index
    %c0_24 = arith.constant 0 : index
    %55 = vector.load %arg12[%c9, %c0_24] : memref<176x128xbf16, #tpu.memory_space<vmem>>, vector<128x128xbf16>
    %cst_25 = arith.constant 0.000000e+00 : bf16
    %56 = vector.broadcast %cst_25 : bf16 to vector<128x128xbf16>
    %57 = vector.shape_cast %48 : vector<128x1xi1> to vector<128x1xi1>
    %58 = vector.broadcast %57 : vector<128x1xi1> to vector<128x128xi1>
    %59 = arith.select %58, %55, %56 : vector<128x128xi1>, vector<128x128xbf16>
    %c23 = arith.constant 23 : index
    %c0_26 = arith.constant 0 : index
    %60 = vector.load %arg12[%c23, %c0_26] : memref<176x128xbf16, #tpu.memory_space<vmem>>, vector<128x128xbf16>
    %cst_27 = arith.constant 0.000000e+00 : bf16
    %61 = vector.broadcast %cst_27 : bf16 to vector<128x128xbf16>
    %62 = vector.shape_cast %46 : vector<128x1xi1> to vector<128x1xi1>
    %63 = vector.broadcast %62 : vector<128x1xi1> to vector<128x128xi1>
    %64 = arith.select %63, %60, %61 : vector<128x128xi1>, vector<128x128xbf16>
    %c24 = arith.constant 24 : index
    %c0_28 = arith.constant 0 : index
    %65 = vector.load %arg12[%c24, %c0_28] : memref<176x128xbf16, #tpu.memory_space<vmem>>, vector<128x128xbf16>
    %c25 = arith.constant 25 : index
    %c0_29 = arith.constant 0 : index
    %66 = vector.load %arg12[%c25, %c0_29] : memref<176x128xbf16, #tpu.memory_space<vmem>>, vector<128x128xbf16>
    %cst_30 = arith.constant 0.000000e+00 : bf16
    %67 = vector.broadcast %cst_30 : bf16 to vector<128x128xbf16>
    %68 = vector.shape_cast %48 : vector<128x1xi1> to vector<128x1xi1>
    %69 = vector.broadcast %68 : vector<128x1xi1> to vector<128x128xi1>
    %70 = arith.select %69, %66, %67 : vector<128x128xi1>, vector<128x128xbf16>
    %c39 = arith.constant 39 : index
    %c0_31 = arith.constant 0 : index
    %71 = vector.load %arg12[%c39, %c0_31] : memref<176x128xbf16, #tpu.memory_space<vmem>>, vector<128x128xbf16>
    %cst_32 = arith.constant 0.000000e+00 : bf16
    %72 = vector.broadcast %cst_32 : bf16 to vector<128x128xbf16>
    %73 = vector.shape_cast %46 : vector<128x1xi1> to vector<128x1xi1>
    %74 = vector.broadcast %73 : vector<128x1xi1> to vector<128x128xi1>
    %75 = arith.select %74, %71, %72 : vector<128x128xi1>, vector<128x128xbf16>
    %c40 = arith.constant 40 : index
    %c0_33 = arith.constant 0 : index
    %76 = vector.load %arg12[%c40, %c0_33] : memref<176x128xbf16, #tpu.memory_space<vmem>>, vector<128x128xbf16>
    %c41 = arith.constant 41 : index
    %c0_34 = arith.constant 0 : index
    %77 = vector.load %arg12[%c41, %c0_34] : memref<176x128xbf16, #tpu.memory_space<vmem>>, vector<128x128xbf16>
    %cst_35 = arith.constant 0.000000e+00 : bf16
    %78 = vector.broadcast %cst_35 : bf16 to vector<128x128xbf16>
    %79 = vector.shape_cast %48 : vector<128x1xi1> to vector<128x1xi1>
    %80 = vector.broadcast %79 : vector<128x1xi1> to vector<128x128xi1>
    %81 = arith.select %80, %77, %78 : vector<128x128xi1>, vector<128x128xbf16>
    %82 = tpu.concatenate %53, %54, %59, %64, %65, %70, %75, %76, %81 in 1 : vector<128x128xbf16>, vector<128x128xbf16>, vector<128x128xbf16>, vector<128x128xbf16>, vector<128x128xbf16>, vector<128x128xbf16>, vector<128x128xbf16>, vector<128x128xbf16>, vector<128x128xbf16> -> vector<128x1152xbf16>
    %c0_36 = arith.constant 0 : index
    %c0_37 = arith.constant 0 : index
    %83 = vector.load %arg5[%c0_36, %c0_37] : memref<1152x128xbf16, #tpu.memory_space<vmem>>, vector<1152x128xbf16>
    %cst_38 = arith.constant dense<0.000000e+00> : vector<128x128xf32>
    %84 = tpu.matmul %82, %83, %cst_38 {dimension_numbers = #tpu.dot_dimension_numbers<[1], [0], [0], [1], [0, 0, 1, 1], [], []>} : vector<128x1152xbf16>, vector<1152x128xbf16>, vector<128x128xf32> -> vector<128x128xf32>
    %c0_39 = arith.constant 0 : index
    %c0_40 = arith.constant 0 : index
    %85 = vector.load %arg6[%c0_39, %c0_40] : memref<1x128xf32, #tpu.memory_space<vmem>>, vector<1x128xf32>
    %86 = vector.broadcast %85 : vector<1x128xf32> to vector<128x128xf32>
    %87 = arith.addf %84, %86 : vector<128x128xf32>
    %cst_41 = arith.constant 0.000000e+00 : f32
    %88 = vector.broadcast %cst_41 : f32 to vector<128x128xf32>
    %89 = arith.maximumf %87, %88 : vector<128x128xf32>
    %90 = arith.truncf %89 : vector<128x128xf32> to vector<128x128xbf16>
    %c0_42 = arith.constant 0 : index
    %c0_43 = arith.constant 0 : index
    %91 = vector.load %arg7[%c0_42, %c0_43] : memref<128x128xbf16, #tpu.memory_space<vmem>>, vector<128x128xbf16>
    %cst_44 = arith.constant dense<0.000000e+00> : vector<128x128xf32>
    %92 = tpu.matmul %90, %91, %cst_44 {dimension_numbers = #tpu.dot_dimension_numbers<[1], [0], [0], [1], [0, 0, 1, 1], [], []>} : vector<128x128xbf16>, vector<128x128xbf16>, vector<128x128xf32> -> vector<128x128xf32>
    %c0_45 = arith.constant 0 : index
    %c0_46 = arith.constant 0 : index
    %93 = vector.load %arg8[%c0_45, %c0_46] : memref<1x128xf32, #tpu.memory_space<vmem>>, vector<1x128xf32>
    %94 = vector.broadcast %93 : vector<1x128xf32> to vector<128x128xf32>
    %95 = arith.addf %92, %94 : vector<128x128xf32>
    %cst_47 = arith.constant 0.000000e+00 : f32
    %96 = vector.broadcast %cst_47 : f32 to vector<128x128xf32>
    %97 = arith.maximumf %95, %96 : vector<128x128xf32>
    %98 = vector.extract_strided_slice %1 {offsets = [16, 0], sizes = [128, 128], strides = [1, 1]} : vector<160x128xbf16> to vector<128x128xbf16>
    %c0_48 = arith.constant 0 : index
    %c0_49 = arith.constant 0 : index
    %99 = vector.load %arg9[%c0_48, %c0_49] : memref<128x128xbf16, #tpu.memory_space<vmem>>, vector<128x128xbf16>
    %cst_50 = arith.constant dense<0.000000e+00> : vector<128x128xf32>
    %100 = tpu.matmul %98, %99, %cst_50 {dimension_numbers = #tpu.dot_dimension_numbers<[1], [0], [0], [1], [0, 0, 1, 1], [], []>} : vector<128x128xbf16>, vector<128x128xbf16>, vector<128x128xf32> -> vector<128x128xf32>
    %c0_51 = arith.constant 0 : index
    %c0_52 = arith.constant 0 : index
    %101 = vector.load %arg10[%c0_51, %c0_52] : memref<1x128xf32, #tpu.memory_space<vmem>>, vector<1x128xf32>
    %102 = vector.broadcast %101 : vector<1x128xf32> to vector<128x128xf32>
    %103 = arith.addf %100, %102 : vector<128x128xf32>
    %104 = arith.addf %97, %103 : vector<128x128xf32>
    %c0_53 = arith.constant 0 : index
    %c0_54 = arith.constant 0 : index
    %c0_55 = arith.constant 0 : index
    %105 = vector.load %arg11[%c0_53, %c0_54, %c0_55] : memref<1x128x128xf32, #tpu.memory_space<vmem>>, vector<1x128x128xf32>
    %106 = vector.shape_cast %105 : vector<1x128x128xf32> to vector<128x128xf32>
    %107 = vector.shape_cast %104 : vector<128x128xf32> to vector<1x128x128xf32>
    tpu.vector_store %arg11[%c0_53, %c0_54, %c0_55], %107 {strides = array<i32>} : memref<1x128x128xf32, #tpu.memory_space<vmem>>, vector<1x128x128xf32>,
    return
  }
  func.func @transform_0(%arg0: i32, %arg1: i32) -> (i32, i32, i32, i32) {
    %c0_i32 = arith.constant 0 : i32
    %c0_i32_0 = arith.constant 0 : i32
    %c0_i32_1 = arith.constant 0 : i32
    return %arg0, %arg1, %c0_i32, %c0_i32_0 : i32, i32, i32, i32
  }
  func.func @transform_1(%arg0: i32, %arg1: i32) -> (i32, i32) {
    %c0_i32 = arith.constant 0 : i32
    %c0_i32_0 = arith.constant 0 : i32
    %c0_i32_1 = arith.constant 0 : i32
    return %c0_i32, %c0_i32_0 : i32, i32
  }
  func.func @transform_2(%arg0: i32, %arg1: i32) -> (i32, i32) {
    %c0_i32 = arith.constant 0 : i32
    %c0_i32_0 = arith.constant 0 : i32
    %c0_i32_1 = arith.constant 0 : i32
    return %c0_i32, %c0_i32_0 : i32, i32
  }
  func.func @transform_3(%arg0: i32, %arg1: i32) -> (i32, i32) {
    %c0_i32 = arith.constant 0 : i32
    %c0_i32_0 = arith.constant 0 : i32
    %c0_i32_1 = arith.constant 0 : i32
    return %c0_i32, %c0_i32_0 : i32, i32
  }
  func.func @transform_4(%arg0: i32, %arg1: i32) -> (i32, i32) {
    %c0_i32 = arith.constant 0 : i32
    %c0_i32_0 = arith.constant 0 : i32
    %c0_i32_1 = arith.constant 0 : i32
    return %c0_i32, %c0_i32_0 : i32, i32
  }
  func.func @transform_5(%arg0: i32, %arg1: i32) -> (i32, i32) {
    %c0_i32 = arith.constant 0 : i32
    %c0_i32_0 = arith.constant 0 : i32
    %c0_i32_1 = arith.constant 0 : i32
    return %c0_i32, %c0_i32_0 : i32, i32
  }
  func.func @transform_6(%arg0: i32, %arg1: i32) -> (i32, i32) {
    %c0_i32 = arith.constant 0 : i32
    %c0_i32_0 = arith.constant 0 : i32
    %c0_i32_1 = arith.constant 0 : i32
    return %c0_i32, %c0_i32_0 : i32, i32
  }
  func.func @transform_7(%arg0: i32, %arg1: i32) -> (i32, i32) {
    %c0_i32 = arith.constant 0 : i32
    %c0_i32_0 = arith.constant 0 : i32
    %c0_i32_1 = arith.constant 0 : i32
    return %c0_i32, %c0_i32_0 : i32, i32
  }
  func.func @transform_8(%arg0: i32, %arg1: i32) -> (i32, i32) {
    %c0_i32 = arith.constant 0 : i32
    %c0_i32_0 = arith.constant 0 : i32
    %c0_i32_1 = arith.constant 0 : i32
    return %c0_i32, %c0_i32_0 : i32, i32
  }
  func.func @transform_9(%arg0: i32, %arg1: i32) -> (i32, i32, i32) {
    %c0_i32 = arith.constant 0 : i32
    %c0_i32_0 = arith.constant 0 : i32
    return %arg0, %arg1, %c0_i32 : i32, i32, i32
  }
}

</mosaic_0001>

<llo_original>
// kernel: block_forward_pallas.1
$region0: #{block_forward_pallas.1}
  #allocation0 [shape = 'u32[]', space=smem, size = 0x4, offset = 0x4, fixed_abs, tag = 'smem constant byte address 0x4 - core index']
  #allocation1 [shape = 'u32[144,128]{1,0:T(1,128)}', space=vmem, size = 0x12000, scoped, tag = 'internal scratch']
  #allocation2 [shape = 'bf16[176,128]{1,0:T(8,128)(2,1)}', space=vmem, size = 0xb000, scoped, tag = 'scratch operand']
  %s0 = inlined_call_operand.vmem [shape: bf16[2,2,160,128], index: 0, kind: input, shape index: {}]
  %s1 = inlined_call_operand.vmem [shape: bf16[128,128], index: 1, kind: input, shape index: {}]
  %s2 = inlined_call_operand.vmem [shape: f32[1,128], index: 2, kind: input, shape index: {}]
  %s3 = inlined_call_operand.vmem [shape: bf16[1152,128], index: 3, kind: input, shape index: {}]
  %s4 = inlined_call_operand.vmem [shape: f32[1,128], index: 4, kind: input, shape index: {}]
  %s5 = inlined_call_operand.vmem [shape: bf16[128,128], index: 5, kind: input, shape index: {}]
  %s6 = inlined_call_operand.vmem [shape: f32[1,128], index: 6, kind: input, shape index: {}]
  %s7 = inlined_call_operand.vmem [shape: bf16[128,128], index: 7, kind: input, shape index: {}]
  %s8 = inlined_call_operand.vmem [shape: f32[1,128], index: 8, kind: input, shape index: {}]
  %s9 = inlined_call_operand.hbm [shape: f32[2,256,128], index: 9, kind: output, shape index: {}]
  %s10 = sld [smem:[#allocation0]]
  $region69: #{block_forward_pallas.1} parent=0
    _
  %s12 = ssub.s32 1, %s10
  %s13 = scalar_select 0, %s12, %s10
  $region1: #{block_forward_pallas.1} parent=0
    #allocation3 [shape = 'u8[131072]{0}', space=vmem, size = 0x20000, scoped, tag = 'output window, operand 0']
    #allocation4 [shape = 's32[2]{0}', space=sflag, size = 0x8, scoped, tag = 'scoped memory for block_forward_pallas.1']
    %14 = vsyncpa [#allocation4], 0
    %s15 = scalar_lea.sflag [#allocation4], 1
    %16 = vsyncpa %s15, 0
    loop: start=0, step=1, limit=6
    $region2: #{block_forward_pallas.1} parent=1 // loop_pre_header
      _
    $region3: #{block_forward_pallas.1} parent=1 // loop_header
      %s18 = sphi 0, %s22
      %p19 = scmp.ge.s32.totalorder %s18, 6
      %s25 = sphi 0, %s37
      %s26 = sphi 0, %s33
      %s27 = sphi 0, %s25
      %s28 = sphi 0, %s26
      %s29 = sphi 0, %s27
      %s30 = sphi 0, %s28
      %s42 = sphi 0, %s44
      %s45 = sphi 0, %s42
      %s46 = sphi 0, %s45
      %s62 = sphi 0, %s46
      %s66 = sphi 0, %s66
      %s68 = sphi 0, %s66
      %s69 = sphi 0, %s68
      %s83 = sphi 0, %s69
      %s87 = sphi 0, %s87
      %s89 = sphi 0, %s87
      %s90 = sphi 0, %s89
      %s104 = sphi 0, %s90
      %s108 = sphi 0, %s108
      %s110 = sphi 0, %s108
      %s111 = sphi 0, %s110
      %s125 = sphi 0, %s111
      %s129 = sphi 0, %s129
      %s131 = sphi 0, %s129
      %s132 = sphi 0, %s131
      %s146 = sphi 0, %s132
      %s150 = sphi 0, %s150
      %s152 = sphi 0, %s150
      %s153 = sphi 0, %s152
      %s167 = sphi 0, %s153
      %s171 = sphi 0, %s171
      %s173 = sphi 0, %s171
      %s174 = sphi 0, %s173
      %s188 = sphi 0, %s174
      %s192 = sphi 0, %s192
      %s194 = sphi 0, %s192
      %s195 = sphi 0, %s194
      %s209 = sphi 0, %s195
      %s213 = sphi 0, %s213
      %s215 = sphi 0, %s213
      %s216 = sphi 0, %s215
      %s230 = sphi 0, %s216
      %s238 = sphi 0, %s240
      %s241 = sphi 0, %s238
      %s242 = sphi 0, %s241
      %s258 = sphi 0, %s242
    $region4: #{block_forward_pallas.1} parent=1 // loop_header_branch
      %21 = sbr.rel (%p19) target = $region8
    $region5: #{block_forward_pallas.1} parent=1 // loop_body
      %s23 = ssub.s32 %s18, 1
      %s24 = ssub.s32 %s18, 2
      %s31 = sadd.s32 1, %s26
      %p32 = scmp.ge.s32.totalorder %s31, 2
      %s33 = scalar_select %p32, 0, %s31
      %s34 = sadd.s32 1, %s25
      %s35 = scalar_select %p32, %s34, %s25
      %p36 = scmp.ge.s32.totalorder %s35, 2
      %s37 = scalar_select %p36, 0, %s35
      %s38 = ssub.s32 %s25, %s37
      %s39 = ssub.s32 %s26, %s33
      %s40 = sor.u32 %s38, %s39
      %p41 = scmp.eq.s32.totalorder %s40, 0
      %s43 = sadd.s32 %s42, 1
      %s44 = scalar_select %p41, %s42, %s43
      %p47 = pneg %p41
      %p48 = scmp.eq.s32.totalorder %s18, 3
      %p49 = por %p47, %p48
      %p50 = scmp.ne.s32.totalorder %s42, %s45
      %p51 = scmp.eq.s32.totalorder %s18, 0
      %p52 = por %p50, %p51
      %p53 = scmp.ne.s32.totalorder %s42, %s45
      %p54 = scmp.eq.s32.totalorder %s23, 3
      %p55 = por %p53, %p54
      %p56 = scmp.ne.s32.totalorder %s45, %s46
      %p57 = scmp.eq.s32.totalorder %s23, 0
      %p58 = por %p56, %p57
      %p59 = scmp.ne.s32.totalorder %s45, %s46
      %p60 = scmp.eq.s32.totalorder %s24, 3
      %p61 = por %p59, %p60
      %p63 = scmp.ne.s32.totalorder %s46, %s62
      %p64 = scmp.eq.s32.totalorder %s24, 0
      %p65 = por %p63, %p64
      %s67 = sadd.s32 %s66, 1
      %p70 = scmp.eq.s32.totalorder %s18, 3
      %p71 = scmp.ne.s32.totalorder %s66, %s68
      %p72 = scmp.eq.s32.totalorder %s18, 0
      %p73 = por %p71, %p72
      %p74 = scmp.ne.s32.totalorder %s66, %s68
      %p75 = scmp.eq.s32.totalorder %s23, 3
      %p76 = por %p74, %p75
      %p77 = scmp.ne.s32.totalorder %s68, %s69
      %p78 = scmp.eq.s32.totalorder %s23, 0
      %p79 = por %p77, %p78
      %p80 = scmp.ne.s32.totalorder %s68, %s69
      %p81 = scmp.eq.s32.totalorder %s24, 3
      %p82 = por %p80, %p81
      %p84 = scmp.ne.s32.totalorder %s69, %s83
      %p85 = scmp.eq.s32.totalorder %s24, 0
      %p86 = por %p84, %p85
      %s88 = sadd.s32 %s87, 1
      %p91 = scmp.eq.s32.totalorder %s18, 3
      %p92 = scmp.ne.s32.totalorder %s87, %s89
      %p93 = scmp.eq.s32.totalorder %s18, 0
      %p94 = por %p92, %p93
      %p95 = scmp.ne.s32.totalorder %s87, %s89
      %p96 = scmp.eq.s32.totalorder %s23, 3
      %p97 = por %p95, %p96
      %p98 = scmp.ne.s32.totalorder %s89, %s90
      %p99 = scmp.eq.s32.totalorder %s23, 0
      %p100 = por %p98, %p99
      %p101 = scmp.ne.s32.totalorder %s89, %s90
      %p102 = scmp.eq.s32.totalorder %s24, 3
      %p103 = por %p101, %p102
      %p105 = scmp.ne.s32.totalorder %s90, %s104
      %p106 = scmp.eq.s32.totalorder %s24, 0
      %p107 = por %p105, %p106
      %s109 = sadd.s32 %s108, 1
      %p112 = scmp.eq.s32.totalorder %s18, 3
      %p113 = scmp.ne.s32.totalorder %s108, %s110
      %p114 = scmp.eq.s32.totalorder %s18, 0
      %p115 = por %p113, %p114
      %p116 = scmp.ne.s32.totalorder %s108, %s110
      %p117 = scmp.eq.s32.totalorder %s23, 3
      %p118 = por %p116, %p117
      %p119 = scmp.ne.s32.totalorder %s110, %s111
      %p120 = scmp.eq.s32.totalorder %s23, 0
      %p121 = por %p119, %p120
      %p122 = scmp.ne.s32.totalorder %s110, %s111
      %p123 = scmp.eq.s32.totalorder %s24, 3
      %p124 = por %p122, %p123
      %p126 = scmp.ne.s32.totalorder %s111, %s125
      %p127 = scmp.eq.s32.totalorder %s24, 0
      %p128 = por %p126, %p127
      %s130 = sadd.s32 %s129, 1
      %p133 = scmp.eq.s32.totalorder %s18, 3
      %p134 = scmp.ne.s32.totalorder %s129, %s131
      %p135 = scmp.eq.s32.totalorder %s18, 0
      %p136 = por %p134, %p135
      %p137 = scmp.ne.s32.totalorder %s129, %s131
      %p138 = scmp.eq.s32.totalorder %s23, 3
      %p139 = por %p137, %p138
      %p140 = scmp.ne.s32.totalorder %s131, %s132
      %p141 = scmp.eq.s32.totalorder %s23, 0
      %p142 = por %p140, %p141
      %p143 = scmp.ne.s32.totalorder %s131, %s132
      %p144 = scmp.eq.s32.totalorder %s24, 3
      %p145 = por %p143, %p144
      %p147 = scmp.ne.s32.totalorder %s132, %s146
      %p148 = scmp.eq.s32.totalorder %s24, 0
      %p149 = por %p147, %p148
      %s151 = sadd.s32 %s150, 1
      %p154 = scmp.eq.s32.totalorder %s18, 3
      %p155 = scmp.ne.s32.totalorder %s150, %s152
      %p156 = scmp.eq.s32.totalorder %s18, 0
      %p157 = por %p155, %p156
      %p158 = scmp.ne.s32.totalorder %s150, %s152
      %p159 = scmp.eq.s32.totalorder %s23, 3
      %p160 = por %p158, %p159
      %p161 = scmp.ne.s32.totalorder %s152, %s153
      %p162 = scmp.eq.s32.totalorder %s23, 0
      %p163 = por %p161, %p162
      %p164 = scmp.ne.s32.totalorder %s152, %s153
      %p165 = scmp.eq.s32.totalorder %s24, 3
      %p166 = por %p164, %p165
      %p168 = scmp.ne.s32.totalorder %s153, %s167
      %p169 = scmp.eq.s32.totalorder %s24, 0
      %p170 = por %p168, %p169
      %s172 = sadd.s32 %s171, 1
      %p175 = scmp.eq.s32.totalorder %s18, 3
      %p176 = scmp.ne.s32.totalorder %s171, %s173
      %p177 = scmp.eq.s32.totalorder %s18, 0
      %p178 = por %p176, %p177
      %p179 = scmp.ne.s32.totalorder %s171, %s173
      %p180 = scmp.eq.s32.totalorder %s23, 3
      %p181 = por %p179, %p180
      %p182 = scmp.ne.s32.totalorder %s173, %s174
      %p183 = scmp.eq.s32.totalorder %s23, 0
      %p184 = por %p182, %p183
      %p185 = scmp.ne.s32.totalorder %s173, %s174
      %p186 = scmp.eq.s32.totalorder %s24, 3
      %p187 = por %p185, %p186
      %p189 = scmp.ne.s32.totalorder %s174, %s188
      %p190 = scmp.eq.s32.totalorder %s24, 0
      %p191 = por %p189, %p190
      %s193 = sadd.s32 %s192, 1
      %p196 = scmp.eq.s32.totalorder %s18, 3
      %p197 = scmp.ne.s32.totalorder %s192, %s194
      %p198 = scmp.eq.s32.totalorder %s18, 0
      %p199 = por %p197, %p198
      %p200 = scmp.ne.s32.totalorder %s192, %s194
      %p201 = scmp.eq.s32.totalorder %s23, 3
      %p202 = por %p200, %p201
      %p203 = scmp.ne.s32.totalorder %s194, %s195
      %p204 = scmp.eq.s32.totalorder %s23, 0
      %p205 = por %p203, %p204
      %p206 = scmp.ne.s32.totalorder %s194, %s195
      %p207 = scmp.eq.s32.totalorder %s24, 3
      %p208 = por %p206, %p207
      %p210 = scmp.ne.s32.totalorder %s195, %s209
      %p211 = scmp.eq.s32.totalorder %s24, 0
      %p212 = por %p210, %p211
      %s214 = sadd.s32 %s213, 1
      %p217 = scmp.eq.s32.totalorder %s18, 3
      %p218 = scmp.ne.s32.totalorder %s213, %s215
      %p219 = scmp.eq.s32.totalorder %s18, 0
      %p220 = por %p218, %p219
      %p221 = scmp.ne.s32.totalorder %s213, %s215
      %p222 = scmp.eq.s32.totalorder %s23, 3
      %p223 = por %p221, %p222
      %p224 = scmp.ne.s32.totalorder %s215, %s216
      %p225 = scmp.eq.s32.totalorder %s23, 0
      %p226 = por %p224, %p225
      %p227 = scmp.ne.s32.totalorder %s215, %s216
      %p228 = scmp.eq.s32.totalorder %s24, 3
      %p229 = por %p227, %p228
      %p231 = scmp.ne.s32.totalorder %s216, %s230
      %p232 = scmp.eq.s32.totalorder %s24, 0
      %p233 = por %p231, %p232
      %s234 = ssub.s32 %s25, %s37
      %s235 = ssub.s32 %s26, %s33
      %s236 = sor.u32 %s234, %s235
      %p237 = scmp.eq.s32.totalorder %s236, 0
      %s239 = sadd.s32 %s238, 1
      %s240 = scalar_select %p237, %s238, %s239
      %p243 = pneg %p237
      %p244 = scmp.eq.s32.totalorder %s18, 3
      %p245 = por %p243, %p244
      %p246 = scmp.ne.s32.totalorder %s238, %s241
      %p247 = scmp.eq.s32.totalorder %s18, 0
      %p248 = por %p246, %p247
      %p249 = scmp.ne.s32.totalorder %s238, %s241
      %p250 = scmp.eq.s32.totalorder %s23, 3
      %p251 = por %p249, %p250
      %p252 = scmp.ne.s32.totalorder %s241, %s242
      %p253 = scmp.eq.s32.totalorder %s23, 0
      %p254 = por %p252, %p253
      %p255 = scmp.ne.s32.totalorder %s241, %s242
      %p256 = scmp.eq.s32.totalorder %s24, 3
      %p257 = por %p255, %p256
      %p259 = scmp.ne.s32.totalorder %s242, %s258
      %p260 = scmp.eq.s32.totalorder %s24, 0
      %p261 = por %p259, %p260
      %p262 = scmp.le.s32.totalorder 1, %s18
      %p263 = scmp.lt.s32.totalorder %s18, 5
      %p264 = pnand %p262, %p263
      %p265 = pneg %p264
      // Predicated region
      $region9: #{block_forward_pallas.1} parent=5 // pred_check
        _
      $region10: #{block_forward_pallas.1} parent=5 // pred_check_branch
        %267 = sbr.rel (%p264) target = $region12
      $region11: #{block_forward_pallas.1} parent=5 // pred_region
        %s268 = ssub.s32 %s18, 1
        // Predicated region
        $region13: #{block_forward_pallas.1} parent=11 // pred_check
          %p269 = pneg %p79
        $region14: #{block_forward_pallas.1} parent=11 // pred_check_branch
          %271 = sbr.rel (%p269) target = $region16
        $region15: #{block_forward_pallas.1} parent=11 // pred_region
          _
        $region16: #{block_forward_pallas.1} parent=11 // pred_fallthru
          _
        // Predicated region
        $region17: #{block_forward_pallas.1} parent=11 // pred_check
          %p272 = pneg %p100
        $region18: #{block_forward_pallas.1} parent=11 // pred_check_branch
          %274 = sbr.rel (%p272) target = $region20
        $region19: #{block_forward_pallas.1} parent=11 // pred_region
          _
        $region20: #{block_forward_pallas.1} parent=11 // pred_fallthru
          _
        // Predicated region
        $region21: #{block_forward_pallas.1} parent=11 // pred_check
          %p275 = pneg %p121
        $region22: #{block_forward_pallas.1} parent=11 // pred_check_branch
          %277 = sbr.rel (%p275) target = $region24
        $region23: #{block_forward_pallas.1} parent=11 // pred_region
          _
        $region24: #{block_forward_pallas.1} parent=11 // pred_fallthru
          _
        // Predicated region
        $region25: #{block_forward_pallas.1} parent=11 // pred_check
          %p278 = pneg %p142
        $region26: #{block_forward_pallas.1} parent=11 // pred_check_branch
          %280 = sbr.rel (%p278) target = $region28
        $region27: #{block_forward_pallas.1} parent=11 // pred_region
          _
        $region28: #{block_forward_pallas.1} parent=11 // pred_fallthru
          _
        // Predicated region
        $region29: #{block_forward_pallas.1} parent=11 // pred_check
          %p281 = pneg %p163
        $region30: #{block_forward_pallas.1} parent=11 // pred_check_branch
          %283 = sbr.rel (%p281) target = $region32
        $region31: #{block_forward_pallas.1} parent=11 // pred_region
          _
        $region32: #{block_forward_pallas.1} parent=11 // pred_fallthru
          _
        // Predicated region
        $region33: #{block_forward_pallas.1} parent=11 // pred_check
          %p284 = pneg %p184
        $region34: #{block_forward_pallas.1} parent=11 // pred_check_branch
          %286 = sbr.rel (%p284) target = $region36
        $region35: #{block_forward_pallas.1} parent=11 // pred_region
          _
        $region36: #{block_forward_pallas.1} parent=11 // pred_fallthru
          _
        // Predicated region
        $region37: #{block_forward_pallas.1} parent=11 // pred_check
          %p287 = pneg %p205
        $region38: #{block_forward_pallas.1} parent=11 // pred_check_branch
          %289 = sbr.rel (%p287) target = $region40
        $region39: #{block_forward_pallas.1} parent=11 // pred_region
          _
        $region40: #{block_forward_pallas.1} parent=11 // pred_fallthru
          _
        // Predicated region
        $region41: #{block_forward_pallas.1} parent=11 // pred_check
          %p290 = pneg %p226
        $region42: #{block_forward_pallas.1} parent=11 // pred_check_branch
          %292 = sbr.rel (%p290) target = $region44
        $region43: #{block_forward_pallas.1} parent=11 // pred_region
          _
        $region44: #{block_forward_pallas.1} parent=11 // pred_fallthru
          _
      $region12: #{block_forward_pallas.1} parent=5 // pred_fallthru
        _
      %p293 = scmp.lt.s32.totalorder %s18, 4
      // Predicated region
      $region45: #{block_forward_pallas.1} parent=5 // pred_check
        %p294 = pneg %p293
      $region46: #{block_forward_pallas.1} parent=5 // pred_check_branch
        %296 = sbr.rel (%p294) target = $region48
      $region47: #{block_forward_pallas.1} parent=5 // pred_region
        // Predicated region
        $region49: #{block_forward_pallas.1} parent=47 // pred_check
          %p297 = pneg %p52
        $region50: #{block_forward_pallas.1} parent=47 // pred_check_branch
          %299 = sbr.rel (%p297) target = $region52
        $region51: #{block_forward_pallas.1} parent=47 // pred_region
          %p300 = scmp.lt.s32.totalorder %s25, 1
          %s301 = scalar_select %p300, %s25, 1
          %p302 = scmp.lt.s32.totalorder %s26, 1
          %s303 = scalar_select %p302, %s26, 1
          %s304 = smul.addr %s303, 20
          %s305 = smul.addr %s301, 40
          %s306 = sadd.s32 %s304, %s305
          %s307 = smul.addr %s306, 4
          %s308 = scalar_lea.vmem %s0, %s307
        $region52: #{block_forward_pallas.1} parent=47 // pred_fallthru
          _
      $region48: #{block_forward_pallas.1} parent=5 // pred_fallthru
        _
      %p309 = scmp.le.s32.totalorder 1, %s18
      %p310 = scmp.lt.s32.totalorder %s18, 5
      %p311 = pnand %p309, %p310
      %p312 = pneg %p311
      // Predicated region
      $region53: #{block_forward_pallas.1} parent=5 // pred_check
        _
      $region54: #{block_forward_pallas.1} parent=5 // pred_check_branch
        %314 = sbr.rel (%p311) target = $region56
      $region55: #{block_forward_pallas.1} parent=5 // pred_region
        %s315 = ssub.s32 %s18, 1
        %p316 = scmp.lt.s32.totalorder %s27, 1
        %s317 = scalar_select %p316, %s27, 1
        %p318 = scmp.lt.s32.totalorder %s28, 1
        %s319 = scalar_select %p318, %s28, 1
        %s320 = smul.addr %s319, 20
        %s321 = smul.addr %s317, 40
        %s322 = sadd.s32 %s320, %s321
        %s323 = smul.addr %s322, 4
        %s324 = scalar_lea.vmem %s0, %s323
        %p325 = pneg %p58
        %p326 = pneg %p55
        %p327 = pneg %p79
        %p328 = pneg %p76
        %p329 = pneg %p100
        %p330 = pneg %p97
        %p331 = pneg %p121
        %p332 = pneg %p118
        %p333 = pneg %p142
        %p334 = pneg %p139
        %p335 = pneg %p163
        %p336 = pneg %p160
        %p337 = pneg %p184
        %p338 = pneg %p181
        %p339 = pneg %p205
        %p340 = pneg %p202
        %p341 = pneg %p226
        %p342 = pneg %p223
        %p343 = pneg %p254
        %p344 = pneg %p251
        %s345 = sand.u32 %s241, 1
        %s346 = scalar_lea.sflag [#allocation4], %s345
        %s347 = sand.u32 %s241, 1
        %s348 = smul.addr %s347, 128
        %s349 = scalar_lea.vmem [#allocation3], %s348
        %p350 = scmp.lt.s32.totalorder %s27, 1
        %s351 = scalar_select %p350, %s27, 1
        %p352 = scmp.lt.s32.totalorder %s28, 1
        %s353 = scalar_select %p352, %s28, 1
        %s354 = smul.addr %s353, 20
        %s355 = smul.addr %s351, 40
        %s356 = sadd.s32 %s354, %s355
        %s357 = smul.addr %s356, 4
        %s358 = scalar_lea.vmem %s0, %s357
        %s359 = smul.u32 16, %s28
        %v363 = vld [vmem:[%s358] sm:$0xf]
        %v364 = vld [vmem:[%s358 + $0x4] sm:$0xf]
        %v365 = vld [vmem:[%s358 + $0x8] sm:$0xf]
        %v366 = vld [vmem:[%s358 + $0xc] sm:$0xf]
        %v367 = vld [vmem:[%s358 + $0x10] sm:$0xf]
        %v368 = vld [vmem:[%s358 + $0x14] sm:$0xf]
        %v369 = vld [vmem:[%s358 + $0x18] sm:$0xf]
        %v370 = vld [vmem:[%s358 + $0x1c] sm:$0xf]
        %v371 = vld [vmem:[%s358 + $0x20] sm:$0xf]
        %v372 = vld [vmem:[%s358 + $0x24] sm:$0xf]
        %v373 = vld [vmem:[%s358 + $0x28] sm:$0xf]
        %v374 = vld [vmem:[%s358 + $0x2c] sm:$0xf]
        %v375 = vld [vmem:[%s358 + $0x30] sm:$0xf]
        %v376 = vld [vmem:[%s358 + $0x34] sm:$0xf]
        %v377 = vld [vmem:[%s358 + $0x38] sm:$0xf]
        %v378 = vld [vmem:[%s358 + $0x3c] sm:$0xf]
        %v379 = vld [vmem:[%s358 + $0x40] sm:$0xf]
        %v380 = vld [vmem:[%s358 + $0x44] sm:$0xf]
        %v381 = vld [vmem:[%s358 + $0x48] sm:$0xf]
        %v382 = vld [vmem:[%s358 + $0x4c] sm:$0xf]
        %v383 = vld [vmem:[%s1] sm:$0xf]
        %v384 = vld [vmem:[%s1 + $0x4] sm:$0xf]
        %v385 = vld [vmem:[%s1 + $0x8] sm:$0xf]
        %v386 = vld [vmem:[%s1 + $0xc] sm:$0xf]
        %v387 = vld [vmem:[%s1 + $0x10] sm:$0xf]
        %v388 = vld [vmem:[%s1 + $0x14] sm:$0xf]
        %v389 = vld [vmem:[%s1 + $0x18] sm:$0xf]
        %v390 = vld [vmem:[%s1 + $0x1c] sm:$0xf]
        %v391 = vld [vmem:[%s1 + $0x20] sm:$0xf]
        %v392 = vld [vmem:[%s1 + $0x24] sm:$0xf]
        %v393 = vld [vmem:[%s1 + $0x28] sm:$0xf]
        %v394 = vld [vmem:[%s1 + $0x2c] sm:$0xf]
        %v395 = vld [vmem:[%s1 + $0x30] sm:$0xf]
        %v396 = vld [vmem:[%s1 + $0x34] sm:$0xf]
        %v397 = vld [vmem:[%s1 + $0x38] sm:$0xf]
        %v398 = vld [vmem:[%s1 + $0x3c] sm:$0xf]
        %v399 = vld [vmem:[%s2] sm:$0x1]
        %v401 = vlaneseq
        %v402 = vshrl.u32 %v401, 7
        %v403 = vsub.s32 0, %v402
        %v404 = vrot.slane %v399, %v403
        %v426 = vunpack.c.l.b16 %v363
        %v427 = vunpack.c.l.b16 %v364
        %v428 = vunpack.c.l.b16 %v365
        %v429 = vunpack.c.l.b16 %v366
        %v430 = vunpack.c.l.b16 %v367
        %v431 = vunpack.c.l.b16 %v368
        %v432 = vunpack.c.l.b16 %v369
        %v433 = vunpack.c.l.b16 %v370
        %v434 = vunpack.c.l.b16 %v371
        %v435 = vunpack.c.l.b16 %v372
        %v436 = vunpack.c.l.b16 %v373
        %v437 = vunpack.c.l.b16 %v374
        %v438 = vunpack.c.l.b16 %v375
        %v439 = vunpack.c.l.b16 %v376
        %v440 = vunpack.c.l.b16 %v377
        %v441 = vunpack.c.l.b16 %v378
        %v442 = vunpack.c.l.b16 %v379
        %v443 = vunpack.c.l.b16 %v380
        %v444 = vunpack.c.l.b16 %v381
        %v445 = vunpack.c.l.b16 %v382
        %v446 = vpack.c.b16 %v427, %v426
        %v447 = vpack.c.b16 %v429, %v428
        %v448 = vpack.c.b16 %v431, %v430
        %v449 = vpack.c.b16 %v433, %v432
        %v450 = vpack.c.b16 %v435, %v434
        %v451 = vpack.c.b16 %v437, %v436
        %v452 = vpack.c.b16 %v439, %v438
        %v453 = vpack.c.b16 %v441, %v440
        %v454 = vpack.c.b16 %v443, %v442
        %v455 = vpack.c.b16 %v445, %v444
        %v482 = vunpack.c.l.b16 %v383
        %v483 = vunpack.c.l.b16 %v384
        %v484 = vunpack.c.l.b16 %v385
        %v485 = vunpack.c.l.b16 %v386
        %v486 = vunpack.c.l.b16 %v387
        %v487 = vunpack.c.l.b16 %v388
        %v488 = vunpack.c.l.b16 %v389
        %v489 = vunpack.c.l.b16 %v390
        %v490 = vunpack.c.l.b16 %v391
        %v491 = vunpack.c.l.b16 %v392
        %v492 = vunpack.c.l.b16 %v393
        %v493 = vunpack.c.l.b16 %v394
        %v494 = vunpack.c.l.b16 %v395
        %v495 = vunpack.c.l.b16 %v396
        %v496 = vunpack.c.l.b16 %v397
        %v497 = vunpack.c.l.b16 %v398
        %v498 = vpack.c.b16 %v483, %v482
        %v499 = vpack.c.b16 %v485, %v484
        %v500 = vpack.c.b16 %v487, %v486
        %v501 = vpack.c.b16 %v489, %v488
        %v502 = vpack.c.b16 %v491, %v490
        %v503 = vpack.c.b16 %v493, %v492
        %v504 = vpack.c.b16 %v495, %v494
        %v505 = vpack.c.b16 %v497, %v496
        %514 = vmatprep.subr.bf16.mxu0 0
        %515 = vmatpush1.bf16.msra.mxu0 %v505
        %516 = vmatprep.subr.bf16.mxu0 0
        %517 = vmatpush1.bf16.msra.mxu0 %v504
        %518 = vmatprep.subr.bf16.mxu0 0
        %519 = vmatpush1.bf16.msra.mxu0 %v503
        %520 = vmatprep.subr.bf16.mxu0 0
        %521 = vmatpush1.bf16.msra.mxu0 %v502
        %522 = vmatprep.subr.bf16.mxu0 0
        %523 = vmatpush1.bf16.msra.mxu0 %v501
        %524 = vmatprep.subr.bf16.mxu0 0
        %525 = vmatpush1.bf16.msra.mxu0 %v500
        %526 = vmatprep.subr.bf16.mxu0 0
        %527 = vmatpush1.bf16.msra.mxu0 %v499
        %528 = vmatprep.subr.bf16.mxu0 0
        %529 = vmatpush1.bf16.msra.mxu0 %v498
        %530 = vmatprep.subr.bf16.mxu0 0
        %531 = vmatpush2.bf16.msra.mxu0 0
        %532 = vmatprep.subr.bf16.mxu0 0
        %533 = vmatpush2.bf16.msra.mxu0 0
        %534 = vmatprep.subr.bf16.mxu0 0
        %535 = vmatpush2.bf16.msra.mxu0 0
        %536 = vmatprep.subr.bf16.mxu0 0
        %537 = vmatpush2.bf16.msra.mxu0 0
        %538 = vmatprep.subr.bf16.mxu0 0
        %539 = vmatpush2.bf16.msra.mxu0 0
        %540 = vmatprep.subr.bf16.mxu0 0
        %541 = vmatpush2.bf16.msra.mxu0 0
        %542 = vmatprep.subr.bf16.mxu0 0
        %543 = vmatpush2.bf16.msra.mxu0 0
        %544 = vmatprep.subr.bf16.mxu0 0
        %545 = vmatpush2.bf16.msra.mxu0 0
        %546 = vmatprep.mubr.bf16.mxu0 0
        %547 = vmatmul.mubr.bf16.gmra.mxu0 %v446
        %v548 = vpop.f32.mrf.mxu0
        %v549 = vadd.f32 %v404, %v548
        %v550 = vpop.f32.mrf.mxu0
        %v551 = vpop.f32.mrf.mxu0
        %v552 = vadd.f32 %v404, %v551
        %v553 = vpop.f32.mrf.mxu0
        %554 = vmatprep.mubr.bf16.mxu0 0
        %555 = vmatmul.mubr.bf16.gmra.mxu0 %v447
        %v556 = vpop.f32.mrf.mxu0
        %v557 = vadd.f32 %v404, %v556
        %v558 = vpop.f32.mrf.mxu0
        %v559 = vpop.f32.mrf.mxu0
        %v560 = vadd.f32 %v404, %v559
        %v561 = vpop.f32.mrf.mxu0
        %562 = vmatprep.mubr.bf16.mxu0 0
        %563 = vmatmul.mubr.bf16.gmra.mxu0 %v448
        %v564 = vpop.f32.mrf.mxu0
        %v565 = vadd.f32 %v404, %v564
        %v566 = vpop.f32.mrf.mxu0
        %v567 = vpop.f32.mrf.mxu0
        %v568 = vadd.f32 %v404, %v567
        %v569 = vpop.f32.mrf.mxu0
        %570 = vmatprep.mubr.bf16.mxu0 0
        %571 = vmatmul.mubr.bf16.gmra.mxu0 %v449
        %v572 = vpop.f32.mrf.mxu0
        %v573 = vadd.f32 %v404, %v572
        %v574 = vpop.f32.mrf.mxu0
        %v575 = vpop.f32.mrf.mxu0
        %v576 = vadd.f32 %v404, %v575
        %v577 = vpop.f32.mrf.mxu0
        %578 = vmatprep.mubr.bf16.mxu0 0
        %579 = vmatmul.mubr.bf16.gmra.mxu0 %v450
        %v580 = vpop.f32.mrf.mxu0
        %v581 = vadd.f32 %v404, %v580
        %v582 = vpop.f32.mrf.mxu0
        %v583 = vpop.f32.mrf.mxu0
        %v584 = vadd.f32 %v404, %v583
        %v585 = vpop.f32.mrf.mxu0
        %586 = vmatprep.mubr.bf16.mxu0 0
        %587 = vmatmul.mubr.bf16.gmra.mxu0 %v451
        %v588 = vpop.f32.mrf.mxu0
        %v589 = vadd.f32 %v404, %v588
        %v590 = vpop.f32.mrf.mxu0
        %v591 = vpop.f32.mrf.mxu0
        %v592 = vadd.f32 %v404, %v591
        %v593 = vpop.f32.mrf.mxu0
        %594 = vmatprep.mubr.bf16.mxu0 0
        %595 = vmatmul.mubr.bf16.gmra.mxu0 %v452
        %v596 = vpop.f32.mrf.mxu0
        %v597 = vadd.f32 %v404, %v596
        %v598 = vpop.f32.mrf.mxu0
        %v599 = vpop.f32.mrf.mxu0
        %v600 = vadd.f32 %v404, %v599
        %v601 = vpop.f32.mrf.mxu0
        %602 = vmatprep.mubr.bf16.mxu0 0
        %603 = vmatmul.mubr.bf16.gmra.mxu0 %v453
        %v604 = vpop.f32.mrf.mxu0
        %v605 = vadd.f32 %v404, %v604
        %v606 = vpop.f32.mrf.mxu0
        %v607 = vpop.f32.mrf.mxu0
        %v608 = vadd.f32 %v404, %v607
        %v609 = vpop.f32.mrf.mxu0
        %610 = vmatprep.mubr.bf16.mxu0 0
        %611 = vmatmul.mubr.bf16.gmra.mxu0 %v454
        %v612 = vpop.f32.mrf.mxu0
        %v613 = vadd.f32 %v404, %v612
        %v614 = vpop.f32.mrf.mxu0
        %v615 = vpop.f32.mrf.mxu0
        %v616 = vadd.f32 %v404, %v615
        %v617 = vpop.f32.mrf.mxu0
        %618 = vmatprep.mubr.bf16.mxu0 0
        %619 = vmatmul.mubr.bf16.gmra.mxu0 %v455
        %v620 = vpop.f32.mrf.mxu0
        %v621 = vadd.f32 %v404, %v620
        %v622 = vpop.f32.mrf.mxu0
        %v623 = vpop.f32.mrf.mxu0
        %v624 = vadd.f32 %v404, %v623
        %v625 = vpop.f32.mrf.mxu0
        %626 = vdwg.mxu0
        %v627 = vmax.f32 %v549, 0.0
        %v628 = vmax.f32 %v552, 0.0
        %v629 = vmax.f32 %v557, 0.0
        %v630 = vmax.f32 %v560, 0.0
        %v631 = vmax.f32 %v565, 0.0
        %v632 = vmax.f32 %v568, 0.0
        %v633 = vmax.f32 %v573, 0.0
        %v634 = vmax.f32 %v576, 0.0
        %v635 = vmax.f32 %v581, 0.0
        %v636 = vmax.f32 %v584, 0.0
        %v637 = vmax.f32 %v589, 0.0
        %v638 = vmax.f32 %v592, 0.0
        %v639 = vmax.f32 %v597, 0.0
        %v640 = vmax.f32 %v600, 0.0
        %v641 = vmax.f32 %v605, 0.0
        %v642 = vmax.f32 %v608, 0.0
        %v643 = vmax.f32 %v613, 0.0
        %v644 = vmax.f32 %v616, 0.0
        %v645 = vmax.f32 %v621, 0.0
        %v646 = vmax.f32 %v624, 0.0
        %s647 = smul.u32 %s28, 128
        %s648 = ssub.s32 %s647, 16
        %v649 = vlaneseq
        %v650 = vshrl.u32 %v649, 7
        %v651 = vadd.s32 %v650, 8
        %v652 = vadd.s32 %v650, 16
        %v653 = vadd.s32 %v650, 24
        %v654 = vadd.s32 %v650, 32
        %v655 = vadd.s32 %v650, 40
        %v656 = vadd.s32 %v650, 48
        %v657 = vadd.s32 %v650, 56
        %v658 = vadd.s32 %v650, 64
        %v659 = vadd.s32 %v650, 72
        %v660 = vadd.s32 %v650, 80
        %v661 = vadd.s32 %v650, 88
        %v662 = vadd.s32 %v650, 96
        %v663 = vadd.s32 %v650, 104
        %v664 = vadd.s32 %v650, 112
        %v665 = vadd.s32 %v650, 120
        %v666 = vadd.s32 %v650, 128
        %v667 = vadd.s32 %v650, 136
        %v668 = vadd.s32 %v650, 144
        %v669 = vadd.s32 %v650, 152
        %v670 = vstv %s648
        %v671 = vadd.s32 %v670, %v650
        %v672 = vadd.s32 %v670, %v651
        %v673 = vadd.s32 %v670, %v652
        %v674 = vadd.s32 %v670, %v653
        %v675 = vadd.s32 %v670, %v654
        %v676 = vadd.s32 %v670, %v655
        %v677 = vadd.s32 %v670, %v656
        %v678 = vadd.s32 %v670, %v657
        %v679 = vadd.s32 %v670, %v658
        %v680 = vadd.s32 %v670, %v659
        %v681 = vadd.s32 %v670, %v660
        %v682 = vadd.s32 %v670, %v661
        %v683 = vadd.s32 %v670, %v662
        %v684 = vadd.s32 %v670, %v663
        %v685 = vadd.s32 %v670, %v664
        %v686 = vadd.s32 %v670, %v665
        %v687 = vadd.s32 %v670, %v666
        %v688 = vadd.s32 %v670, %v667
        %v689 = vadd.s32 %v670, %v668
        %v690 = vadd.s32 %v670, %v669
        %vm691 = vcmp.ge.s32.totalorder %v671, 0
        %vm692 = vcmp.ge.s32.totalorder %v672, 0
        %vm693 = vcmp.ge.s32.totalorder %v673, 0
        %vm694 = vcmp.ge.s32.totalorder %v674, 0
        %vm695 = vcmp.ge.s32.totalorder %v675, 0
        %vm696 = vcmp.ge.s32.totalorder %v676, 0
        %vm697 = vcmp.ge.s32.totalorder %v677, 0
        %vm698 = vcmp.ge.s32.totalorder %v678, 0
        %vm699 = vcmp.ge.s32.totalorder %v679, 0
        %vm700 = vcmp.ge.s32.totalorder %v680, 0
        %vm701 = vcmp.ge.s32.totalorder %v681, 0
        %vm702 = vcmp.ge.s32.totalorder %v682, 0
        %vm703 = vcmp.ge.s32.totalorder %v683, 0
        %vm704 = vcmp.ge.s32.totalorder %v684, 0
        %vm705 = vcmp.ge.s32.totalorder %v685, 0
        %vm706 = vcmp.ge.s32.totalorder %v686, 0
        %vm707 = vcmp.ge.s32.totalorder %v687, 0
        %vm708 = vcmp.ge.s32.totalorder %v688, 0
        %vm709 = vcmp.ge.s32.totalorder %v689, 0
        %vm710 = vcmp.ge.s32.totalorder %v690, 0
        %vm711 = vcmp.lt.s32.totalorder %v671, 256
        %vm712 = vcmp.lt.s32.totalorder %v672, 256
        %vm713 = vcmp.lt.s32.totalorder %v673, 256
        %vm714 = vcmp.lt.s32.totalorder %v674, 256
        %vm715 = vcmp.lt.s32.totalorder %v675, 256
        %vm716 = vcmp.lt.s32.totalorder %v676, 256
        %vm717 = vcmp.lt.s32.totalorder %v677, 256
        %vm718 = vcmp.lt.s32.totalorder %v678, 256
        %vm719 = vcmp.lt.s32.totalorder %v679, 256
        %vm720 = vcmp.lt.s32.totalorder %v680, 256
        %vm721 = vcmp.lt.s32.totalorder %v681, 256
        %vm722 = vcmp.lt.s32.totalorder %v682, 256
        %vm723 = vcmp.lt.s32.totalorder %v683, 256
        %vm724 = vcmp.lt.s32.totalorder %v684, 256
        %vm725 = vcmp.lt.s32.totalorder %v685, 256
        %vm726 = vcmp.lt.s32.totalorder %v686, 256
        %vm727 = vcmp.lt.s32.totalorder %v687, 256
        %vm728 = vcmp.lt.s32.totalorder %v688, 256
        %vm729 = vcmp.lt.s32.totalorder %v689, 256
        %vm730 = vcmp.lt.s32.totalorder %v690, 256
        %vm731 = vmand %vm691, %vm711
        %vm732 = vmand %vm692, %vm712
        %vm733 = vmand %vm693, %vm713
        %vm734 = vmand %vm694, %vm714
        %vm735 = vmand %vm695, %vm715
        %vm736 = vmand %vm696, %vm716
        %vm737 = vmand %vm697, %vm717
        %vm738 = vmand %vm698, %vm718
        %vm739 = vmand %vm699, %vm719
        %vm740 = vmand %vm700, %vm720
        %vm741 = vmand %vm701, %vm721
        %vm742 = vmand %vm702, %vm722
        %vm743 = vmand %vm703, %vm723
        %vm744 = vmand %vm704, %vm724
        %vm745 = vmand %vm705, %vm725
        %vm746 = vmand %vm706, %vm726
        %vm747 = vmand %vm707, %vm727
        %vm748 = vmand %vm708, %vm728
        %vm749 = vmand %vm709, %vm729
        %vm750 = vmand %vm710, %vm730
        %v751 = vsel %vm731, 1, 0
        %v752 = vsel %vm732, 1, 0
        %v753 = vsel %vm733, 1, 0
        %v754 = vsel %vm734, 1, 0
        %v755 = vsel %vm735, 1, 0
        %v756 = vsel %vm736, 1, 0
        %v757 = vsel %vm737, 1, 0
        %v758 = vsel %vm738, 1, 0
        %v759 = vsel %vm739, 1, 0
        %v760 = vsel %vm740, 1, 0
        %v761 = vsel %vm741, 1, 0
        %v762 = vsel %vm742, 1, 0
        %v763 = vsel %vm743, 1, 0
        %v764 = vsel %vm744, 1, 0
        %v765 = vsel %vm745, 1, 0
        %v766 = vsel %vm746, 1, 0
        %v767 = vsel %vm747, 1, 0
        %v768 = vsel %vm748, 1, 0
        %v769 = vsel %vm749, 1, 0
        %v770 = vsel %vm750, 1, 0
        %vm771 = vcmp.eq.s32.totalorder %v751, 1
        %vm772 = vcmp.eq.s32.totalorder %v752, 1
        %vm773 = vcmp.eq.s32.totalorder %v753, 1
        %vm774 = vcmp.eq.s32.totalorder %v754, 1
        %vm775 = vcmp.eq.s32.totalorder %v755, 1
        %vm776 = vcmp.eq.s32.totalorder %v756, 1
        %vm777 = vcmp.eq.s32.totalorder %v757, 1
        %vm778 = vcmp.eq.s32.totalorder %v758, 1
        %vm779 = vcmp.eq.s32.totalorder %v759, 1
        %vm780 = vcmp.eq.s32.totalorder %v760, 1
        %vm781 = vcmp.eq.s32.totalorder %v761, 1
        %vm782 = vcmp.eq.s32.totalorder %v762, 1
        %vm783 = vcmp.eq.s32.totalorder %v763, 1
        %vm784 = vcmp.eq.s32.totalorder %v764, 1
        %vm785 = vcmp.eq.s32.totalorder %v765, 1
        %vm786 = vcmp.eq.s32.totalorder %v766, 1
        %vm787 = vcmp.eq.s32.totalorder %v767, 1
        %vm788 = vcmp.eq.s32.totalorder %v768, 1
        %vm789 = vcmp.eq.s32.totalorder %v769, 1
        %vm790 = vcmp.eq.s32.totalorder %v770, 1
        %v791 = vsel %vm771, %v627, 0.0
        %v792 = vsel %vm772, %v628, 0.0
        %v793 = vsel %vm773, %v629, 0.0
        %v794 = vsel %vm774, %v630, 0.0
        %v795 = vsel %vm775, %v631, 0.0
        %v796 = vsel %vm776, %v632, 0.0
        %v797 = vsel %vm777, %v633, 0.0
        %v798 = vsel %vm778, %v634, 0.0
        %v799 = vsel %vm779, %v635, 0.0
        %v800 = vsel %vm780, %v636, 0.0
        %v801 = vsel %vm781, %v637, 0.0
        %v802 = vsel %vm782, %v638, 0.0
        %v803 = vsel %vm783, %v639, 0.0
        %v804 = vsel %vm784, %v640, 0.0
        %v805 = vsel %vm785, %v641, 0.0
        %v806 = vsel %vm786, %v642, 0.0
        %v807 = vsel %vm787, %v643, 0.0
        %v808 = vsel %vm788, %v644, 0.0
        %v809 = vsel %vm789, %v645, 0.0
        %v810 = vsel %vm790, %v646, 0.0
        %811 = vst [vmem:[#allocation2] sm:$0xf] 0
        %812 = vst [vmem:[#allocation2 + $0x54] sm:$0xf] 0
        %v813 = vpack.c.bf16 %v792, %v791
        %v814 = vpack.c.bf16 %v794, %v793
        %v815 = vpack.c.bf16 %v796, %v795
        %v816 = vpack.c.bf16 %v798, %v797
        %v817 = vpack.c.bf16 %v800, %v799
        %v818 = vpack.c.bf16 %v802, %v801
        %v819 = vpack.c.bf16 %v804, %v803
        %v820 = vpack.c.bf16 %v806, %v805
        %v821 = vpack.c.bf16 %v808, %v807
        %v822 = vpack.c.bf16 %v810, %v809
        %v833 = vunpack.c.l.b16 %v813
        %v834 = vunpack.c.h.b16 %v813
        %v835 = vunpack.c.l.b16 %v814
        %v836 = vunpack.c.h.b16 %v814
        %v837 = vunpack.c.l.b16 %v815
        %v838 = vunpack.c.h.b16 %v815
        %v839 = vunpack.c.l.b16 %v816
        %v840 = vunpack.c.h.b16 %v816
        %v841 = vunpack.c.l.b16 %v817
        %v842 = vunpack.c.h.b16 %v817
        %v843 = vunpack.c.l.b16 %v818
        %v844 = vunpack.c.h.b16 %v818
        %v845 = vunpack.c.l.b16 %v819
        %v846 = vunpack.c.h.b16 %v819
        %v847 = vunpack.c.l.b16 %v820
        %v848 = vunpack.c.h.b16 %v820
        %v849 = vunpack.c.l.b16 %v821
        %v850 = vunpack.c.h.b16 %v821
        %v851 = vunpack.c.l.b16 %v822
        %v852 = vunpack.c.h.b16 %v822
        %v853 = vpack.c.b16 %v833, %v833
        %v854 = vpack.c.b16 %v834, %v834
        %v855 = vpack.c.b16 %v835, %v835
        %v856 = vpack.c.b16 %v836, %v836
        %v857 = vpack.c.b16 %v837, %v837
        %v858 = vpack.c.b16 %v838, %v838
        %v859 = vpack.c.b16 %v839, %v839
        %v860 = vpack.c.b16 %v840, %v840
        %v861 = vpack.c.b16 %v841, %v841
        %v862 = vpack.c.b16 %v842, %v842
        %v863 = vpack.c.b16 %v843, %v843
        %v864 = vpack.c.b16 %v844, %v844
        %v865 = vpack.c.b16 %v845, %v845
        %v866 = vpack.c.b16 %v846, %v846
        %v867 = vpack.c.b16 %v847, %v847
        %v868 = vpack.c.b16 %v848, %v848
        %v869 = vpack.c.b16 %v849, %v849
        %v870 = vpack.c.b16 %v850, %v850
        %v871 = vpack.c.b16 %v851, %v851
        %v872 = vpack.c.b16 %v852, %v852
        %893 = vst [vmem:[#allocation2 + $0x4] sm:$0xf] %v853
        %894 = vst [vmem:[#allocation2 + $0x8] sm:$0xf] %v854
        %895 = vst [vmem:[#allocation2 + $0xc] sm:$0xf] %v855
        %896 = vst [vmem:[#allocation2 + $0x10] sm:$0xf] %v856
        %897 = vst [vmem:[#allocation2 + $0x14] sm:$0xf] %v857
        %898 = vst [vmem:[#allocation2 + $0x18] sm:$0xf] %v858
        %899 = vst [vmem:[#allocation2 + $0x1c] sm:$0xf] %v859
        %900 = vst [vmem:[#allocation2 + $0x20] sm:$0xf] %v860
        %901 = vst [vmem:[#allocation2 + $0x24] sm:$0xf] %v861
        %902 = vst [vmem:[#allocation2 + $0x28] sm:$0xf] %v862
        %903 = vst [vmem:[#allocation2 + $0x2c] sm:$0xf] %v863
        %904 = vst [vmem:[#allocation2 + $0x30] sm:$0xf] %v864
        %905 = vst [vmem:[#allocation2 + $0x34] sm:$0xf] %v865
        %906 = vst [vmem:[#allocation2 + $0x38] sm:$0xf] %v866
        %907 = vst [vmem:[#allocation2 + $0x3c] sm:$0xf] %v867
        %908 = vst [vmem:[#allocation2 + $0x40] sm:$0xf] %v868
        %909 = vst [vmem:[#allocation2 + $0x44] sm:$0xf] %v869
        %910 = vst [vmem:[#allocation2 + $0x48] sm:$0xf] %v870
        %911 = vst [vmem:[#allocation2 + $0x4c] sm:$0xf] %v871
        %912 = vst [vmem:[#allocation2 + $0x50] sm:$0xf] %v872
        %vm913 = vcmp.lt.s32.totalorder %v650, 0
        %v914 = vsub.s32 0, %v650
        %v915 = vsel %vm913, %v914, %v650
        %v916 = vshrl.u32 %v915, 4
        %v917 = vand.u32 %v915, 15
        %v918 = vsub.s32 0, %v917
        %v919 = vsel %vm913, %v918, %v917
        %vm920 = vcmp.lt.s32.totalorder %v651, 0
        %v921 = vsub.s32 0, %v651
        %v922 = vsel %vm920, %v921, %v651
        %v923 = vshrl.u32 %v922, 4
        %v924 = vand.u32 %v922, 15
        %v925 = vsub.s32 0, %v924
        %v926 = vsel %vm920, %v925, %v924
        %vm927 = vcmp.lt.s32.totalorder %v652, 0
        %v928 = vsub.s32 0, %v652
        %v929 = vsel %vm927, %v928, %v652
        %v930 = vshrl.u32 %v929, 4
        %v931 = vand.u32 %v929, 15
        %v932 = vsub.s32 0, %v931
        %v933 = vsel %vm927, %v932, %v931
        %vm934 = vcmp.lt.s32.totalorder %v653, 0
        %v935 = vsub.s32 0, %v653
        %v936 = vsel %vm934, %v935, %v653
        %v937 = vshrl.u32 %v936, 4
        %v938 = vand.u32 %v936, 15
        %v939 = vsub.s32 0, %v938
        %v940 = vsel %vm934, %v939, %v938
        %vm941 = vcmp.lt.s32.totalorder %v654, 0
        %v942 = vsub.s32 0, %v654
        %v943 = vsel %vm941, %v942, %v654
        %v944 = vshrl.u32 %v943, 4
        %v945 = vand.u32 %v943, 15
        %v946 = vsub.s32 0, %v945
        %v947 = vsel %vm941, %v946, %v945
        %vm948 = vcmp.lt.s32.totalorder %v655, 0
        %v949 = vsub.s32 0, %v655
        %v950 = vsel %vm948, %v949, %v655
        %v951 = vshrl.u32 %v950, 4
        %v952 = vand.u32 %v950, 15
        %v953 = vsub.s32 0, %v952
        %v954 = vsel %vm948, %v953, %v952
        %vm955 = vcmp.lt.s32.totalorder %v656, 0
        %v956 = vsub.s32 0, %v656
        %v957 = vsel %vm955, %v956, %v656
        %v958 = vshrl.u32 %v957, 4
        %v959 = vand.u32 %v957, 15
        %v960 = vsub.s32 0, %v959
        %v961 = vsel %vm955, %v960, %v959
        %vm962 = vcmp.lt.s32.totalorder %v657, 0
        %v963 = vsub.s32 0, %v657
        %v964 = vsel %vm962, %v963, %v657
        %v965 = vshrl.u32 %v964, 4
        %v966 = vand.u32 %v964, 15
        %v967 = vsub.s32 0, %v966
        %v968 = vsel %vm962, %v967, %v966
        %vm969 = vcmp.lt.s32.totalorder %v658, 0
        %v970 = vsub.s32 0, %v658
        %v971 = vsel %vm969, %v970, %v658
        %v972 = vshrl.u32 %v971, 4
        %v973 = vand.u32 %v971, 15
        %v974 = vsub.s32 0, %v973
        %v975 = vsel %vm969, %v974, %v973
        %vm976 = vcmp.lt.s32.totalorder %v659, 0
        %v977 = vsub.s32 0, %v659
        %v978 = vsel %vm976, %v977, %v659
        %v979 = vshrl.u32 %v978, 4
        %v980 = vand.u32 %v978, 15
        %v981 = vsub.s32 0, %v980
        %v982 = vsel %vm976, %v981, %v980
        %vm983 = vcmp.lt.s32.totalorder %v660, 0
        %v984 = vsub.s32 0, %v660
        %v985 = vsel %vm983, %v984, %v660
        %v986 = vshrl.u32 %v985, 4
        %v987 = vand.u32 %v985, 15
        %v988 = vsub.s32 0, %v987
        %v989 = vsel %vm983, %v988, %v987
        %vm990 = vcmp.lt.s32.totalorder %v661, 0
        %v991 = vsub.s32 0, %v661
        %v992 = vsel %vm990, %v991, %v661
        %v993 = vshrl.u32 %v992, 4
        %v994 = vand.u32 %v992, 15
        %v995 = vsub.s32 0, %v994
        %v996 = vsel %vm990, %v995, %v994
        %vm997 = vcmp.lt.s32.totalorder %v662, 0
        %v998 = vsub.s32 0, %v662
        %v999 = vsel %vm997, %v998, %v662
        %v1000 = vshrl.u32 %v999, 4
        %v1001 = vand.u32 %v999, 15
        %v1002 = vsub.s32 0, %v1001
        %v1003 = vsel %vm997, %v1002, %v1001
        %vm1004 = vcmp.lt.s32.totalorder %v663, 0
        %v1005 = vsub.s32 0, %v663
        %v1006 = vsel %vm1004, %v1005, %v663
        %v1007 = vshrl.u32 %v1006, 4
        %v1008 = vand.u32 %v1006, 15
        %v1009 = vsub.s32 0, %v1008
        %v1010 = vsel %vm1004, %v1009, %v1008
        %vm1011 = vcmp.lt.s32.totalorder %v664, 0
        %v1012 = vsub.s32 0, %v664
        %v1013 = vsel %vm1011, %v1012, %v664
        %v1014 = vshrl.u32 %v1013, 4
        %v1015 = vand.u32 %v1013, 15
        %v1016 = vsub.s32 0, %v1015
        %v1017 = vsel %vm1011, %v1016, %v1015
        %vm1018 = vcmp.lt.s32.totalorder %v665, 0
        %v1019 = vsub.s32 0, %v665
        %v1020 = vsel %vm1018, %v1019, %v665
        %v1021 = vshrl.u32 %v1020, 4
        %v1022 = vand.u32 %v1020, 15
        %v1023 = vsub.s32 0, %v1022
        %v1024 = vsel %vm1018, %v1023, %v1022
        %vm1025 = vcmp.ne.s32.totalorder %v919, 0
        %vm1026 = vcmp.ne.s32.totalorder %v926, 0
        %vm1027 = vcmp.ne.s32.totalorder %v933, 0
        %vm1028 = vcmp.ne.s32.totalorder %v940, 0
        %vm1029 = vcmp.ne.s32.totalorder %v947, 0
        %vm1030 = vcmp.ne.s32.totalorder %v954, 0
        %vm1031 = vcmp.ne.s32.totalorder %v961, 0
        %vm1032 = vcmp.ne.s32.totalorder %v968, 0
        %vm1033 = vcmp.ne.s32.totalorder %v975, 0
        %vm1034 = vcmp.ne.s32.totalorder %v982, 0
        %vm1035 = vcmp.ne.s32.totalorder %v989, 0
        %vm1036 = vcmp.ne.s32.totalorder %v996, 0
        %vm1037 = vcmp.ne.s32.totalorder %v1003, 0
        %vm1038 = vcmp.ne.s32.totalorder %v1010, 0
        %vm1039 = vcmp.ne.s32.totalorder %v1017, 0
        %vm1040 = vcmp.ne.s32.totalorder %v1024, 0
        %vm1041 = vcmp.lt.s32.totalorder %v919, 0
        %vm1042 = vcmp.lt.s32.totalorder %v926, 0
        %vm1043 = vcmp.lt.s32.totalorder %v933, 0
        %vm1044 = vcmp.lt.s32.totalorder %v940, 0
        %vm1045 = vcmp.lt.s32.totalorder %v947, 0
        %vm1046 = vcmp.lt.s32.totalorder %v954, 0
        %vm1047 = vcmp.lt.s32.totalorder %v961, 0
        %vm1048 = vcmp.lt.s32.totalorder %v968, 0
        %vm1049 = vcmp.lt.s32.totalorder %v975, 0
        %vm1050 = vcmp.lt.s32.totalorder %v982, 0
        %vm1051 = vcmp.lt.s32.totalorder %v989, 0
        %vm1052 = vcmp.lt.s32.totalorder %v996, 0
        %vm1053 = vcmp.lt.s32.totalorder %v1003, 0
        %vm1054 = vcmp.lt.s32.totalorder %v1010, 0
        %vm1055 = vcmp.lt.s32.totalorder %v1017, 0
        %vm1056 = vcmp.lt.s32.totalorder %v1024, 0
        %vm1057 = vmand %vm1041, %vm1025
        %vm1058 = vmand %vm1042, %vm1026
        %vm1059 = vmand %vm1043, %vm1027
        %vm1060 = vmand %vm1044, %vm1028
        %vm1061 = vmand %vm1045, %vm1029
        %vm1062 = vmand %vm1046, %vm1030
        %vm1063 = vmand %vm1047, %vm1031
        %vm1064 = vmand %vm1048, %vm1032
        %vm1065 = vmand %vm1049, %vm1033
        %vm1066 = vmand %vm1050, %vm1034
        %vm1067 = vmand %vm1051, %vm1035
        %vm1068 = vmand %vm1052, %vm1036
        %vm1069 = vmand %vm1053, %vm1037
        %vm1070 = vmand %vm1054, %vm1038
        %vm1071 = vmand %vm1055, %vm1039
        %vm1072 = vmand %vm1056, %vm1040
        %v1073 = vadd.s32 %v919, 16
        %v1074 = vadd.s32 %v926, 16
        %v1075 = vadd.s32 %v933, 16
        %v1076 = vadd.s32 %v940, 16
        %v1077 = vadd.s32 %v947, 16
        %v1078 = vadd.s32 %v954, 16
        %v1079 = vadd.s32 %v961, 16
        %v1080 = vadd.s32 %v968, 16
        %v1081 = vadd.s32 %v975, 16
        %v1082 = vadd.s32 %v982, 16
        %v1083 = vadd.s32 %v989, 16
        %v1084 = vadd.s32 %v996, 16
        %v1085 = vadd.s32 %v1003, 16
        %v1086 = vadd.s32 %v1010, 16
        %v1087 = vadd.s32 %v1017, 16
        %v1088 = vadd.s32 %v1024, 16
        %v1089 = vsel %vm1057, %v1073, %v919
        %v1090 = vsel %vm1058, %v1074, %v926
        %v1091 = vsel %vm1059, %v1075, %v933
        %v1092 = vsel %vm1060, %v1076, %v940
        %v1093 = vsel %vm1061, %v1077, %v947
        %v1094 = vsel %vm1062, %v1078, %v954
        %v1095 = vsel %vm1063, %v1079, %v961
        %v1096 = vsel %vm1064, %v1080, %v968
        %v1097 = vsel %vm1065, %v1081, %v975
        %v1098 = vsel %vm1066, %v1082, %v982
        %v1099 = vsel %vm1067, %v1083, %v989
        %v1100 = vsel %vm1068, %v1084, %v996
        %v1101 = vsel %vm1069, %v1085, %v1003
        %v1102 = vsel %vm1070, %v1086, %v1010
        %v1103 = vsel %vm1071, %v1087, %v1017
        %v1104 = vsel %vm1072, %v1088, %v1024
        %vm1105 = vcmp.ge.s32.totalorder %v1089, 1
        %vm1106 = vcmp.ge.s32.totalorder %v1090, 1
        %vm1107 = vcmp.ge.s32.totalorder %v1091, 1
        %vm1108 = vcmp.ge.s32.totalorder %v1092, 1
        %vm1109 = vcmp.ge.s32.totalorder %v1093, 1
        %vm1110 = vcmp.ge.s32.totalorder %v1094, 1
        %vm1111 = vcmp.ge.s32.totalorder %v1095, 1
        %vm1112 = vcmp.ge.s32.totalorder %v1096, 1
        %vm1113 = vcmp.ge.s32.totalorder %v1097, 1
        %vm1114 = vcmp.ge.s32.totalorder %v1098, 1
        %vm1115 = vcmp.ge.s32.totalorder %v1099, 1
        %vm1116 = vcmp.ge.s32.totalorder %v1100, 1
        %vm1117 = vcmp.ge.s32.totalorder %v1101, 1
        %vm1118 = vcmp.ge.s32.totalorder %v1102, 1
        %vm1119 = vcmp.ge.s32.totalorder %v1103, 1
        %vm1120 = vcmp.ge.s32.totalorder %v1104, 1
        %vm1121 = vcmp.lt.s32.totalorder %v1089, 15
        %vm1122 = vcmp.lt.s32.totalorder %v1090, 15
        %vm1123 = vcmp.lt.s32.totalorder %v1091, 15
        %vm1124 = vcmp.lt.s32.totalorder %v1092, 15
        %vm1125 = vcmp.lt.s32.totalorder %v1093, 15
        %vm1126 = vcmp.lt.s32.totalorder %v1094, 15
        %vm1127 = vcmp.lt.s32.totalorder %v1095, 15
        %vm1128 = vcmp.lt.s32.totalorder %v1096, 15
        %vm1129 = vcmp.lt.s32.totalorder %v1097, 15
        %vm1130 = vcmp.lt.s32.totalorder %v1098, 15
        %vm1131 = vcmp.lt.s32.totalorder %v1099, 15
        %vm1132 = vcmp.lt.s32.totalorder %v1100, 15
        %vm1133 = vcmp.lt.s32.totalorder %v1101, 15
        %vm1134 = vcmp.lt.s32.totalorder %v1102, 15
        %vm1135 = vcmp.lt.s32.totalorder %v1103, 15
        %vm1136 = vcmp.lt.s32.totalorder %v1104, 15
        %v1137 = vld [vmem:[#allocation2] sm:$0x8]
        %v1138 = vld [vmem:[#allocation2 + $0x4] sm:$0xf]
        %v1139 = vld [vmem:[#allocation2 + $0x8] sm:$0xf]
        %v1140 = vld [vmem:[#allocation2 + $0xc] sm:$0xf]
        %v1141 = vld [vmem:[#allocation2 + $0x10] sm:$0xf]
        %v1142 = vld [vmem:[#allocation2 + $0x14] sm:$0xf]
        %v1143 = vld [vmem:[#allocation2 + $0x18] sm:$0xf]
        %v1144 = vld [vmem:[#allocation2 + $0x1c] sm:$0xf]
        %v1145 = vld [vmem:[#allocation2 + $0x20] sm:$0xf]
        %v1146 = vld [vmem:[#allocation2 + $0x24] sm:$0xf]
        %v1147 = vld [vmem:[#allocation2 + $0x28] sm:$0xf]
        %v1148 = vld [vmem:[#allocation2 + $0x2c] sm:$0xf]
        %v1149 = vld [vmem:[#allocation2 + $0x30] sm:$0xf]
        %v1150 = vld [vmem:[#allocation2 + $0x34] sm:$0xf]
        %v1151 = vld [vmem:[#allocation2 + $0x38] sm:$0xf]
        %v1152 = vld [vmem:[#allocation2 + $0x3c] sm:$0xf]
        %v1153 = vld [vmem:[#allocation2 + $0x40] sm:$0xf]
        %v1154 = vsel %vm1105, 1, 0
        %v1155 = vsel %vm1106, 1, 0
        %v1156 = vsel %vm1107, 1, 0
        %v1157 = vsel %vm1108, 1, 0
        %v1158 = vsel %vm1109, 1, 0
        %v1159 = vsel %vm1110, 1, 0
        %v1160 = vsel %vm1111, 1, 0
        %v1161 = vsel %vm1112, 1, 0
        %v1162 = vsel %vm1113, 1, 0
        %v1163 = vsel %vm1114, 1, 0
        %v1164 = vsel %vm1115, 1, 0
        %v1165 = vsel %vm1116, 1, 0
        %v1166 = vsel %vm1117, 1, 0
        %v1167 = vsel %vm1118, 1, 0
        %v1168 = vsel %vm1119, 1, 0
        %v1169 = vsel %vm1120, 1, 0
        %vm1170 = vcmp.eq.s32.totalorder %v1154, 1
        %vm1171 = vcmp.eq.s32.totalorder %v1155, 1
        %vm1172 = vcmp.eq.s32.totalorder %v1156, 1
        %vm1173 = vcmp.eq.s32.totalorder %v1157, 1
        %vm1174 = vcmp.eq.s32.totalorder %v1158, 1
        %vm1175 = vcmp.eq.s32.totalorder %v1159, 1
        %vm1176 = vcmp.eq.s32.totalorder %v1160, 1
        %vm1177 = vcmp.eq.s32.totalorder %v1161, 1
        %vm1178 = vcmp.eq.s32.totalorder %v1162, 1
        %vm1179 = vcmp.eq.s32.totalorder %v1163, 1
        %vm1180 = vcmp.eq.s32.totalorder %v1164, 1
        %vm1181 = vcmp.eq.s32.totalorder %v1165, 1
        %vm1182 = vcmp.eq.s32.totalorder %v1166, 1
        %vm1183 = vcmp.eq.s32.totalorder %v1167, 1
        %vm1184 = vcmp.eq.s32.totalorder %v1168, 1
        %vm1185 = vcmp.eq.s32.totalorder %v1169, 1
        %vm1186 = vmpackc.low %vm1170, %vm1170
        %vm1187 = vmpackc.low %vm1171, %vm1171
        %vm1188 = vmpackc.low %vm1172, %vm1172
        %vm1189 = vmpackc.low %vm1173, %vm1173
        %vm1190 = vmpackc.low %vm1174, %vm1174
        %vm1191 = vmpackc.low %vm1175, %vm1175
        %vm1192 = vmpackc.low %vm1176, %vm1176
        %vm1193 = vmpackc.low %vm1177, %vm1177
        %vm1194 = vmpackc.low %vm1178, %vm1178
        %vm1195 = vmpackc.low %vm1179, %vm1179
        %vm1196 = vmpackc.low %vm1180, %vm1180
        %vm1197 = vmpackc.low %vm1181, %vm1181
        %vm1198 = vmpackc.low %vm1182, %vm1182
        %vm1199 = vmpackc.low %vm1183, %vm1183
        %vm1200 = vmpackc.low %vm1184, %vm1184
        %vm1201 = vmpackc.low %vm1185, %vm1185
        %v1202 = vsel %vm1186, 65537, 0
        %v1203 = vsel %vm1187, 65537, 0
        %v1204 = vsel %vm1188, 65537, 0
        %v1205 = vsel %vm1189, 65537, 0
        %v1206 = vsel %vm1190, 65537, 0
        %v1207 = vsel %vm1191, 65537, 0
        %v1208 = vsel %vm1192, 65537, 0
        %v1209 = vsel %vm1193, 65537, 0
        %v1210 = vsel %vm1194, 65537, 0
        %v1211 = vsel %vm1195, 65537, 0
        %v1212 = vsel %vm1196, 65537, 0
        %v1213 = vsel %vm1197, 65537, 0
        %v1214 = vsel %vm1198, 65537, 0
        %v1215 = vsel %vm1199, 65537, 0
        %v1216 = vsel %vm1200, 65537, 0
        %v1217 = vsel %vm1201, 65537, 0
        %vm1218 = vsmask.f32 3328
        %vm1219 = vsmask.f32 7440
        %vm1220 = vmor %vm1218, %vm1219
        %v1222 = vshll.u32 %v1202, 16
        %v1224 = vrot.slane %v1222, 5
        %v1225 = vshrl.u32 %v1202, 16
        %v1227 = vrot.slane %v1225, 4
        %v1228 = vor.u32 %v1227, %v1224
        %v1229 = vrot.slane %v1228, 4
        %v1231 = vshll.u32 %v1203, 16
        %v1233 = vrot.slane %v1231, 5
        %v1234 = vsel %vm1220, %v1229, %v1233
        %v1235 = vshrl.u32 %v1203, 16
        %v1237 = vrot.slane %v1235, 4
        %v1238 = vor.u32 %v1237, %v1233
        %v1239 = vrot.slane %v1238, 4
        %v1241 = vshll.u32 %v1204, 16
        %v1243 = vrot.slane %v1241, 5
        %v1244 = vsel %vm1220, %v1239, %v1243
        %v1245 = vshrl.u32 %v1204, 16
        %v1247 = vrot.slane %v1245, 4
        %v1248 = vor.u32 %v1247, %v1243
        %v1249 = vrot.slane %v1248, 4
        %v1251 = vshll.u32 %v1205, 16
        %v1253 = vrot.slane %v1251, 5
        %v1254 = vsel %vm1220, %v1249, %v1253
        %v1255 = vshrl.u32 %v1205, 16
        %v1257 = vrot.slane %v1255, 4
        %v1258 = vor.u32 %v1257, %v1253
        %v1259 = vrot.slane %v1258, 4
        %v1261 = vshll.u32 %v1206, 16
        %v1263 = vrot.slane %v1261, 5
        %v1264 = vsel %vm1220, %v1259, %v1263
        %v1265 = vshrl.u32 %v1206, 16
        %v1267 = vrot.slane %v1265, 4
        %v1268 = vor.u32 %v1267, %v1263
        %v1269 = vrot.slane %v1268, 4
        %v1271 = vshll.u32 %v1207, 16
        %v1273 = vrot.slane %v1271, 5
        %v1274 = vsel %vm1220, %v1269, %v1273
        %v1275 = vshrl.u32 %v1207, 16
        %v1277 = vrot.slane %v1275, 4
        %v1278 = vor.u32 %v1277, %v1273
        %v1279 = vrot.slane %v1278, 4
        %v1281 = vshll.u32 %v1208, 16
        %v1283 = vrot.slane %v1281, 5
        %v1284 = vsel %vm1220, %v1279, %v1283
        %v1285 = vshrl.u32 %v1208, 16
        %v1287 = vrot.slane %v1285, 4
        %v1288 = vor.u32 %v1287, %v1283
        %v1289 = vrot.slane %v1288, 4
        %v1291 = vshll.u32 %v1209, 16
        %v1293 = vrot.slane %v1291, 5
        %v1294 = vsel %vm1220, %v1289, %v1293
        %v1295 = vshrl.u32 %v1209, 16
        %v1297 = vrot.slane %v1295, 4
        %v1298 = vor.u32 %v1297, %v1293
        %v1299 = vrot.slane %v1298, 4
        %v1301 = vshll.u32 %v1210, 16
        %v1303 = vrot.slane %v1301, 5
        %v1304 = vsel %vm1220, %v1299, %v1303
        %v1305 = vshrl.u32 %v1210, 16
        %v1307 = vrot.slane %v1305, 4
        %v1308 = vor.u32 %v1307, %v1303
        %v1309 = vrot.slane %v1308, 4
        %v1311 = vshll.u32 %v1211, 16
        %v1313 = vrot.slane %v1311, 5
        %v1314 = vsel %vm1220, %v1309, %v1313
        %v1315 = vshrl.u32 %v1211, 16
        %v1317 = vrot.slane %v1315, 4
        %v1318 = vor.u32 %v1317, %v1313
        %v1319 = vrot.slane %v1318, 4
        %v1321 = vshll.u32 %v1212, 16
        %v1323 = vrot.slane %v1321, 5
        %v1324 = vsel %vm1220, %v1319, %v1323
        %v1325 = vshrl.u32 %v1212, 16
        %v1327 = vrot.slane %v1325, 4
        %v1328 = vor.u32 %v1327, %v1323
        %v1329 = vrot.slane %v1328, 4
        %v1331 = vshll.u32 %v1213, 16
        %v1333 = vrot.slane %v1331, 5
        %v1334 = vsel %vm1220, %v1329, %v1333
        %v1335 = vshrl.u32 %v1213, 16
        %v1337 = vrot.slane %v1335, 4
        %v1338 = vor.u32 %v1337, %v1333
        %v1339 = vrot.slane %v1338, 4
        %v1341 = vshll.u32 %v1214, 16
        %v1343 = vrot.slane %v1341, 5
        %v1344 = vsel %vm1220, %v1339, %v1343
        %v1345 = vshrl.u32 %v1214, 16
        %v1347 = vrot.slane %v1345, 4
        %v1348 = vor.u32 %v1347, %v1343
        %v1349 = vrot.slane %v1348, 4
        %v1351 = vshll.u32 %v1215, 16
        %v1353 = vrot.slane %v1351, 5
        %v1354 = vsel %vm1220, %v1349, %v1353
        %v1355 = vshrl.u32 %v1215, 16
        %v1357 = vrot.slane %v1355, 4
        %v1358 = vor.u32 %v1357, %v1353
        %v1359 = vrot.slane %v1358, 4
        %v1361 = vshll.u32 %v1216, 16
        %v1363 = vrot.slane %v1361, 5
        %v1364 = vsel %vm1220, %v1359, %v1363
        %v1365 = vshrl.u32 %v1216, 16
        %v1367 = vrot.slane %v1365, 4
        %v1368 = vor.u32 %v1367, %v1363
        %v1369 = vrot.slane %v1368, 4
        %v1371 = vshll.u32 %v1217, 16
        %v1373 = vrot.slane %v1371, 5
        %v1374 = vsel %vm1220, %v1369, %v1373
        %v1375 = vshrl.u32 %v1217, 16
        %v1377 = vrot.slane %v1375, 4
        %v1378 = vor.u32 %v1377, %v1373
        %v1379 = vrot.slane %v1378, 4
        %vm1380 = vcmp.ne.s16.totalorder %v1224, 0
        %vm1381 = vcmp.ne.s16.totalorder %v1234, 0
        %vm1382 = vcmp.ne.s16.totalorder %v1244, 0
        %vm1383 = vcmp.ne.s16.totalorder %v1254, 0
        %vm1384 = vcmp.ne.s16.totalorder %v1264, 0
        %vm1385 = vcmp.ne.s16.totalorder %v1274, 0
        %vm1386 = vcmp.ne.s16.totalorder %v1284, 0
        %vm1387 = vcmp.ne.s16.totalorder %v1294, 0
        %vm1388 = vcmp.ne.s16.totalorder %v1304, 0
        %vm1389 = vcmp.ne.s16.totalorder %v1314, 0
        %vm1390 = vcmp.ne.s16.totalorder %v1324, 0
        %vm1391 = vcmp.ne.s16.totalorder %v1334, 0
        %vm1392 = vcmp.ne.s16.totalorder %v1344, 0
        %vm1393 = vcmp.ne.s16.totalorder %v1354, 0
        %vm1394 = vcmp.ne.s16.totalorder %v1364, 0
        %vm1395 = vcmp.ne.s16.totalorder %v1374, 0
        %vm1396 = vcmp.ne.s16.totalorder %v1379, 0
        %v1397 = vsel %vm1380, %v1137, 0
        %v1398 = vsel %vm1381, %v1138, 0
        %v1399 = vsel %vm1382, %v1139, 0
        %v1400 = vsel %vm1383, %v1140, 0
        %v1401 = vsel %vm1384, %v1141, 0
        %v1402 = vsel %vm1385, %v1142, 0
        %v1403 = vsel %vm1386, %v1143, 0
        %v1404 = vsel %vm1387, %v1144, 0
        %v1405 = vsel %vm1388, %v1145, 0
        %v1406 = vsel %vm1389, %v1146, 0
        %v1407 = vsel %vm1390, %v1147, 0
        %v1408 = vsel %vm1391, %v1148, 0
        %v1409 = vsel %vm1392, %v1149, 0
        %v1410 = vsel %vm1393, %v1150, 0
        %v1411 = vsel %vm1394, %v1151, 0
        %v1412 = vsel %vm1395, %v1152, 0
        %v1413 = vsel %vm1396, %v1153, 0
        %v1414 = vld [vmem:[#allocation2 + $0x44] sm:$0x1]
        %v1415 = vsel %vm1121, 1, 0
        %v1416 = vsel %vm1122, 1, 0
        %v1417 = vsel %vm1123, 1, 0
        %v1418 = vsel %vm1124, 1, 0
        %v1419 = vsel %vm1125, 1, 0
        %v1420 = vsel %vm1126, 1, 0
        %v1421 = vsel %vm1127, 1, 0
        %v1422 = vsel %vm1128, 1, 0
        %v1423 = vsel %vm1129, 1, 0
        %v1424 = vsel %vm1130, 1, 0
        %v1425 = vsel %vm1131, 1, 0
        %v1426 = vsel %vm1132, 1, 0
        %v1427 = vsel %vm1133, 1, 0
        %v1428 = vsel %vm1134, 1, 0
        %v1429 = vsel %vm1135, 1, 0
        %v1430 = vsel %vm1136, 1, 0
        %vm1431 = vcmp.eq.s32.totalorder %v1415, 1
        %vm1432 = vcmp.eq.s32.totalorder %v1416, 1
        %vm1433 = vcmp.eq.s32.totalorder %v1417, 1
        %vm1434 = vcmp.eq.s32.totalorder %v1418, 1
        %vm1435 = vcmp.eq.s32.totalorder %v1419, 1
        %vm1436 = vcmp.eq.s32.totalorder %v1420, 1
        %vm1437 = vcmp.eq.s32.totalorder %v1421, 1
        %vm1438 = vcmp.eq.s32.totalorder %v1422, 1
        %vm1439 = vcmp.eq.s32.totalorder %v1423, 1
        %vm1440 = vcmp.eq.s32.totalorder %v1424, 1
        %vm1441 = vcmp.eq.s32.totalorder %v1425, 1
        %vm1442 = vcmp.eq.s32.totalorder %v1426, 1
        %vm1443 = vcmp.eq.s32.totalorder %v1427, 1
        %vm1444 = vcmp.eq.s32.totalorder %v1428, 1
        %vm1445 = vcmp.eq.s32.totalorder %v1429, 1
        %vm1446 = vcmp.eq.s32.totalorder %v1430, 1
        %vm1447 = vmpackc.low %vm1431, %vm1431
        %vm1448 = vmpackc.low %vm1432, %vm1432
        %vm1449 = vmpackc.low %vm1433, %vm1433
        %vm1450 = vmpackc.low %vm1434, %vm1434
        %vm1451 = vmpackc.low %vm1435, %vm1435
        %vm1452 = vmpackc.low %vm1436, %vm1436
        %vm1453 = vmpackc.low %vm1437, %vm1437
        %vm1454 = vmpackc.low %vm1438, %vm1438
        %vm1455 = vmpackc.low %vm1439, %vm1439
        %vm1456 = vmpackc.low %vm1440, %vm1440
        %vm1457 = vmpackc.low %vm1441, %vm1441
        %vm1458 = vmpackc.low %vm1442, %vm1442
        %vm1459 = vmpackc.low %vm1443, %vm1443
        %vm1460 = vmpackc.low %vm1444, %vm1444
        %vm1461 = vmpackc.low %vm1445, %vm1445
        %vm1462 = vmpackc.low %vm1446, %vm1446
        %v1463 = vsel %vm1447, 65537, 0
        %v1464 = vsel %vm1448, 65537, 0
        %v1465 = vsel %vm1449, 65537, 0
        %v1466 = vsel %vm1450, 65537, 0
        %v1467 = vsel %vm1451, 65537, 0
        %v1468 = vsel %vm1452, 65537, 0
        %v1469 = vsel %vm1453, 65537, 0
        %v1470 = vsel %vm1454, 65537, 0
        %v1471 = vsel %vm1455, 65537, 0
        %v1472 = vsel %vm1456, 65537, 0
        %v1473 = vsel %vm1457, 65537, 0
        %v1474 = vsel %vm1458, 65537, 0
        %v1475 = vsel %vm1459, 65537, 0
        %v1476 = vsel %vm1460, 65537, 0
        %v1477 = vsel %vm1461, 65537, 0
        %v1478 = vsel %vm1462, 65537, 0
        %vm1479 = vsmask.f32 256
        %vm1480 = vsmask.f32 4368
        %vm1481 = vmor %vm1479, %vm1480
        %v1483 = vshrl.u32 %v1463, 16
        %v1485 = vrot.slane %v1483, 7
        %v1486 = vshll.u32 %v1463, 16
        %v1488 = vor.u32 %v1485, %v1486
        %v1489 = vrot.slane %v1485, 4
        %v1491 = vshrl.u32 %v1464, 16
        %v1493 = vrot.slane %v1491, 7
        %v1494 = vshll.u32 %v1464, 16
        %v1496 = vor.u32 %v1493, %v1494
        %v1497 = vsel %vm1481, %v1489, %v1496
        %v1498 = vrot.slane %v1493, 4
        %v1500 = vshrl.u32 %v1465, 16
        %v1502 = vrot.slane %v1500, 7
        %v1503 = vshll.u32 %v1465, 16
        %v1505 = vor.u32 %v1502, %v1503
        %v1506 = vsel %vm1481, %v1498, %v1505
        %v1507 = vrot.slane %v1502, 4
        %v1509 = vshrl.u32 %v1466, 16
        %v1511 = vrot.slane %v1509, 7
        %v1512 = vshll.u32 %v1466, 16
        %v1514 = vor.u32 %v1511, %v1512
        %v1515 = vsel %vm1481, %v1507, %v1514
        %v1516 = vrot.slane %v1511, 4
        %v1518 = vshrl.u32 %v1467, 16
        %v1520 = vrot.slane %v1518, 7
        %v1521 = vshll.u32 %v1467, 16
        %v1523 = vor.u32 %v1520, %v1521
        %v1524 = vsel %vm1481, %v1516, %v1523
        %v1525 = vrot.slane %v1520, 4
        %v1527 = vshrl.u32 %v1468, 16
        %v1529 = vrot.slane %v1527, 7
        %v1530 = vshll.u32 %v1468, 16
        %v1532 = vor.u32 %v1529, %v1530
        %v1533 = vsel %vm1481, %v1525, %v1532
        %v1534 = vrot.slane %v1529, 4
        %v1536 = vshrl.u32 %v1469, 16
        %v1538 = vrot.slane %v1536, 7
        %v1539 = vshll.u32 %v1469, 16
        %v1541 = vor.u32 %v1538, %v1539
        %v1542 = vsel %vm1481, %v1534, %v1541
        %v1543 = vrot.slane %v1538, 4
        %v1545 = vshrl.u32 %v1470, 16
        %v1547 = vrot.slane %v1545, 7
        %v1548 = vshll.u32 %v1470, 16
        %v1550 = vor.u32 %v1547, %v1548
        %v1551 = vsel %vm1481, %v1543, %v1550
        %v1552 = vrot.slane %v1547, 4
        %v1554 = vshrl.u32 %v1471, 16
        %v1556 = vrot.slane %v1554, 7
        %v1557 = vshll.u32 %v1471, 16
        %v1559 = vor.u32 %v1556, %v1557
        %v1560 = vsel %vm1481, %v1552, %v1559
        %v1561 = vrot.slane %v1556, 4
        %v1563 = vshrl.u32 %v1472, 16
        %v1565 = vrot.slane %v1563, 7
        %v1566 = vshll.u32 %v1472, 16
        %v1568 = vor.u32 %v1565, %v1566
        %v1569 = vsel %vm1481, %v1561, %v1568
        %v1570 = vrot.slane %v1565, 4
        %v1572 = vshrl.u32 %v1473, 16
        %v1574 = vrot.slane %v1572, 7
        %v1575 = vshll.u32 %v1473, 16
        %v1577 = vor.u32 %v1574, %v1575
        %v1578 = vsel %vm1481, %v1570, %v1577
        %v1579 = vrot.slane %v1574, 4
        %v1581 = vshrl.u32 %v1474, 16
        %v1583 = vrot.slane %v1581, 7
        %v1584 = vshll.u32 %v1474, 16
        %v1586 = vor.u32 %v1583, %v1584
        %v1587 = vsel %vm1481, %v1579, %v1586
        %v1588 = vrot.slane %v1583, 4
        %v1590 = vshrl.u32 %v1475, 16
        %v1592 = vrot.slane %v1590, 7
        %v1593 = vshll.u32 %v1475, 16
        %v1595 = vor.u32 %v1592, %v1593
        %v1596 = vsel %vm1481, %v1588, %v1595
        %v1597 = vrot.slane %v1592, 4
        %v1599 = vshrl.u32 %v1476, 16
        %v1601 = vrot.slane %v1599, 7
        %v1602 = vshll.u32 %v1476, 16
        %v1604 = vor.u32 %v1601, %v1602
        %v1605 = vsel %vm1481, %v1597, %v1604
        %v1606 = vrot.slane %v1601, 4
        %v1608 = vshrl.u32 %v1477, 16
        %v1610 = vrot.slane %v1608, 7
        %v1611 = vshll.u32 %v1477, 16
        %v1613 = vor.u32 %v1610, %v1611
        %v1614 = vsel %vm1481, %v1606, %v1613
        %v1615 = vrot.slane %v1610, 4
        %v1617 = vshrl.u32 %v1478, 16
        %v1619 = vrot.slane %v1617, 7
        %v1620 = vshll.u32 %v1478, 16
        %v1622 = vor.u32 %v1619, %v1620
        %v1623 = vsel %vm1481, %v1615, %v1622
        %v1624 = vrot.slane %v1619, 4
        %vm1625 = vcmp.ne.s16.totalorder %v1488, 0
        %vm1626 = vcmp.ne.s16.totalorder %v1497, 0
        %vm1627 = vcmp.ne.s16.totalorder %v1506, 0
        %vm1628 = vcmp.ne.s16.totalorder %v1515, 0
        %vm1629 = vcmp.ne.s16.totalorder %v1524, 0
        %vm1630 = vcmp.ne.s16.totalorder %v1533, 0
        %vm1631 = vcmp.ne.s16.totalorder %v1542, 0
        %vm1632 = vcmp.ne.s16.totalorder %v1551, 0
        %vm1633 = vcmp.ne.s16.totalorder %v1560, 0
        %vm1634 = vcmp.ne.s16.totalorder %v1569, 0
        %vm1635 = vcmp.ne.s16.totalorder %v1578, 0
        %vm1636 = vcmp.ne.s16.totalorder %v1587, 0
        %vm1637 = vcmp.ne.s16.totalorder %v1596, 0
        %vm1638 = vcmp.ne.s16.totalorder %v1605, 0
        %vm1639 = vcmp.ne.s16.totalorder %v1614, 0
        %vm1640 = vcmp.ne.s16.totalorder %v1623, 0
        %vm1641 = vcmp.ne.s16.totalorder %v1624, 0
        %v1642 = vsel %vm1625, %v1138, 0
        %v1643 = vsel %vm1626, %v1139, 0
        %v1644 = vsel %vm1627, %v1140, 0
        %v1645 = vsel %vm1628, %v1141, 0
        %v1646 = vsel %vm1629, %v1142, 0
        %v1647 = vsel %vm1630, %v1143, 0
        %v1648 = vsel %vm1631, %v1144, 0
        %v1649 = vsel %vm1632, %v1145, 0
        %v1650 = vsel %vm1633, %v1146, 0
        %v1651 = vsel %vm1634, %v1147, 0
        %v1652 = vsel %vm1635, %v1148, 0
        %v1653 = vsel %vm1636, %v1149, 0
        %v1654 = vsel %vm1637, %v1150, 0
        %v1655 = vsel %vm1638, %v1151, 0
        %v1656 = vsel %vm1639, %v1152, 0
        %v1657 = vsel %vm1640, %v1153, 0
        %v1658 = vsel %vm1641, %v1414, 0
        %v1659 = vld [vmem:[#allocation2 + $0x8] sm:$0x8]
        %v1660 = vld [vmem:[#allocation2 + $0x44] sm:$0xf]
        %v1661 = vld [vmem:[#allocation2 + $0x48] sm:$0xf]
        %v1662 = vsel %vm1380, %v1659, 0
        %v1663 = vsel %vm1381, %v1140, 0
        %v1664 = vsel %vm1382, %v1141, 0
        %v1665 = vsel %vm1383, %v1142, 0
        %v1666 = vsel %vm1384, %v1143, 0
        %v1667 = vsel %vm1385, %v1144, 0
        %v1668 = vsel %vm1386, %v1145, 0
        %v1669 = vsel %vm1387, %v1146, 0
        %v1670 = vsel %vm1388, %v1147, 0
        %v1671 = vsel %vm1389, %v1148, 0
        %v1672 = vsel %vm1390, %v1149, 0
        %v1673 = vsel %vm1391, %v1150, 0
        %v1674 = vsel %vm1392, %v1151, 0
        %v1675 = vsel %vm1393, %v1152, 0
        %v1676 = vsel %vm1394, %v1153, 0
        %v1677 = vsel %vm1395, %v1660, 0
        %v1678 = vsel %vm1396, %v1661, 0
        %v1679 = vld [vmem:[#allocation2 + $0x4c] sm:$0x1]
        %v1680 = vsel %vm1625, %v1140, 0
        %v1681 = vsel %vm1626, %v1141, 0
        %v1682 = vsel %vm1627, %v1142, 0
        %v1683 = vsel %vm1628, %v1143, 0
        %v1684 = vsel %vm1629, %v1144, 0
        %v1685 = vsel %vm1630, %v1145, 0
        %v1686 = vsel %vm1631, %v1146, 0
        %v1687 = vsel %vm1632, %v1147, 0
        %v1688 = vsel %vm1633, %v1148, 0
        %v1689 = vsel %vm1634, %v1149, 0
        %v1690 = vsel %vm1635, %v1150, 0
        %v1691 = vsel %vm1636, %v1151, 0
        %v1692 = vsel %vm1637, %v1152, 0
        %v1693 = vsel %vm1638, %v1153, 0
        %v1694 = vsel %vm1639, %v1660, 0
        %v1695 = vsel %vm1640, %v1661, 0
        %v1696 = vsel %vm1641, %v1679, 0
        %v1697 = vld [vmem:[#allocation2 + $0x10] sm:$0x8]
        %v1698 = vld [vmem:[#allocation2 + $0x4c] sm:$0xf]
        %v1699 = vld [vmem:[#allocation2 + $0x50] sm:$0xf]
        %v1700 = vsel %vm1380, %v1697, 0
        %v1701 = vsel %vm1381, %v1142, 0
        %v1702 = vsel %vm1382, %v1143, 0
        %v1703 = vsel %vm1383, %v1144, 0
        %v1704 = vsel %vm1384, %v1145, 0
        %v1705 = vsel %vm1385, %v1146, 0
        %v1706 = vsel %vm1386, %v1147, 0
        %v1707 = vsel %vm1387, %v1148, 0
        %v1708 = vsel %vm1388, %v1149, 0
        %v1709 = vsel %vm1389, %v1150, 0
        %v1710 = vsel %vm1390, %v1151, 0
        %v1711 = vsel %vm1391, %v1152, 0
        %v1712 = vsel %vm1392, %v1153, 0
        %v1713 = vsel %vm1393, %v1660, 0
        %v1714 = vsel %vm1394, %v1661, 0
        %v1715 = vsel %vm1395, %v1698, 0
        %v1716 = vsel %vm1396, %v1699, 0
        %v1717 = vld [vmem:[#allocation2 + $0x14] sm:$0xf]
        %v1718 = vld [vmem:[#allocation2 + $0x18] sm:$0xf]
        %v1719 = vld [vmem:[#allocation2 + $0x1c] sm:$0xf]
        %v1720 = vld [vmem:[#allocation2 + $0x20] sm:$0xf]
        %v1721 = vld [vmem:[#allocation2 + $0x24] sm:$0xf]
        %v1722 = vld [vmem:[#allocation2 + $0x28] sm:$0xf]
        %v1723 = vld [vmem:[#allocation2 + $0x2c] sm:$0xf]
        %v1724 = vld [vmem:[#allocation2 + $0x30] sm:$0xf]
        %v1725 = vld [vmem:[#allocation2 + $0x34] sm:$0xf]
        %v1726 = vld [vmem:[#allocation2 + $0x38] sm:$0xf]
        %v1727 = vld [vmem:[#allocation2 + $0x3c] sm:$0xf]
        %v1728 = vld [vmem:[#allocation2 + $0x40] sm:$0xf]
        %v1729 = vld [vmem:[#allocation2 + $0x44] sm:$0xf]
        %v1730 = vld [vmem:[#allocation2 + $0x48] sm:$0xf]
        %v1731 = vld [vmem:[#allocation2 + $0x4c] sm:$0xf]
        %v1732 = vld [vmem:[#allocation2 + $0x50] sm:$0xf]
        %v1733 = vld [vmem:[#allocation2 + $0x54] sm:$0x1]
        %v1734 = vsel %vm1625, %v1717, 0
        %v1735 = vsel %vm1626, %v1718, 0
        %v1736 = vsel %vm1627, %v1719, 0
        %v1737 = vsel %vm1628, %v1720, 0
        %v1738 = vsel %vm1629, %v1721, 0
        %v1739 = vsel %vm1630, %v1722, 0
        %v1740 = vsel %vm1631, %v1723, 0
        %v1741 = vsel %vm1632, %v1724, 0
        %v1742 = vsel %vm1633, %v1725, 0
        %v1743 = vsel %vm1634, %v1726, 0
        %v1744 = vsel %vm1635, %v1727, 0
        %v1745 = vsel %vm1636, %v1728, 0
        %v1746 = vsel %vm1637, %v1729, 0
        %v1747 = vsel %vm1638, %v1730, 0
        %v1748 = vsel %vm1639, %v1731, 0
        %v1749 = vsel %vm1640, %v1732, 0
        %v1750 = vsel %vm1641, %v1733, 0
        %v1768 = vunpack.c.l.b16 %v1397
        %v1769 = vunpack.c.l.b16 %v1398
        %v1770 = vunpack.c.l.b16 %v1399
        %v1771 = vunpack.c.l.b16 %v1400
        %v1772 = vunpack.c.l.b16 %v1401
        %v1773 = vunpack.c.l.b16 %v1402
        %v1774 = vunpack.c.l.b16 %v1403
        %v1775 = vunpack.c.l.b16 %v1404
        %v1776 = vunpack.c.l.b16 %v1405
        %v1777 = vunpack.c.l.b16 %v1406
        %v1778 = vunpack.c.l.b16 %v1407
        %v1779 = vunpack.c.l.b16 %v1408
        %v1780 = vunpack.c.l.b16 %v1409
        %v1781 = vunpack.c.l.b16 %v1410
        %v1782 = vunpack.c.l.b16 %v1411
        %v1783 = vunpack.c.l.b16 %v1412
        %v1784 = vunpack.c.l.b16 %v1413
        %v1785 = vpack.c.b16 %v1769, %v1768
        %v1786 = vpack.c.b16 %v1771, %v1770
        %v1787 = vpack.c.b16 %v1773, %v1772
        %v1788 = vpack.c.b16 %v1775, %v1774
        %v1789 = vpack.c.b16 %v1777, %v1776
        %v1790 = vpack.c.b16 %v1779, %v1778
        %v1791 = vpack.c.b16 %v1781, %v1780
        %v1792 = vpack.c.b16 %v1783, %v1782
        %v1793 = vpack.c.b16 %v1784, %v1784
        %v1810 = vunpack.c.l.b16 %v1138
        %v1811 = vunpack.c.l.b16 %v1139
        %v1812 = vunpack.c.l.b16 %v1140
        %v1813 = vunpack.c.l.b16 %v1141
        %v1814 = vunpack.c.l.b16 %v1142
        %v1815 = vunpack.c.l.b16 %v1143
        %v1816 = vunpack.c.l.b16 %v1144
        %v1817 = vunpack.c.l.b16 %v1145
        %v1818 = vunpack.c.l.b16 %v1146
        %v1819 = vunpack.c.l.b16 %v1147
        %v1820 = vunpack.c.l.b16 %v1148
        %v1821 = vunpack.c.l.b16 %v1149
        %v1822 = vunpack.c.l.b16 %v1150
        %v1823 = vunpack.c.l.b16 %v1151
        %v1824 = vunpack.c.l.b16 %v1152
        %v1825 = vunpack.c.l.b16 %v1153
        %v1826 = vpack.c.b16 %v1811, %v1810
        %v1827 = vpack.c.b16 %v1813, %v1812
        %v1828 = vpack.c.b16 %v1815, %v1814
        %v1829 = vpack.c.b16 %v1817, %v1816
        %v1830 = vpack.c.b16 %v1819, %v1818
        %v1831 = vpack.c.b16 %v1821, %v1820
        %v1832 = vpack.c.b16 %v1823, %v1822
        %v1833 = vpack.c.b16 %v1825, %v1824
        %v1835 = vshrl.u32 %v1826, 16
        %v1837 = vrot.slane %v1835, 4
        %v1838 = vshll.u32 %v1826, 16
        %v1840 = vrot.slane %v1838, 5
        %v1841 = vor.u32 %v1837, %v1840
        %v1843 = vshrl.u32 %v1827, 16
        %v1845 = vrot.slane %v1843, 4
        %v1846 = vshll.u32 %v1827, 16
        %v1848 = vrot.slane %v1846, 5
        %v1849 = vor.u32 %v1845, %v1848
        %v1850 = vsel %vm1218, %v1841, %v1849
        %v1852 = vshrl.u32 %v1828, 16
        %v1854 = vrot.slane %v1852, 4
        %v1855 = vshll.u32 %v1828, 16
        %v1857 = vrot.slane %v1855, 5
        %v1858 = vor.u32 %v1854, %v1857
        %v1859 = vsel %vm1218, %v1849, %v1858
        %v1861 = vshrl.u32 %v1829, 16
        %v1863 = vrot.slane %v1861, 4
        %v1864 = vshll.u32 %v1829, 16
        %v1866 = vrot.slane %v1864, 5
        %v1867 = vor.u32 %v1863, %v1866
        %v1868 = vsel %vm1218, %v1858, %v1867
        %v1870 = vshrl.u32 %v1830, 16
        %v1872 = vrot.slane %v1870, 4
        %v1873 = vshll.u32 %v1830, 16
        %v1875 = vrot.slane %v1873, 5
        %v1876 = vor.u32 %v1872, %v1875
        %v1877 = vsel %vm1218, %v1867, %v1876
        %v1879 = vshrl.u32 %v1831, 16
        %v1881 = vrot.slane %v1879, 4
        %v1882 = vshll.u32 %v1831, 16
        %v1884 = vrot.slane %v1882, 5
        %v1885 = vor.u32 %v1881, %v1884
        %v1886 = vsel %vm1218, %v1876, %v1885
        %v1888 = vshrl.u32 %v1832, 16
        %v1890 = vrot.slane %v1888, 4
        %v1891 = vshll.u32 %v1832, 16
        %v1893 = vrot.slane %v1891, 5
        %v1894 = vor.u32 %v1890, %v1893
        %v1895 = vsel %vm1218, %v1885, %v1894
        %v1897 = vshrl.u32 %v1833, 16
        %v1899 = vrot.slane %v1897, 4
        %v1900 = vshll.u32 %v1833, 16
        %v1902 = vrot.slane %v1900, 5
        %v1903 = vor.u32 %v1899, %v1902
        %v1904 = vsel %vm1218, %v1894, %v1903
        %v1922 = vunpack.c.l.b16 %v1642
        %v1923 = vunpack.c.l.b16 %v1643
        %v1924 = vunpack.c.l.b16 %v1644
        %v1925 = vunpack.c.l.b16 %v1645
        %v1926 = vunpack.c.l.b16 %v1646
        %v1927 = vunpack.c.l.b16 %v1647
        %v1928 = vunpack.c.l.b16 %v1648
        %v1929 = vunpack.c.l.b16 %v1649
        %v1930 = vunpack.c.l.b16 %v1650
        %v1931 = vunpack.c.l.b16 %v1651
        %v1932 = vunpack.c.l.b16 %v1652
        %v1933 = vunpack.c.l.b16 %v1653
        %v1934 = vunpack.c.l.b16 %v1654
        %v1935 = vunpack.c.l.b16 %v1655
        %v1936 = vunpack.c.l.b16 %v1656
        %v1937 = vunpack.c.l.b16 %v1657
        %v1938 = vunpack.c.l.b16 %v1658
        %v1939 = vpack.c.b16 %v1923, %v1922
        %v1940 = vpack.c.b16 %v1925, %v1924
        %v1941 = vpack.c.b16 %v1927, %v1926
        %v1942 = vpack.c.b16 %v1929, %v1928
        %v1943 = vpack.c.b16 %v1931, %v1930
        %v1944 = vpack.c.b16 %v1933, %v1932
        %v1945 = vpack.c.b16 %v1935, %v1934
        %v1946 = vpack.c.b16 %v1937, %v1936
        %v1947 = vpack.c.b16 %v1938, %v1938
        %vm1948 = vcmask 1042432
        %v1949 = vrot.slane %v1939, 5
        %v1950 = vrot.slane %v1940, 5
        %v1951 = vsel %vm1948, %v1949, %v1950
        %v1952 = vrot.slane %v1941, 5
        %v1953 = vsel %vm1948, %v1950, %v1952
        %v1954 = vrot.slane %v1942, 5
        %v1955 = vsel %vm1948, %v1952, %v1954
        %v1956 = vrot.slane %v1943, 5
        %v1957 = vsel %vm1948, %v1954, %v1956
        %v1958 = vrot.slane %v1944, 5
        %v1959 = vsel %vm1948, %v1956, %v1958
        %v1960 = vrot.slane %v1945, 5
        %v1961 = vsel %vm1948, %v1958, %v1960
        %v1962 = vrot.slane %v1946, 5
        %v1963 = vsel %vm1948, %v1960, %v1962
        %v1964 = vrot.slane %v1947, 5
        %v1965 = vsel %vm1948, %v1962, %v1964
        %v1983 = vunpack.c.l.b16 %v1662
        %v1984 = vunpack.c.l.b16 %v1663
        %v1985 = vunpack.c.l.b16 %v1664
        %v1986 = vunpack.c.l.b16 %v1665
        %v1987 = vunpack.c.l.b16 %v1666
        %v1988 = vunpack.c.l.b16 %v1667
        %v1989 = vunpack.c.l.b16 %v1668
        %v1990 = vunpack.c.l.b16 %v1669
        %v1991 = vunpack.c.l.b16 %v1670
        %v1992 = vunpack.c.l.b16 %v1671
        %v1993 = vunpack.c.l.b16 %v1672
        %v1994 = vunpack.c.l.b16 %v1673
        %v1995 = vunpack.c.l.b16 %v1674
        %v1996 = vunpack.c.l.b16 %v1675
        %v1997 = vunpack.c.l.b16 %v1676
        %v1998 = vunpack.c.l.b16 %v1677
        %v1999 = vunpack.c.l.b16 %v1678
        %v2000 = vpack.c.b16 %v1984, %v1983
        %v2001 = vpack.c.b16 %v1986, %v1985
        %v2002 = vpack.c.b16 %v1988, %v1987
        %v2003 = vpack.c.b16 %v1990, %v1989
        %v2004 = vpack.c.b16 %v1992, %v1991
        %v2005 = vpack.c.b16 %v1994, %v1993
        %v2006 = vpack.c.b16 %v1996, %v1995
        %v2007 = vpack.c.b16 %v1998, %v1997
        %v2008 = vpack.c.b16 %v1999, %v1999
        %v2011 = vunpack.c.l.b16 %v1660
        %v2012 = vunpack.c.l.b16 %v1661
        %v2013 = vpack.c.b16 %v2012, %v2011
        %v2015 = vshrl.u32 %v2013, 16
        %v2017 = vrot.slane %v2015, 4
        %v2018 = vshll.u32 %v2013, 16
        %v2020 = vrot.slane %v2018, 5
        %v2021 = vor.u32 %v2017, %v2020
        %v2022 = vsel %vm1218, %v1903, %v2021
        %v2040 = vunpack.c.l.b16 %v1680
        %v2041 = vunpack.c.l.b16 %v1681
        %v2042 = vunpack.c.l.b16 %v1682
        %v2043 = vunpack.c.l.b16 %v1683
        %v2044 = vunpack.c.l.b16 %v1684
        %v2045 = vunpack.c.l.b16 %v1685
        %v2046 = vunpack.c.l.b16 %v1686
        %v2047 = vunpack.c.l.b16 %v1687
        %v2048 = vunpack.c.l.b16 %v1688
        %v2049 = vunpack.c.l.b16 %v1689
        %v2050 = vunpack.c.l.b16 %v1690
        %v2051 = vunpack.c.l.b16 %v1691
        %v2052 = vunpack.c.l.b16 %v1692
        %v2053 = vunpack.c.l.b16 %v1693
        %v2054 = vunpack.c.l.b16 %v1694
        %v2055 = vunpack.c.l.b16 %v1695
        %v2056 = vunpack.c.l.b16 %v1696
        %v2057 = vpack.c.b16 %v2041, %v2040
        %v2058 = vpack.c.b16 %v2043, %v2042
        %v2059 = vpack.c.b16 %v2045, %v2044
        %v2060 = vpack.c.b16 %v2047, %v2046
        %v2061 = vpack.c.b16 %v2049, %v2048
        %v2062 = vpack.c.b16 %v2051, %v2050
        %v2063 = vpack.c.b16 %v2053, %v2052
        %v2064 = vpack.c.b16 %v2055, %v2054
        %v2065 = vpack.c.b16 %v2056, %v2056
        %v2066 = vrot.slane %v2057, 5
        %v2067 = vrot.slane %v2058, 5
        %v2068 = vsel %vm1948, %v2066, %v2067
        %v2069 = vrot.slane %v2059, 5
        %v2070 = vsel %vm1948, %v2067, %v2069
        %v2071 = vrot.slane %v2060, 5
        %v2072 = vsel %vm1948, %v2069, %v2071
        %v2073 = vrot.slane %v2061, 5
        %v2074 = vsel %vm1948, %v2071, %v2073
        %v2075 = vrot.slane %v2062, 5
        %v2076 = vsel %vm1948, %v2073, %v2075
        %v2077 = vrot.slane %v2063, 5
        %v2078 = vsel %vm1948, %v2075, %v2077
        %v2079 = vrot.slane %v2064, 5
        %v2080 = vsel %vm1948, %v2077, %v2079
        %v2081 = vrot.slane %v2065, 5
        %v2082 = vsel %vm1948, %v2079, %v2081
        %v2100 = vunpack.c.l.b16 %v1700
        %v2101 = vunpack.c.l.b16 %v1701
        %v2102 = vunpack.c.l.b16 %v1702
        %v2103 = vunpack.c.l.b16 %v1703
        %v2104 = vunpack.c.l.b16 %v1704
        %v2105 = vunpack.c.l.b16 %v1705
        %v2106 = vunpack.c.l.b16 %v1706
        %v2107 = vunpack.c.l.b16 %v1707
        %v2108 = vunpack.c.l.b16 %v1708
        %v2109 = vunpack.c.l.b16 %v1709
        %v2110 = vunpack.c.l.b16 %v1710
        %v2111 = vunpack.c.l.b16 %v1711
        %v2112 = vunpack.c.l.b16 %v1712
        %v2113 = vunpack.c.l.b16 %v1713
        %v2114 = vunpack.c.l.b16 %v1714
        %v2115 = vunpack.c.l.b16 %v1715
        %v2116 = vunpack.c.l.b16 %v1716
        %v2117 = vpack.c.b16 %v2101, %v2100
        %v2118 = vpack.c.b16 %v2103, %v2102
        %v2119 = vpack.c.b16 %v2105, %v2104
        %v2120 = vpack.c.b16 %v2107, %v2106
        %v2121 = vpack.c.b16 %v2109, %v2108
        %v2122 = vpack.c.b16 %v2111, %v2110
        %v2123 = vpack.c.b16 %v2113, %v2112
        %v2124 = vpack.c.b16 %v2115, %v2114
        %v2125 = vpack.c.b16 %v2116, %v2116
        %v2128 = vunpack.c.l.b16 %v1698
        %v2129 = vunpack.c.l.b16 %v1699
        %v2130 = vpack.c.b16 %v2129, %v2128
        %v2132 = vshrl.u32 %v2130, 16
        %v2134 = vrot.slane %v2132, 4
        %v2135 = vshll.u32 %v2130, 16
        %v2137 = vrot.slane %v2135, 5
        %v2138 = vor.u32 %v2134, %v2137
        %v2139 = vsel %vm1218, %v2021, %v2138
        %v2157 = vunpack.c.l.b16 %v1734
        %v2158 = vunpack.c.l.b16 %v1735
        %v2159 = vunpack.c.l.b16 %v1736
        %v2160 = vunpack.c.l.b16 %v1737
        %v2161 = vunpack.c.l.b16 %v1738
        %v2162 = vunpack.c.l.b16 %v1739
        %v2163 = vunpack.c.l.b16 %v1740
        %v2164 = vunpack.c.l.b16 %v1741
        %v2165 = vunpack.c.l.b16 %v1742
        %v2166 = vunpack.c.l.b16 %v1743
        %v2167 = vunpack.c.l.b16 %v1744
        %v2168 = vunpack.c.l.b16 %v1745
        %v2169 = vunpack.c.l.b16 %v1746
        %v2170 = vunpack.c.l.b16 %v1747
        %v2171 = vunpack.c.l.b16 %v1748
        %v2172 = vunpack.c.l.b16 %v1749
        %v2173 = vunpack.c.l.b16 %v1750
        %v2174 = vpack.c.b16 %v2158, %v2157
        %v2175 = vpack.c.b16 %v2160, %v2159
        %v2176 = vpack.c.b16 %v2162, %v2161
        %v2177 = vpack.c.b16 %v2164, %v2163
        %v2178 = vpack.c.b16 %v2166, %v2165
        %v2179 = vpack.c.b16 %v2168, %v2167
        %v2180 = vpack.c.b16 %v2170, %v2169
        %v2181 = vpack.c.b16 %v2172, %v2171
        %v2182 = vpack.c.b16 %v2173, %v2173
        %v2183 = vrot.slane %v2174, 5
        %v2184 = vrot.slane %v2175, 5
        %v2185 = vsel %vm1948, %v2183, %v2184
        %v2186 = vrot.slane %v2176, 5
        %v2187 = vsel %vm1948, %v2184, %v2186
        %v2188 = vrot.slane %v2177, 5
        %v2189 = vsel %vm1948, %v2186, %v2188
        %v2190 = vrot.slane %v2178, 5
        %v2191 = vsel %vm1948, %v2188, %v2190
        %v2192 = vrot.slane %v2179, 5
        %v2193 = vsel %vm1948, %v2190, %v2192
        %v2194 = vrot.slane %v2180, 5
        %v2195 = vsel %vm1948, %v2192, %v2194
        %v2196 = vrot.slane %v2181, 5
        %v2197 = vsel %vm1948, %v2194, %v2196
        %v2198 = vrot.slane %v2182, 5
        %v2199 = vsel %vm1948, %v2196, %v2198
        %v2200 = vld [vmem:[%s3] sm:$0xf]
        %v2201 = vld [vmem:[%s3 + $0x4] sm:$0xf]
        %v2202 = vld [vmem:[%s3 + $0x8] sm:$0xf]
        %v2203 = vld [vmem:[%s3 + $0xc] sm:$0xf]
        %v2204 = vld [vmem:[%s3 + $0x10] sm:$0xf]
        %v2205 = vld [vmem:[%s3 + $0x14] sm:$0xf]
        %v2206 = vld [vmem:[%s3 + $0x18] sm:$0xf]
        %v2207 = vld [vmem:[%s3 + $0x1c] sm:$0xf]
        %v2208 = vld [vmem:[%s3 + $0x20] sm:$0xf]
        %v2209 = vld [vmem:[%s3 + $0x24] sm:$0xf]
        %v2210 = vld [vmem:[%s3 + $0x28] sm:$0xf]
        %v2211 = vld [vmem:[%s3 + $0x2c] sm:$0xf]
        %v2212 = vld [vmem:[%s3 + $0x30] sm:$0xf]
        %v2213 = vld [vmem:[%s3 + $0x34] sm:$0xf]
        %v2214 = vld [vmem:[%s3 + $0x38] sm:$0xf]
        %v2215 = vld [vmem:[%s3 + $0x3c] sm:$0xf]
        %v2216 = vld [vmem:[%s3 + $0x40] sm:$0xf]
        %v2217 = vld [vmem:[%s3 + $0x44] sm:$0xf]
        %v2218 = vld [vmem:[%s3 + $0x48] sm:$0xf]
        %v2219 = vld [vmem:[%s3 + $0x4c] sm:$0xf]
        %v2220 = vld [vmem:[%s3 + $0x50] sm:$0xf]
        %v2221 = vld [vmem:[%s3 + $0x54] sm:$0xf]
        %v2222 = vld [vmem:[%s3 + $0x58] sm:$0xf]
        %v2223 = vld [vmem:[%s3 + $0x5c] sm:$0xf]
        %v2224 = vld [vmem:[%s3 + $0x60] sm:$0xf]
        %v2225 = vld [vmem:[%s3 + $0x64] sm:$0xf]
        %v2226 = vld [vmem:[%s3 + $0x68] sm:$0xf]
        %v2227 = vld [vmem:[%s3 + $0x6c] sm:$0xf]
        %v2228 = vld [vmem:[%s3 + $0x70] sm:$0xf]
        %v2229 = vld [vmem:[%s3 + $0x74] sm:$0xf]
        %v2230 = vld [vmem:[%s3 + $0x78] sm:$0xf]
        %v2231 = vld [vmem:[%s3 + $0x7c] sm:$0xf]
        %v2232 = vld [vmem:[%s3 + $0x80] sm:$0xf]
        %v2233 = vld [vmem:[%s3 + $0x84] sm:$0xf]
        %v2234 = vld [vmem:[%s3 + $0x88] sm:$0xf]
        %v2235 = vld [vmem:[%s3 + $0x8c] sm:$0xf]
        %v2236 = vld [vmem:[%s3 + $0x90] sm:$0xf]
        %v2237 = vld [vmem:[%s3 + $0x94] sm:$0xf]
        %v2238 = vld [vmem:[%s3 + $0x98] sm:$0xf]
        %v2239 = vld [vmem:[%s3 + $0x9c] sm:$0xf]
        %v2240 = vld [vmem:[%s3 + $0xa0] sm:$0xf]
        %v2241 = vld [vmem:[%s3 + $0xa4] sm:$0xf]
        %v2242 = vld [vmem:[%s3 + $0xa8] sm:$0xf]
        %v2243 = vld [vmem:[%s3 + $0xac] sm:$0xf]
        %v2244 = vld [vmem:[%s3 + $0xb0] sm:$0xf]
        %v2245 = vld [vmem:[%s3 + $0xb4] sm:$0xf]
        %v2246 = vld [vmem:[%s3 + $0xb8] sm:$0xf]
        %v2247 = vld [vmem:[%s3 + $0xbc] sm:$0xf]
        %v2248 = vld [vmem:[%s3 + $0xc0] sm:$0xf]
        %v2249 = vld [vmem:[%s3 + $0xc4] sm:$0xf]
        %v2250 = vld [vmem:[%s3 + $0xc8] sm:$0xf]
        %v2251 = vld [vmem:[%s3 + $0xcc] sm:$0xf]
        %v2252 = vld [vmem:[%s3 + $0xd0] sm:$0xf]
        %v2253 = vld [vmem:[%s3 + $0xd4] sm:$0xf]
        %v2254 = vld [vmem:[%s3 + $0xd8] sm:$0xf]
        %v2255 = vld [vmem:[%s3 + $0xdc] sm:$0xf]
        %v2256 = vld [vmem:[%s3 + $0xe0] sm:$0xf]
        %v2257 = vld [vmem:[%s3 + $0xe4] sm:$0xf]
        %v2258 = vld [vmem:[%s3 + $0xe8] sm:$0xf]
        %v2259 = vld [vmem:[%s3 + $0xec] sm:$0xf]
        %v2260 = vld [vmem:[%s3 + $0xf0] sm:$0xf]
        %v2261 = vld [vmem:[%s3 + $0xf4] sm:$0xf]
        %v2262 = vld [vmem:[%s3 + $0xf8] sm:$0xf]
        %v2263 = vld [vmem:[%s3 + $0xfc] sm:$0xf]
        %v2264 = vld [vmem:[%s3 + $0x100] sm:$0xf]
        %v2265 = vld [vmem:[%s3 + $0x104] sm:$0xf]
        %v2266 = vld [vmem:[%s3 + $0x108] sm:$0xf]
        %v2267 = vld [vmem:[%s3 + $0x10c] sm:$0xf]
        %v2268 = vld [vmem:[%s3 + $0x110] sm:$0xf]
        %v2269 = vld [vmem:[%s3 + $0x114] sm:$0xf]
        %v2270 = vld [vmem:[%s3 + $0x118] sm:$0xf]
        %v2271 = vld [vmem:[%s3 + $0x11c] sm:$0xf]
        %v2272 = vld [vmem:[%s3 + $0x120] sm:$0xf]
        %v2273 = vld [vmem:[%s3 + $0x124] sm:$0xf]
        %v2274 = vld [vmem:[%s3 + $0x128] sm:$0xf]
        %v2275 = vld [vmem:[%s3 + $0x12c] sm:$0xf]
        %v2276 = vld [vmem:[%s3 + $0x130] sm:$0xf]
        %v2277 = vld [vmem:[%s3 + $0x134] sm:$0xf]
        %v2278 = vld [vmem:[%s3 + $0x138] sm:$0xf]
        %v2279 = vld [vmem:[%s3 + $0x13c] sm:$0xf]
        %v2280 = vld [vmem:[%s3 + $0x140] sm:$0xf]
        %v2281 = vld [vmem:[%s3 + $0x144] sm:$0xf]
        %v2282 = vld [vmem:[%s3 + $0x148] sm:$0xf]
        %v2283 = vld [vmem:[%s3 + $0x14c] sm:$0xf]
        %v2284 = vld [vmem:[%s3 + $0x150] sm:$0xf]
        %v2285 = vld [vmem:[%s3 + $0x154] sm:$0xf]
        %v2286 = vld [vmem:[%s3 + $0x158] sm:$0xf]
        %v2287 = vld [vmem:[%s3 + $0x15c] sm:$0xf]
        %v2288 = vld [vmem:[%s3 + $0x160] sm:$0xf]
        %v2289 = vld [vmem:[%s3 + $0x164] sm:$0xf]
        %v2290 = vld [vmem:[%s3 + $0x168] sm:$0xf]
        %v2291 = vld [vmem:[%s3 + $0x16c] sm:$0xf]
        %v2292 = vld [vmem:[%s3 + $0x170] sm:$0xf]
        %v2293 = vld [vmem:[%s3 + $0x174] sm:$0xf]
        %v2294 = vld [vmem:[%s3 + $0x178] sm:$0xf]
        %v2295 = vld [vmem:[%s3 + $0x17c] sm:$0xf]
        %v2296 = vld [vmem:[%s3 + $0x180] sm:$0xf]
        %v2297 = vld [vmem:[%s3 + $0x184] sm:$0xf]
        %v2298 = vld [vmem:[%s3 + $0x188] sm:$0xf]
        %v2299 = vld [vmem:[%s3 + $0x18c] sm:$0xf]
        %v2300 = vld [vmem:[%s3 + $0x190] sm:$0xf]
        %v2301 = vld [vmem:[%s3 + $0x194] sm:$0xf]
        %v2302 = vld [vmem:[%s3 + $0x198] sm:$0xf]
        %v2303 = vld [vmem:[%s3 + $0x19c] sm:$0xf]
        %v2304 = vld [vmem:[%s3 + $0x1a0] sm:$0xf]
        %v2305 = vld [vmem:[%s3 + $0x1a4] sm:$0xf]
        %v2306 = vld [vmem:[%s3 + $0x1a8] sm:$0xf]
        %v2307 = vld [vmem:[%s3 + $0x1ac] sm:$0xf]
        %v2308 = vld [vmem:[%s3 + $0x1b0] sm:$0xf]
        %v2309 = vld [vmem:[%s3 + $0x1b4] sm:$0xf]
        %v2310 = vld [vmem:[%s3 + $0x1b8] sm:$0xf]
        %v2311 = vld [vmem:[%s3 + $0x1bc] sm:$0xf]
        %v2312 = vld [vmem:[%s3 + $0x1c0] sm:$0xf]
        %v2313 = vld [vmem:[%s3 + $0x1c4] sm:$0xf]
        %v2314 = vld [vmem:[%s3 + $0x1c8] sm:$0xf]
        %v2315 = vld [vmem:[%s3 + $0x1cc] sm:$0xf]
        %v2316 = vld [vmem:[%s3 + $0x1d0] sm:$0xf]
        %v2317 = vld [vmem:[%s3 + $0x1d4] sm:$0xf]
        %v2318 = vld [vmem:[%s3 + $0x1d8] sm:$0xf]
        %v2319 = vld [vmem:[%s3 + $0x1dc] sm:$0xf]
        %v2320 = vld [vmem:[%s3 + $0x1e0] sm:$0xf]
        %v2321 = vld [vmem:[%s3 + $0x1e4] sm:$0xf]
        %v2322 = vld [vmem:[%s3 + $0x1e8] sm:$0xf]
        %v2323 = vld [vmem:[%s3 + $0x1ec] sm:$0xf]
        %v2324 = vld [vmem:[%s3 + $0x1f0] sm:$0xf]
        %v2325 = vld [vmem:[%s3 + $0x1f4] sm:$0xf]
        %v2326 = vld [vmem:[%s3 + $0x1f8] sm:$0xf]
        %v2327 = vld [vmem:[%s3 + $0x1fc] sm:$0xf]
        %v2328 = vld [vmem:[%s3 + $0x200] sm:$0xf]
        %v2329 = vld [vmem:[%s3 + $0x204] sm:$0xf]
        %v2330 = vld [vmem:[%s3 + $0x208] sm:$0xf]
        %v2331 = vld [vmem:[%s3 + $0x20c] sm:$0xf]
        %v2332 = vld [vmem:[%s3 + $0x210] sm:$0xf]
        %v2333 = vld [vmem:[%s3 + $0x214] sm:$0xf]
        %v2334 = vld [vmem:[%s3 + $0x218] sm:$0xf]
        %v2335 = vld [vmem:[%s3 + $0x21c] sm:$0xf]
        %v2336 = vld [vmem:[%s3 + $0x220] sm:$0xf]
        %v2337 = vld [vmem:[%s3 + $0x224] sm:$0xf]
        %v2338 = vld [vmem:[%s3 + $0x228] sm:$0xf]
        %v2339 = vld [vmem:[%s3 + $0x22c] sm:$0xf]
        %v2340 = vld [vmem:[%s3 + $0x230] sm:$0xf]
        %v2341 = vld [vmem:[%s3 + $0x234] sm:$0xf]
        %v2342 = vld [vmem:[%s3 + $0x238] sm:$0xf]
        %v2343 = vld [vmem:[%s3 + $0x23c] sm:$0xf]
        %v2344 = vld [vmem:[%s4] sm:$0x1]
        %v2346 = vlaneseq
        %v2347 = vshrl.u32 %v2346, 7
        %v2348 = vsub.s32 0, %v2347
        %v2349 = vrot.slane %v2344, %v2348
        %vm2351 = vsmask.f32 4352
        %v2353 = vshrl.u32 %v1785, 16
        %v2355 = vrot.slane %v2353, 3
        %v2356 = vshll.u32 %v1785, 16
        %v2358 = vrot.slane %v2356, 4
        %v2359 = vor.u32 %v2355, %v2358
        %v2361 = vshrl.u32 %v1786, 16
        %v2363 = vrot.slane %v2361, 3
        %v2364 = vshll.u32 %v1786, 16
        %v2366 = vrot.slane %v2364, 4
        %v2367 = vor.u32 %v2363, %v2366
        %v2368 = vsel %vm2351, %v2359, %v2367
        %v2370 = vshrl.u32 %v1841, 16
        %v2372 = vrot.slane %v2370, 3
        %v2373 = vshll.u32 %v1841, 16
        %v2375 = vrot.slane %v2373, 4
        %v2376 = vor.u32 %v2372, %v2375
        %v2378 = vshrl.u32 %v1850, 16
        %v2380 = vrot.slane %v2378, 3
        %v2381 = vshll.u32 %v1850, 16
        %v2383 = vrot.slane %v2381, 4
        %v2384 = vor.u32 %v2380, %v2383
        %v2385 = vsel %vm2351, %v2376, %v2384
        %v2387 = vshrl.u32 %v1949, 16
        %v2389 = vrot.slane %v2387, 3
        %v2390 = vshll.u32 %v1949, 16
        %v2392 = vrot.slane %v2390, 4
        %v2393 = vor.u32 %v2389, %v2392
        %v2395 = vshrl.u32 %v1951, 16
        %v2397 = vrot.slane %v2395, 3
        %v2398 = vshll.u32 %v1951, 16
        %v2400 = vrot.slane %v2398, 4
        %v2401 = vor.u32 %v2397, %v2400
        %v2402 = vsel %vm2351, %v2393, %v2401
        %v2404 = vshrl.u32 %v2000, 16
        %v2406 = vrot.slane %v2404, 3
        %v2407 = vshll.u32 %v2000, 16
        %v2409 = vrot.slane %v2407, 4
        %v2410 = vor.u32 %v2406, %v2409
        %v2412 = vshrl.u32 %v2001, 16
        %v2414 = vrot.slane %v2412, 3
        %v2415 = vshll.u32 %v2001, 16
        %v2417 = vrot.slane %v2415, 4
        %v2418 = vor.u32 %v2414, %v2417
        %v2419 = vsel %vm2351, %v2410, %v2418
        %v2421 = vshrl.u32 %v1849, 16
        %v2423 = vrot.slane %v2421, 3
        %v2424 = vshll.u32 %v1849, 16
        %v2426 = vrot.slane %v2424, 4
        %v2427 = vor.u32 %v2423, %v2426
        %v2429 = vshrl.u32 %v1859, 16
        %v2431 = vrot.slane %v2429, 3
        %v2432 = vshll.u32 %v1859, 16
        %v2434 = vrot.slane %v2432, 4
        %v2435 = vor.u32 %v2431, %v2434
        %v2436 = vsel %vm2351, %v2427, %v2435
        %v2438 = vshrl.u32 %v2066, 16
        %v2440 = vrot.slane %v2438, 3
        %v2441 = vshll.u32 %v2066, 16
        %v2443 = vrot.slane %v2441, 4
        %v2444 = vor.u32 %v2440, %v2443
        %v2446 = vshrl.u32 %v2068, 16
        %v2448 = vrot.slane %v2446, 3
        %v2449 = vshll.u32 %v2068, 16
        %v2451 = vrot.slane %v2449, 4
        %v2452 = vor.u32 %v2448, %v2451
        %v2453 = vsel %vm2351, %v2444, %v2452
        %v2455 = vshrl.u32 %v2117, 16
        %v2457 = vrot.slane %v2455, 3
        %v2458 = vshll.u32 %v2117, 16
        %v2460 = vrot.slane %v2458, 4
        %v2461 = vor.u32 %v2457, %v2460
        %v2463 = vshrl.u32 %v2118, 16
        %v2465 = vrot.slane %v2463, 3
        %v2466 = vshll.u32 %v2118, 16
        %v2468 = vrot.slane %v2466, 4
        %v2469 = vor.u32 %v2465, %v2468
        %v2470 = vsel %vm2351, %v2461, %v2469
        %v2472 = vshrl.u32 %v1858, 16
        %v2474 = vrot.slane %v2472, 3
        %v2475 = vshll.u32 %v1858, 16
        %v2477 = vrot.slane %v2475, 4
        %v2478 = vor.u32 %v2474, %v2477
        %v2480 = vshrl.u32 %v1868, 16
        %v2482 = vrot.slane %v2480, 3
        %v2483 = vshll.u32 %v1868, 16
        %v2485 = vrot.slane %v2483, 4
        %v2486 = vor.u32 %v2482, %v2485
        %v2487 = vsel %vm2351, %v2478, %v2486
        %v2489 = vshrl.u32 %v2183, 16
        %v2491 = vrot.slane %v2489, 3
        %v2492 = vshll.u32 %v2183, 16
        %v2494 = vrot.slane %v2492, 4
        %v2495 = vor.u32 %v2491, %v2494
        %v2497 = vshrl.u32 %v2185, 16
        %v2499 = vrot.slane %v2497, 3
        %v2500 = vshll.u32 %v2185, 16
        %v2502 = vrot.slane %v2500, 4
        %v2503 = vor.u32 %v2499, %v2502
        %v2504 = vsel %vm2351, %v2495, %v2503
        %v2506 = vshrl.u32 %v1787, 16
        %v2508 = vrot.slane %v2506, 3
        %v2509 = vshll.u32 %v1787, 16
        %v2511 = vrot.slane %v2509, 4
        %v2512 = vor.u32 %v2508, %v2511
        %v2513 = vsel %vm2351, %v2367, %v2512
        %v2514 = vsel %vm2351, %v2384, %v2435
        %v2516 = vshrl.u32 %v1953, 16
        %v2518 = vrot.slane %v2516, 3
        %v2519 = vshll.u32 %v1953, 16
        %v2521 = vrot.slane %v2519, 4
        %v2522 = vor.u32 %v2518, %v2521
        %v2523 = vsel %vm2351, %v2401, %v2522
        %v2525 = vshrl.u32 %v2002, 16
        %v2527 = vrot.slane %v2525, 3
        %v2528 = vshll.u32 %v2002, 16
        %v2530 = vrot.slane %v2528, 4
        %v2531 = vor.u32 %v2527, %v2530
        %v2532 = vsel %vm2351, %v2418, %v2531
        %v2533 = vsel %vm2351, %v2435, %v2486
        %v2535 = vshrl.u32 %v2070, 16
        %v2537 = vrot.slane %v2535, 3
        %v2538 = vshll.u32 %v2070, 16
        %v2540 = vrot.slane %v2538, 4
        %v2541 = vor.u32 %v2537, %v2540
        %v2542 = vsel %vm2351, %v2452, %v2541
        %v2544 = vshrl.u32 %v2119, 16
        %v2546 = vrot.slane %v2544, 3
        %v2547 = vshll.u32 %v2119, 16
        %v2549 = vrot.slane %v2547, 4
        %v2550 = vor.u32 %v2546, %v2549
        %v2551 = vsel %vm2351, %v2469, %v2550
        %v2553 = vshrl.u32 %v1877, 16
        %v2555 = vrot.slane %v2553, 3
        %v2556 = vshll.u32 %v1877, 16
        %v2558 = vrot.slane %v2556, 4
        %v2559 = vor.u32 %v2555, %v2558
        %v2560 = vsel %vm2351, %v2486, %v2559
        %v2562 = vshrl.u32 %v2187, 16
        %v2564 = vrot.slane %v2562, 3
        %v2565 = vshll.u32 %v2187, 16
        %v2567 = vrot.slane %v2565, 4
        %v2568 = vor.u32 %v2564, %v2567
        %v2569 = vsel %vm2351, %v2503, %v2568
        %v2571 = vshrl.u32 %v1788, 16
        %v2573 = vrot.slane %v2571, 3
        %v2574 = vshll.u32 %v1788, 16
        %v2576 = vrot.slane %v2574, 4
        %v2577 = vor.u32 %v2573, %v2576
        %v2578 = vsel %vm2351, %v2512, %v2577
        %v2580 = vshrl.u32 %v1955, 16
        %v2582 = vrot.slane %v2580, 3
        %v2583 = vshll.u32 %v1955, 16
        %v2585 = vrot.slane %v2583, 4
        %v2586 = vor.u32 %v2582, %v2585
        %v2587 = vsel %vm2351, %v2522, %v2586
        %v2589 = vshrl.u32 %v2003, 16
        %v2591 = vrot.slane %v2589, 3
        %v2592 = vshll.u32 %v2003, 16
        %v2594 = vrot.slane %v2592, 4
        %v2595 = vor.u32 %v2591, %v2594
        %v2596 = vsel %vm2351, %v2531, %v2595
        %v2598 = vshrl.u32 %v2072, 16
        %v2600 = vrot.slane %v2598, 3
        %v2601 = vshll.u32 %v2072, 16
        %v2603 = vrot.slane %v2601, 4
        %v2604 = vor.u32 %v2600, %v2603
        %v2605 = vsel %vm2351, %v2541, %v2604
        %v2607 = vshrl.u32 %v2120, 16
        %v2609 = vrot.slane %v2607, 3
        %v2610 = vshll.u32 %v2120, 16
        %v2612 = vrot.slane %v2610, 4
        %v2613 = vor.u32 %v2609, %v2612
        %v2614 = vsel %vm2351, %v2550, %v2613
        %v2616 = vshrl.u32 %v1886, 16
        %v2618 = vrot.slane %v2616, 3
        %v2619 = vshll.u32 %v1886, 16
        %v2621 = vrot.slane %v2619, 4
        %v2622 = vor.u32 %v2618, %v2621
        %v2623 = vsel %vm2351, %v2559, %v2622
        %v2625 = vshrl.u32 %v2189, 16
        %v2627 = vrot.slane %v2625, 3
        %v2628 = vshll.u32 %v2189, 16
        %v2630 = vrot.slane %v2628, 4
        %v2631 = vor.u32 %v2627, %v2630
        %v2632 = vsel %vm2351, %v2568, %v2631
        %v2634 = vshrl.u32 %v1789, 16
        %v2636 = vrot.slane %v2634, 3
        %v2637 = vshll.u32 %v1789, 16
        %v2639 = vrot.slane %v2637, 4
        %v2640 = vor.u32 %v2636, %v2639
        %v2641 = vsel %vm2351, %v2577, %v2640
        %v2643 = vshrl.u32 %v1957, 16
        %v2645 = vrot.slane %v2643, 3
        %v2646 = vshll.u32 %v1957, 16
        %v2648 = vrot.slane %v2646, 4
        %v2649 = vor.u32 %v2645, %v2648
        %v2650 = vsel %vm2351, %v2586, %v2649
        %v2652 = vshrl.u32 %v2004, 16
        %v2654 = vrot.slane %v2652, 3
        %v2655 = vshll.u32 %v2004, 16
        %v2657 = vrot.slane %v2655, 4
        %v2658 = vor.u32 %v2654, %v2657
        %v2659 = vsel %vm2351, %v2595, %v2658
        %v2661 = vshrl.u32 %v2074, 16
        %v2663 = vrot.slane %v2661, 3
        %v2664 = vshll.u32 %v2074, 16
        %v2666 = vrot.slane %v2664, 4
        %v2667 = vor.u32 %v2663, %v2666
        %v2668 = vsel %vm2351, %v2604, %v2667
        %v2670 = vshrl.u32 %v2121, 16
        %v2672 = vrot.slane %v2670, 3
        %v2673 = vshll.u32 %v2121, 16
        %v2675 = vrot.slane %v2673, 4
        %v2676 = vor.u32 %v2672, %v2675
        %v2677 = vsel %vm2351, %v2613, %v2676
        %v2679 = vshrl.u32 %v1895, 16
        %v2681 = vrot.slane %v2679, 3
        %v2682 = vshll.u32 %v1895, 16
        %v2684 = vrot.slane %v2682, 4
        %v2685 = vor.u32 %v2681, %v2684
        %v2686 = vsel %vm2351, %v2622, %v2685
        %v2688 = vshrl.u32 %v2191, 16
        %v2690 = vrot.slane %v2688, 3
        %v2691 = vshll.u32 %v2191, 16
        %v2693 = vrot.slane %v2691, 4
        %v2694 = vor.u32 %v2690, %v2693
        %v2695 = vsel %vm2351, %v2631, %v2694
        %v2697 = vshrl.u32 %v1790, 16
        %v2699 = vrot.slane %v2697, 3
        %v2700 = vshll.u32 %v1790, 16
        %v2702 = vrot.slane %v2700, 4
        %v2703 = vor.u32 %v2699, %v2702
        %v2704 = vsel %vm2351, %v2640, %v2703
        %v2706 = vshrl.u32 %v1959, 16
        %v2708 = vrot.slane %v2706, 3
        %v2709 = vshll.u32 %v1959, 16
        %v2711 = vrot.slane %v2709, 4
        %v2712 = vor.u32 %v2708, %v2711
        %v2713 = vsel %vm2351, %v2649, %v2712
        %v2715 = vshrl.u32 %v2005, 16
        %v2717 = vrot.slane %v2715, 3
        %v2718 = vshll.u32 %v2005, 16
        %v2720 = vrot.slane %v2718, 4
        %v2721 = vor.u32 %v2717, %v2720
        %v2722 = vsel %vm2351, %v2658, %v2721
        %v2724 = vshrl.u32 %v2076, 16
        %v2726 = vrot.slane %v2724, 3
        %v2727 = vshll.u32 %v2076, 16
        %v2729 = vrot.slane %v2727, 4
        %v2730 = vor.u32 %v2726, %v2729
        %v2731 = vsel %vm2351, %v2667, %v2730
        %v2733 = vshrl.u32 %v2122, 16
        %v2735 = vrot.slane %v2733, 3
        %v2736 = vshll.u32 %v2122, 16
        %v2738 = vrot.slane %v2736, 4
        %v2739 = vor.u32 %v2735, %v2738
        %v2740 = vsel %vm2351, %v2676, %v2739
        %v2742 = vshrl.u32 %v1904, 16
        %v2744 = vrot.slane %v2742, 3
        %v2745 = vshll.u32 %v1904, 16
        %v2747 = vrot.slane %v2745, 4
        %v2748 = vor.u32 %v2744, %v2747
        %v2749 = vsel %vm2351, %v2685, %v2748
        %v2751 = vshrl.u32 %v2193, 16
        %v2753 = vrot.slane %v2751, 3
        %v2754 = vshll.u32 %v2193, 16
        %v2756 = vrot.slane %v2754, 4
        %v2757 = vor.u32 %v2753, %v2756
        %v2758 = vsel %vm2351, %v2694, %v2757
        %v2760 = vshrl.u32 %v1791, 16
        %v2762 = vrot.slane %v2760, 3
        %v2763 = vshll.u32 %v1791, 16
        %v2765 = vrot.slane %v2763, 4
        %v2766 = vor.u32 %v2762, %v2765
        %v2767 = vsel %vm2351, %v2703, %v2766
        %v2769 = vshrl.u32 %v1961, 16
        %v2771 = vrot.slane %v2769, 3
        %v2772 = vshll.u32 %v1961, 16
        %v2774 = vrot.slane %v2772, 4
        %v2775 = vor.u32 %v2771, %v2774
        %v2776 = vsel %vm2351, %v2712, %v2775
        %v2778 = vshrl.u32 %v2006, 16
        %v2780 = vrot.slane %v2778, 3
        %v2781 = vshll.u32 %v2006, 16
        %v2783 = vrot.slane %v2781, 4
        %v2784 = vor.u32 %v2780, %v2783
        %v2785 = vsel %vm2351, %v2721, %v2784
        %v2787 = vshrl.u32 %v2078, 16
        %v2789 = vrot.slane %v2787, 3
        %v2790 = vshll.u32 %v2078, 16
        %v2792 = vrot.slane %v2790, 4
        %v2793 = vor.u32 %v2789, %v2792
        %v2794 = vsel %vm2351, %v2730, %v2793
        %v2796 = vshrl.u32 %v2123, 16
        %v2798 = vrot.slane %v2796, 3
        %v2799 = vshll.u32 %v2123, 16
        %v2801 = vrot.slane %v2799, 4
        %v2802 = vor.u32 %v2798, %v2801
        %v2803 = vsel %vm2351, %v2739, %v2802
        %v2805 = vshrl.u32 %v2022, 16
        %v2807 = vrot.slane %v2805, 3
        %v2808 = vshll.u32 %v2022, 16
        %v2810 = vrot.slane %v2808, 4
        %v2811 = vor.u32 %v2807, %v2810
        %v2812 = vsel %vm2351, %v2748, %v2811
        %v2814 = vshrl.u32 %v2195, 16
        %v2816 = vrot.slane %v2814, 3
        %v2817 = vshll.u32 %v2195, 16
        %v2819 = vrot.slane %v2817, 4
        %v2820 = vor.u32 %v2816, %v2819
        %v2821 = vsel %vm2351, %v2757, %v2820
        %v2823 = vshrl.u32 %v1792, 16
        %v2825 = vrot.slane %v2823, 3
        %v2826 = vshll.u32 %v1792, 16
        %v2828 = vrot.slane %v2826, 4
        %v2829 = vor.u32 %v2825, %v2828
        %v2830 = vsel %vm2351, %v2766, %v2829
        %v2832 = vshrl.u32 %v1963, 16
        %v2834 = vrot.slane %v2832, 3
        %v2835 = vshll.u32 %v1963, 16
        %v2837 = vrot.slane %v2835, 4
        %v2838 = vor.u32 %v2834, %v2837
        %v2839 = vsel %vm2351, %v2775, %v2838
        %v2841 = vshrl.u32 %v2007, 16
        %v2843 = vrot.slane %v2841, 3
        %v2844 = vshll.u32 %v2007, 16
        %v2846 = vrot.slane %v2844, 4
        %v2847 = vor.u32 %v2843, %v2846
        %v2848 = vsel %vm2351, %v2784, %v2847
        %v2850 = vshrl.u32 %v2080, 16
        %v2852 = vrot.slane %v2850, 3
        %v2853 = vshll.u32 %v2080, 16
        %v2855 = vrot.slane %v2853, 4
        %v2856 = vor.u32 %v2852, %v2855
        %v2857 = vsel %vm2351, %v2793, %v2856
        %v2859 = vshrl.u32 %v2124, 16
        %v2861 = vrot.slane %v2859, 3
        %v2862 = vshll.u32 %v2124, 16
        %v2864 = vrot.slane %v2862, 4
        %v2865 = vor.u32 %v2861, %v2864
        %v2866 = vsel %vm2351, %v2802, %v2865
        %v2868 = vshrl.u32 %v2139, 16
        %v2870 = vrot.slane %v2868, 3
        %v2871 = vshll.u32 %v2139, 16
        %v2873 = vrot.slane %v2871, 4
        %v2874 = vor.u32 %v2870, %v2873
        %v2875 = vsel %vm2351, %v2811, %v2874
        %v2877 = vshrl.u32 %v2197, 16
        %v2879 = vrot.slane %v2877, 3
        %v2880 = vshll.u32 %v2197, 16
        %v2882 = vrot.slane %v2880, 4
        %v2883 = vor.u32 %v2879, %v2882
        %v2884 = vsel %vm2351, %v2820, %v2883
        %v2886 = vshrl.u32 %v1793, 16
        %v2888 = vrot.slane %v2886, 3
        %v2889 = vshll.u32 %v1793, 16
        %v2891 = vrot.slane %v2889, 4
        %v2892 = vor.u32 %v2888, %v2891
        %v2893 = vsel %vm2351, %v2829, %v2892
        %v2895 = vshrl.u32 %v1903, 16
        %v2897 = vrot.slane %v2895, 3
        %v2898 = vshll.u32 %v1903, 16
        %v2900 = vrot.slane %v2898, 4
        %v2901 = vor.u32 %v2897, %v2900
        %v2902 = vsel %vm2351, %v2748, %v2901
        %v2904 = vshrl.u32 %v1965, 16
        %v2906 = vrot.slane %v2904, 3
        %v2907 = vshll.u32 %v1965, 16
        %v2909 = vrot.slane %v2907, 4
        %v2910 = vor.u32 %v2906, %v2909
        %v2911 = vsel %vm2351, %v2838, %v2910
        %v2913 = vshrl.u32 %v2008, 16
        %v2915 = vrot.slane %v2913, 3
        %v2916 = vshll.u32 %v2008, 16
        %v2918 = vrot.slane %v2916, 4
        %v2919 = vor.u32 %v2915, %v2918
        %v2920 = vsel %vm2351, %v2847, %v2919
        %v2922 = vshrl.u32 %v2021, 16
        %v2924 = vrot.slane %v2922, 3
        %v2925 = vshll.u32 %v2021, 16
        %v2927 = vrot.slane %v2925, 4
        %v2928 = vor.u32 %v2924, %v2927
        %v2929 = vsel %vm2351, %v2811, %v2928
        %v2931 = vshrl.u32 %v2082, 16
        %v2933 = vrot.slane %v2931, 3
        %v2934 = vshll.u32 %v2082, 16
        %v2936 = vrot.slane %v2934, 4
        %v2937 = vor.u32 %v2933, %v2936
        %v2938 = vsel %vm2351, %v2856, %v2937
        %v2940 = vshrl.u32 %v2125, 16
        %v2942 = vrot.slane %v2940, 3
        %v2943 = vshll.u32 %v2125, 16
        %v2945 = vrot.slane %v2943, 4
        %v2946 = vor.u32 %v2942, %v2945
        %v2947 = vsel %vm2351, %v2865, %v2946
        %v2949 = vshrl.u32 %v2138, 16
        %v2951 = vrot.slane %v2949, 3
        %v2952 = vshll.u32 %v2138, 16
        %v2954 = vrot.slane %v2952, 4
        %v2955 = vor.u32 %v2951, %v2954
        %v2956 = vsel %vm2351, %v2874, %v2955
        %v2958 = vshrl.u32 %v2199, 16
        %v2960 = vrot.slane %v2958, 3
        %v2961 = vshll.u32 %v2199, 16
        %v2963 = vrot.slane %v2961, 4
        %v2964 = vor.u32 %v2960, %v2963
        %v2965 = vsel %vm2351, %v2883, %v2964
        %v3172 = vunpack.c.l.b16 %v2200
        %v3173 = vunpack.c.l.b16 %v2201
        %v3174 = vunpack.c.l.b16 %v2202
        %v3175 = vunpack.c.l.b16 %v2203
        %v3176 = vunpack.c.l.b16 %v2204
        %v3177 = vunpack.c.l.b16 %v2205
        %v3178 = vunpack.c.l.b16 %v2206
        %v3179 = vunpack.c.l.b16 %v2207
        %v3180 = vunpack.c.l.b16 %v2208
        %v3181 = vunpack.c.l.b16 %v2209
        %v3182 = vunpack.c.l.b16 %v2210
        %v3183 = vunpack.c.l.b16 %v2211
        %v3184 = vunpack.c.l.b16 %v2212
        %v3185 = vunpack.c.l.b16 %v2213
        %v3186 = vunpack.c.l.b16 %v2214
        %v3187 = vunpack.c.l.b16 %v2215
        %v3188 = vunpack.c.l.b16 %v2216
        %v3189 = vunpack.c.l.b16 %v2217
        %v3190 = vunpack.c.l.b16 %v2218
        %v3191 = vunpack.c.l.b16 %v2219
        %v3192 = vunpack.c.l.b16 %v2220
        %v3193 = vunpack.c.l.b16 %v2221
        %v3194 = vunpack.c.l.b16 %v2222
        %v3195 = vunpack.c.l.b16 %v2223
        %v3196 = vunpack.c.l.b16 %v2224
        %v3197 = vunpack.c.l.b16 %v2225
        %v3198 = vunpack.c.l.b16 %v2226
        %v3199 = vunpack.c.l.b16 %v2227
        %v3200 = vunpack.c.l.b16 %v2228
        %v3201 = vunpack.c.l.b16 %v2229
        %v3202 = vunpack.c.l.b16 %v2230
        %v3203 = vunpack.c.l.b16 %v2231
        %v3204 = vunpack.c.l.b16 %v2232
        %v3205 = vunpack.c.l.b16 %v2233
        %v3206 = vunpack.c.l.b16 %v2234
        %v3207 = vunpack.c.l.b16 %v2235
        %v3208 = vunpack.c.l.b16 %v2236
        %v3209 = vunpack.c.l.b16 %v2237
        %v3210 = vunpack.c.l.b16 %v2238
        %v3211 = vunpack.c.l.b16 %v2239
        %v3212 = vunpack.c.l.b16 %v2240
        %v3213 = vunpack.c.l.b16 %v2241
        %v3214 = vunpack.c.l.b16 %v2242
        %v3215 = vunpack.c.l.b16 %v2243
        %v3216 = vunpack.c.l.b16 %v2244
        %v3217 = vunpack.c.l.b16 %v2245
        %v3218 = vunpack.c.l.b16 %v2246
        %v3219 = vunpack.c.l.b16 %v2247
        %v3220 = vunpack.c.l.b16 %v2248
        %v3221 = vunpack.c.l.b16 %v2249
        %v3222 = vunpack.c.l.b16 %v2250
        %v3223 = vunpack.c.l.b16 %v2251
        %v3224 = vunpack.c.l.b16 %v2252
        %v3225 = vunpack.c.l.b16 %v2253
        %v3226 = vunpack.c.l.b16 %v2254
        %v3227 = vunpack.c.l.b16 %v2255
        %v3228 = vunpack.c.l.b16 %v2256
        %v3229 = vunpack.c.l.b16 %v2257
        %v3230 = vunpack.c.l.b16 %v2258
        %v3231 = vunpack.c.l.b16 %v2259
        %v3232 = vunpack.c.l.b16 %v2260
        %v3233 = vunpack.c.l.b16 %v2261
        %v3234 = vunpack.c.l.b16 %v2262
        %v3235 = vunpack.c.l.b16 %v2263
        %v3236 = vunpack.c.l.b16 %v2264
        %v3237 = vunpack.c.l.b16 %v2265
        %v3238 = vunpack.c.l.b16 %v2266
        %v3239 = vunpack.c.l.b16 %v2267
        %v3240 = vunpack.c.l.b16 %v2268
        %v3241 = vunpack.c.l.b16 %v2269
        %v3242 = vunpack.c.l.b16 %v2270
        %v3243 = vunpack.c.l.b16 %v2271
        %v3244 = vunpack.c.l.b16 %v2272
        %v3245 = vunpack.c.l.b16 %v2273
        %v3246 = vunpack.c.l.b16 %v2274
        %v3247 = vunpack.c.l.b16 %v2275
        %v3248 = vunpack.c.l.b16 %v2276
        %v3249 = vunpack.c.l.b16 %v2277
        %v3250 = vunpack.c.l.b16 %v2278
        %v3251 = vunpack.c.l.b16 %v2279
        %v3252 = vunpack.c.l.b16 %v2280
        %v3253 = vunpack.c.l.b16 %v2281
        %v3254 = vunpack.c.l.b16 %v2282
        %v3255 = vunpack.c.l.b16 %v2283
        %v3256 = vunpack.c.l.b16 %v2284
        %v3257 = vunpack.c.l.b16 %v2285
        %v3258 = vunpack.c.l.b16 %v2286
        %v3259 = vunpack.c.l.b16 %v2287
        %v3260 = vunpack.c.l.b16 %v2288
        %v3261 = vunpack.c.l.b16 %v2289
        %v3262 = vunpack.c.l.b16 %v2290
        %v3263 = vunpack.c.l.b16 %v2291
        %v3264 = vunpack.c.l.b16 %v2292
        %v3265 = vunpack.c.l.b16 %v2293
        %v3266 = vunpack.c.l.b16 %v2294
        %v3267 = vunpack.c.l.b16 %v2295
        %v3268 = vunpack.c.l.b16 %v2296
        %v3269 = vunpack.c.l.b16 %v2297
        %v3270 = vunpack.c.l.b16 %v2298
        %v3271 = vunpack.c.l.b16 %v2299
        %v3272 = vunpack.c.l.b16 %v2300
        %v3273 = vunpack.c.l.b16 %v2301
        %v3274 = vunpack.c.l.b16 %v2302
        %v3275 = vunpack.c.l.b16 %v2303
        %v3276 = vunpack.c.l.b16 %v2304
        %v3277 = vunpack.c.l.b16 %v2305
        %v3278 = vunpack.c.l.b16 %v2306
        %v3279 = vunpack.c.l.b16 %v2307
        %v3280 = vunpack.c.l.b16 %v2308
        %v3281 = vunpack.c.l.b16 %v2309
        %v3282 = vunpack.c.l.b16 %v2310
        %v3283 = vunpack.c.l.b16 %v2311
        %v3284 = vunpack.c.l.b16 %v2312
        %v3285 = vunpack.c.l.b16 %v2313
        %v3286 = vunpack.c.l.b16 %v2314
        %v3287 = vunpack.c.l.b16 %v2315
        %v3288 = vunpack.c.l.b16 %v2316
        %v3289 = vunpack.c.l.b16 %v2317
        %v3290 = vunpack.c.l.b16 %v2318
        %v3291 = vunpack.c.l.b16 %v2319
        %v3292 = vunpack.c.l.b16 %v2320
        %v3293 = vunpack.c.l.b16 %v2321
        %v3294 = vunpack.c.l.b16 %v2322
        %v3295 = vunpack.c.l.b16 %v2323
        %v3296 = vunpack.c.l.b16 %v2324
        %v3297 = vunpack.c.l.b16 %v2325
        %v3298 = vunpack.c.l.b16 %v2326
        %v3299 = vunpack.c.l.b16 %v2327
        %v3300 = vunpack.c.l.b16 %v2328
        %v3301 = vunpack.c.l.b16 %v2329
        %v3302 = vunpack.c.l.b16 %v2330
        %v3303 = vunpack.c.l.b16 %v2331
        %v3304 = vunpack.c.l.b16 %v2332
        %v3305 = vunpack.c.l.b16 %v2333
        %v3306 = vunpack.c.l.b16 %v2334
        %v3307 = vunpack.c.l.b16 %v2335
        %v3308 = vunpack.c.l.b16 %v2336
        %v3309 = vunpack.c.l.b16 %v2337
        %v3310 = vunpack.c.l.b16 %v2338
        %v3311 = vunpack.c.l.b16 %v2339
        %v3312 = vunpack.c.l.b16 %v2340
        %v3313 = vunpack.c.l.b16 %v2341
        %v3314 = vunpack.c.l.b16 %v2342
        %v3315 = vunpack.c.l.b16 %v2343
        %v3316 = vpack.c.b16 %v3173, %v3172
        %v3317 = vpack.c.b16 %v3175, %v3174
        %v3318 = vpack.c.b16 %v3177, %v3176
        %v3319 = vpack.c.b16 %v3179, %v3178
        %v3320 = vpack.c.b16 %v3181, %v3180
        %v3321 = vpack.c.b16 %v3183, %v3182
        %v3322 = vpack.c.b16 %v3185, %v3184
        %v3323 = vpack.c.b16 %v3187, %v3186
        %v3324 = vpack.c.b16 %v3189, %v3188
        %v3325 = vpack.c.b16 %v3191, %v3190
        %v3326 = vpack.c.b16 %v3193, %v3192
        %v3327 = vpack.c.b16 %v3195, %v3194
        %v3328 = vpack.c.b16 %v3197, %v3196
        %v3329 = vpack.c.b16 %v3199, %v3198
        %v3330 = vpack.c.b16 %v3201, %v3200
        %v3331 = vpack.c.b16 %v3203, %v3202
        %v3332 = vpack.c.b16 %v3205, %v3204
        %v3333 = vpack.c.b16 %v3207, %v3206
        %v3334 = vpack.c.b16 %v3209, %v3208
        %v3335 = vpack.c.b16 %v3211, %v3210
        %v3336 = vpack.c.b16 %v3213, %v3212
        %v3337 = vpack.c.b16 %v3215, %v3214
        %v3338 = vpack.c.b16 %v3217, %v3216
        %v3339 = vpack.c.b16 %v3219, %v3218
        %v3340 = vpack.c.b16 %v3221, %v3220
        %v3341 = vpack.c.b16 %v3223, %v3222
        %v3342 = vpack.c.b16 %v3225, %v3224
        %v3343 = vpack.c.b16 %v3227, %v3226
        %v3344 = vpack.c.b16 %v3229, %v3228
        %v3345 = vpack.c.b16 %v3231, %v3230
        %v3346 = vpack.c.b16 %v3233, %v3232
        %v3347 = vpack.c.b16 %v3235, %v3234
        %v3348 = vpack.c.b16 %v3237, %v3236
        %v3349 = vpack.c.b16 %v3239, %v3238
        %v3350 = vpack.c.b16 %v3241, %v3240
        %v3351 = vpack.c.b16 %v3243, %v3242
        %v3352 = vpack.c.b16 %v3245, %v3244
        %v3353 = vpack.c.b16 %v3247, %v3246
        %v3354 = vpack.c.b16 %v3249, %v3248
        %v3355 = vpack.c.b16 %v3251, %v3250
        %v3356 = vpack.c.b16 %v3253, %v3252
        %v3357 = vpack.c.b16 %v3255, %v3254
        %v3358 = vpack.c.b16 %v3257, %v3256
        %v3359 = vpack.c.b16 %v3259, %v3258
        %v3360 = vpack.c.b16 %v3261, %v3260
        %v3361 = vpack.c.b16 %v3263, %v3262
        %v3362 = vpack.c.b16 %v3265, %v3264
        %v3363 = vpack.c.b16 %v3267, %v3266
        %v3364 = vpack.c.b16 %v3269, %v3268
        %v3365 = vpack.c.b16 %v3271, %v3270
        %v3366 = vpack.c.b16 %v3273, %v3272
        %v3367 = vpack.c.b16 %v3275, %v3274
        %v3368 = vpack.c.b16 %v3277, %v3276
        %v3369 = vpack.c.b16 %v3279, %v3278
        %v3370 = vpack.c.b16 %v3281, %v3280
        %v3371 = vpack.c.b16 %v3283, %v3282
        %v3372 = vpack.c.b16 %v3285, %v3284
        %v3373 = vpack.c.b16 %v3287, %v3286
        %v3374 = vpack.c.b16 %v3289, %v3288
        %v3375 = vpack.c.b16 %v3291, %v3290
        %v3376 = vpack.c.b16 %v3293, %v3292
        %v3377 = vpack.c.b16 %v3295, %v3294
        %v3378 = vpack.c.b16 %v3297, %v3296
        %v3379 = vpack.c.b16 %v3299, %v3298
        %v3380 = vpack.c.b16 %v3301, %v3300
        %v3381 = vpack.c.b16 %v3303, %v3302
        %v3382 = vpack.c.b16 %v3305, %v3304
        %v3383 = vpack.c.b16 %v3307, %v3306
        %v3384 = vpack.c.b16 %v3309, %v3308
        %v3385 = vpack.c.b16 %v3311, %v3310
        %v3386 = vpack.c.b16 %v3313, %v3312
        %v3387 = vpack.c.b16 %v3315, %v3314
        %3460 = vmatprep.subr.bf16.mxu0 0
        %3461 = vmatpush1.bf16.msra.mxu0 %v3323
        %3462 = vmatprep.subr.bf16.mxu0 0
        %3463 = vmatpush1.bf16.msra.mxu0 %v3322
        %3464 = vmatprep.subr.bf16.mxu0 0
        %3465 = vmatpush1.bf16.msra.mxu0 %v3321
        %3466 = vmatprep.subr.bf16.mxu0 0
        %3467 = vmatpush1.bf16.msra.mxu0 %v3320
        %3468 = vmatprep.subr.bf16.mxu0 0
        %3469 = vmatpush1.bf16.msra.mxu0 %v3319
        %3470 = vmatprep.subr.bf16.mxu0 0
        %3471 = vmatpush1.bf16.msra.mxu0 %v3318
        %3472 = vmatprep.subr.bf16.mxu0 0
        %3473 = vmatpush1.bf16.msra.mxu0 %v3317
        %3474 = vmatprep.subr.bf16.mxu0 0
        %3475 = vmatpush1.bf16.msra.mxu0 %v3316
        %3476 = vmatprep.subr.bf16.mxu0 0
        %3477 = vmatpush2.bf16.msra.mxu0 %v3331
        %3478 = vmatprep.subr.bf16.mxu0 0
        %3479 = vmatpush2.bf16.msra.mxu0 %v3330
        %3480 = vmatprep.subr.bf16.mxu0 0
        %3481 = vmatpush2.bf16.msra.mxu0 %v3329
        %3482 = vmatprep.subr.bf16.mxu0 0
        %3483 = vmatpush2.bf16.msra.mxu0 %v3328
        %3484 = vmatprep.subr.bf16.mxu0 0
        %3485 = vmatpush2.bf16.msra.mxu0 %v3327
        %3486 = vmatprep.subr.bf16.mxu0 0
        %3487 = vmatpush2.bf16.msra.mxu0 %v3326
        %3488 = vmatprep.subr.bf16.mxu0 0
        %3489 = vmatpush2.bf16.msra.mxu0 %v3325
        %3490 = vmatprep.subr.bf16.mxu0 0
        %3491 = vmatpush2.bf16.msra.mxu0 %v3324
        %3492 = vmatprep.mubr.bf16.mxu0 %v2385
        %3493 = vmatmul.mubr.bf16.gmra.mxu0 %v2368
        %v3494 = vpop.f32.mrf.mxu0
        %v3495 = vadd.f32 %v2349, %v3494
        %v3496 = vpop.f32.mrf.mxu0
        %v3497 = vpop.f32.mrf.mxu0
        %v3498 = vadd.f32 %v2349, %v3497
        %v3499 = vpop.f32.mrf.mxu0
        %3500 = vmatprep.mubr.bf16.mxu0 %v2514
        %3501 = vmatmul.mubr.bf16.gmra.mxu0 %v2513
        %v3502 = vpop.f32.mrf.mxu0
        %v3503 = vadd.f32 %v2349, %v3502
        %v3504 = vpop.f32.mrf.mxu0
        %v3505 = vpop.f32.mrf.mxu0
        %v3506 = vadd.f32 %v2349, %v3505
        %v3507 = vpop.f32.mrf.mxu0
        %3508 = vmatprep.mubr.bf16.mxu0 %v2533
        %3509 = vmatmul.mubr.bf16.gmra.mxu0 %v2578
        %v3510 = vpop.f32.mrf.mxu0
        %v3511 = vadd.f32 %v2349, %v3510
        %v3512 = vpop.f32.mrf.mxu0
        %v3513 = vpop.f32.mrf.mxu0
        %v3514 = vadd.f32 %v2349, %v3513
        %v3515 = vpop.f32.mrf.mxu0
        %3516 = vmatprep.mubr.bf16.mxu0 %v2560
        %3517 = vmatmul.mubr.bf16.gmra.mxu0 %v2641
        %v3518 = vpop.f32.mrf.mxu0
        %v3519 = vadd.f32 %v2349, %v3518
        %v3520 = vpop.f32.mrf.mxu0
        %v3521 = vpop.f32.mrf.mxu0
        %v3522 = vadd.f32 %v2349, %v3521
        %v3523 = vpop.f32.mrf.mxu0
        %3524 = vmatprep.mubr.bf16.mxu0 %v2623
        %3525 = vmatmul.mubr.bf16.gmra.mxu0 %v2704
        %v3526 = vpop.f32.mrf.mxu0
        %v3527 = vadd.f32 %v2349, %v3526
        %v3528 = vpop.f32.mrf.mxu0
        %v3529 = vpop.f32.mrf.mxu0
        %v3530 = vadd.f32 %v2349, %v3529
        %v3531 = vpop.f32.mrf.mxu0
        %3532 = vmatprep.mubr.bf16.mxu0 %v2686
        %3533 = vmatmul.mubr.bf16.gmra.mxu0 %v2767
        %v3534 = vpop.f32.mrf.mxu0
        %v3535 = vadd.f32 %v2349, %v3534
        %v3536 = vpop.f32.mrf.mxu0
        %v3537 = vpop.f32.mrf.mxu0
        %v3538 = vadd.f32 %v2349, %v3537
        %v3539 = vpop.f32.mrf.mxu0
        %3540 = vmatprep.mubr.bf16.mxu0 %v2749
        %3541 = vmatmul.mubr.bf16.gmra.mxu0 %v2830
        %v3542 = vpop.f32.mrf.mxu0
        %v3543 = vadd.f32 %v2349, %v3542
        %v3544 = vpop.f32.mrf.mxu0
        %v3545 = vpop.f32.mrf.mxu0
        %v3546 = vadd.f32 %v2349, %v3545
        %v3547 = vpop.f32.mrf.mxu0
        %3548 = vmatprep.mubr.bf16.mxu0 %v2902
        %3549 = vmatmul.mubr.bf16.gmra.mxu0 %v2893
        %v3550 = vpop.f32.mrf.mxu0
        %v3551 = vadd.f32 %v2349, %v3550
        %v3552 = vpop.f32.mrf.mxu0
        %v3553 = vpop.f32.mrf.mxu0
        %v3554 = vadd.f32 %v2349, %v3553
        %v3555 = vpop.f32.mrf.mxu0
        %3556 = vdwg.mxu0
        %3557 = vmatprep.subr.bf16.mxu0 0
        %3558 = vmatpush1.bf16.msra.mxu0 %v3339
        %3559 = vmatprep.subr.bf16.mxu0 0
        %3560 = vmatpush1.bf16.msra.mxu0 %v3338
        %3561 = vmatprep.subr.bf16.mxu0 0
        %3562 = vmatpush1.bf16.msra.mxu0 %v3337
        %3563 = vmatprep.subr.bf16.mxu0 0
        %3564 = vmatpush1.bf16.msra.mxu0 %v3336
        %3565 = vmatprep.subr.bf16.mxu0 0
        %3566 = vmatpush1.bf16.msra.mxu0 %v3335
        %3567 = vmatprep.subr.bf16.mxu0 0
        %3568 = vmatpush1.bf16.msra.mxu0 %v3334
        %3569 = vmatprep.subr.bf16.mxu0 0
        %3570 = vmatpush1.bf16.msra.mxu0 %v3333
        %3571 = vmatprep.subr.bf16.mxu0 0
        %3572 = vmatpush1.bf16.msra.mxu0 %v3332
        %3573 = vmatprep.subr.bf16.mxu0 0
        %3574 = vmatpush2.bf16.msra.mxu0 %v3347
        %3575 = vmatprep.subr.bf16.mxu0 0
        %3576 = vmatpush2.bf16.msra.mxu0 %v3346
        %3577 = vmatprep.subr.bf16.mxu0 0
        %3578 = vmatpush2.bf16.msra.mxu0 %v3345
        %3579 = vmatprep.subr.bf16.mxu0 0
        %3580 = vmatpush2.bf16.msra.mxu0 %v3344
        %3581 = vmatprep.subr.bf16.mxu0 0
        %3582 = vmatpush2.bf16.msra.mxu0 %v3343
        %3583 = vmatprep.subr.bf16.mxu0 0
        %3584 = vmatpush2.bf16.msra.mxu0 %v3342
        %3585 = vmatprep.subr.bf16.mxu0 0
        %3586 = vmatpush2.bf16.msra.mxu0 %v3341
        %3587 = vmatprep.subr.bf16.mxu0 0
        %3588 = vmatpush2.bf16.msra.mxu0 %v3340
        %3589 = vmatprep.mubr.bf16.mxu0 %v2419
        %3590 = vmatmul.mubr.bf16.gmra.mxu0 %v2402
        %v3591 = vpop.f32.mrf.mxu0
        %v3592 = vadd.f32 %v3495, %v3591
        %v3593 = vpop.f32.mrf.mxu0
        %v3594 = vpop.f32.mrf.mxu0
        %v3595 = vadd.f32 %v3498, %v3594
        %v3596 = vpop.f32.mrf.mxu0
        %3597 = vmatprep.mubr.bf16.mxu0 %v2532
        %3598 = vmatmul.mubr.bf16.gmra.mxu0 %v2523
        %v3599 = vpop.f32.mrf.mxu0
        %v3600 = vadd.f32 %v3503, %v3599
        %v3601 = vpop.f32.mrf.mxu0
        %v3602 = vpop.f32.mrf.mxu0
        %v3603 = vadd.f32 %v3506, %v3602
        %v3604 = vpop.f32.mrf.mxu0
        %3605 = vmatprep.mubr.bf16.mxu0 %v2596
        %3606 = vmatmul.mubr.bf16.gmra.mxu0 %v2587
        %v3607 = vpop.f32.mrf.mxu0
        %v3608 = vadd.f32 %v3511, %v3607
        %v3609 = vpop.f32.mrf.mxu0
        %v3610 = vpop.f32.mrf.mxu0
        %v3611 = vadd.f32 %v3514, %v3610
        %v3612 = vpop.f32.mrf.mxu0
        %3613 = vmatprep.mubr.bf16.mxu0 %v2659
        %3614 = vmatmul.mubr.bf16.gmra.mxu0 %v2650
        %v3615 = vpop.f32.mrf.mxu0
        %v3616 = vadd.f32 %v3519, %v3615
        %v3617 = vpop.f32.mrf.mxu0
        %v3618 = vpop.f32.mrf.mxu0
        %v3619 = vadd.f32 %v3522, %v3618
        %v3620 = vpop.f32.mrf.mxu0
        %3621 = vmatprep.mubr.bf16.mxu0 %v2722
        %3622 = vmatmul.mubr.bf16.gmra.mxu0 %v2713
        %v3623 = vpop.f32.mrf.mxu0
        %v3624 = vadd.f32 %v3527, %v3623
        %v3625 = vpop.f32.mrf.mxu0
        %v3626 = vpop.f32.mrf.mxu0
        %v3627 = vadd.f32 %v3530, %v3626
        %v3628 = vpop.f32.mrf.mxu0
        %3629 = vmatprep.mubr.bf16.mxu0 %v2785
        %3630 = vmatmul.mubr.bf16.gmra.mxu0 %v2776
        %v3631 = vpop.f32.mrf.mxu0
        %v3632 = vadd.f32 %v3535, %v3631
        %v3633 = vpop.f32.mrf.mxu0
        %v3634 = vpop.f32.mrf.mxu0
        %v3635 = vadd.f32 %v3538, %v3634
        %v3636 = vpop.f32.mrf.mxu0
        %3637 = vmatprep.mubr.bf16.mxu0 %v2848
        %3638 = vmatmul.mubr.bf16.gmra.mxu0 %v2839
        %v3639 = vpop.f32.mrf.mxu0
        %v3640 = vadd.f32 %v3543, %v3639
        %v3641 = vpop.f32.mrf.mxu0
        %v3642 = vpop.f32.mrf.mxu0
        %v3643 = vadd.f32 %v3546, %v3642
        %v3644 = vpop.f32.mrf.mxu0
        %3645 = vmatprep.mubr.bf16.mxu0 %v2920
        %3646 = vmatmul.mubr.bf16.gmra.mxu0 %v2911
        %v3647 = vpop.f32.mrf.mxu0
        %v3648 = vadd.f32 %v3551, %v3647
        %v3649 = vpop.f32.mrf.mxu0
        %v3650 = vpop.f32.mrf.mxu0
        %v3651 = vadd.f32 %v3554, %v3650
        %v3652 = vpop.f32.mrf.mxu0
        %3653 = vdwg.mxu0
        %3654 = vmatprep.subr.bf16.mxu0 0
        %3655 = vmatpush1.bf16.msra.mxu0 %v3355
        %3656 = vmatprep.subr.bf16.mxu0 0
        %3657 = vmatpush1.bf16.msra.mxu0 %v3354
        %3658 = vmatprep.subr.bf16.mxu0 0
        %3659 = vmatpush1.bf16.msra.mxu0 %v3353
        %3660 = vmatprep.subr.bf16.mxu0 0
        %3661 = vmatpush1.bf16.msra.mxu0 %v3352
        %3662 = vmatprep.subr.bf16.mxu0 0
        %3663 = vmatpush1.bf16.msra.mxu0 %v3351
        %3664 = vmatprep.subr.bf16.mxu0 0
        %3665 = vmatpush1.bf16.msra.mxu0 %v3350
        %3666 = vmatprep.subr.bf16.mxu0 0
        %3667 = vmatpush1.bf16.msra.mxu0 %v3349
        %3668 = vmatprep.subr.bf16.mxu0 0
        %3669 = vmatpush1.bf16.msra.mxu0 %v3348
        %3670 = vmatprep.subr.bf16.mxu0 0
        %3671 = vmatpush2.bf16.msra.mxu0 %v3363
        %3672 = vmatprep.subr.bf16.mxu0 0
        %3673 = vmatpush2.bf16.msra.mxu0 %v3362
        %3674 = vmatprep.subr.bf16.mxu0 0
        %3675 = vmatpush2.bf16.msra.mxu0 %v3361
        %3676 = vmatprep.subr.bf16.mxu0 0
        %3677 = vmatpush2.bf16.msra.mxu0 %v3360
        %3678 = vmatprep.subr.bf16.mxu0 0
        %3679 = vmatpush2.bf16.msra.mxu0 %v3359
        %3680 = vmatprep.subr.bf16.mxu0 0
        %3681 = vmatpush2.bf16.msra.mxu0 %v3358
        %3682 = vmatprep.subr.bf16.mxu0 0
        %3683 = vmatpush2.bf16.msra.mxu0 %v3357
        %3684 = vmatprep.subr.bf16.mxu0 0
        %3685 = vmatpush2.bf16.msra.mxu0 %v3356
        %3686 = vmatprep.mubr.bf16.mxu0 %v2453
        %3687 = vmatmul.mubr.bf16.gmra.mxu0 %v2436
        %v3688 = vpop.f32.mrf.mxu0
        %v3689 = vadd.f32 %v3592, %v3688
        %v3690 = vpop.f32.mrf.mxu0
        %v3691 = vpop.f32.mrf.mxu0
        %v3692 = vadd.f32 %v3595, %v3691
        %v3693 = vpop.f32.mrf.mxu0
        %3694 = vmatprep.mubr.bf16.mxu0 %v2542
        %3695 = vmatmul.mubr.bf16.gmra.mxu0 %v2533
        %v3696 = vpop.f32.mrf.mxu0
        %v3697 = vadd.f32 %v3600, %v3696
        %v3698 = vpop.f32.mrf.mxu0
        %v3699 = vpop.f32.mrf.mxu0
        %v3700 = vadd.f32 %v3603, %v3699
        %v3701 = vpop.f32.mrf.mxu0
        %3702 = vmatprep.mubr.bf16.mxu0 %v2605
        %3703 = vmatmul.mubr.bf16.gmra.mxu0 %v2560
        %v3704 = vpop.f32.mrf.mxu0
        %v3705 = vadd.f32 %v3608, %v3704
        %v3706 = vpop.f32.mrf.mxu0
        %v3707 = vpop.f32.mrf.mxu0
        %v3708 = vadd.f32 %v3611, %v3707
        %v3709 = vpop.f32.mrf.mxu0
        %3710 = vmatprep.mubr.bf16.mxu0 %v2668
        %3711 = vmatmul.mubr.bf16.gmra.mxu0 %v2623
        %v3712 = vpop.f32.mrf.mxu0
        %v3713 = vadd.f32 %v3616, %v3712
        %v3714 = vpop.f32.mrf.mxu0
        %v3715 = vpop.f32.mrf.mxu0
        %v3716 = vadd.f32 %v3619, %v3715
        %v3717 = vpop.f32.mrf.mxu0
        %3718 = vmatprep.mubr.bf16.mxu0 %v2731
        %3719 = vmatmul.mubr.bf16.gmra.mxu0 %v2686
        %v3720 = vpop.f32.mrf.mxu0
        %v3721 = vadd.f32 %v3624, %v3720
        %v3722 = vpop.f32.mrf.mxu0
        %v3723 = vpop.f32.mrf.mxu0
        %v3724 = vadd.f32 %v3627, %v3723
        %v3725 = vpop.f32.mrf.mxu0
        %3726 = vmatprep.mubr.bf16.mxu0 %v2794
        %3727 = vmatmul.mubr.bf16.gmra.mxu0 %v2749
        %v3728 = vpop.f32.mrf.mxu0
        %v3729 = vadd.f32 %v3632, %v3728
        %v3730 = vpop.f32.mrf.mxu0
        %v3731 = vpop.f32.mrf.mxu0
        %v3732 = vadd.f32 %v3635, %v3731
        %v3733 = vpop.f32.mrf.mxu0
        %3734 = vmatprep.mubr.bf16.mxu0 %v2857
        %3735 = vmatmul.mubr.bf16.gmra.mxu0 %v2812
        %v3736 = vpop.f32.mrf.mxu0
        %v3737 = vadd.f32 %v3640, %v3736
        %v3738 = vpop.f32.mrf.mxu0
        %v3739 = vpop.f32.mrf.mxu0
        %v3740 = vadd.f32 %v3643, %v3739
        %v3741 = vpop.f32.mrf.mxu0
        %3742 = vmatprep.mubr.bf16.mxu0 %v2938
        %3743 = vmatmul.mubr.bf16.gmra.mxu0 %v2929
        %v3744 = vpop.f32.mrf.mxu0
        %v3745 = vadd.f32 %v3648, %v3744
        %v3746 = vpop.f32.mrf.mxu0
        %v3747 = vpop.f32.mrf.mxu0
        %v3748 = vadd.f32 %v3651, %v3747
        %v3749 = vpop.f32.mrf.mxu0
        %3750 = vdwg.mxu0
        %3751 = vmatprep.subr.bf16.mxu0 0
        %3752 = vmatpush1.bf16.msra.mxu0 %v3371
        %3753 = vmatprep.subr.bf16.mxu0 0
        %3754 = vmatpush1.bf16.msra.mxu0 %v3370
        %3755 = vmatprep.subr.bf16.mxu0 0
        %3756 = vmatpush1.bf16.msra.mxu0 %v3369
        %3757 = vmatprep.subr.bf16.mxu0 0
        %3758 = vmatpush1.bf16.msra.mxu0 %v3368
        %3759 = vmatprep.subr.bf16.mxu0 0
        %3760 = vmatpush1.bf16.msra.mxu0 %v3367
        %3761 = vmatprep.subr.bf16.mxu0 0
        %3762 = vmatpush1.bf16.msra.mxu0 %v3366
        %3763 = vmatprep.subr.bf16.mxu0 0
        %3764 = vmatpush1.bf16.msra.mxu0 %v3365
        %3765 = vmatprep.subr.bf16.mxu0 0
        %3766 = vmatpush1.bf16.msra.mxu0 %v3364
        %3767 = vmatprep.subr.bf16.mxu0 0
        %3768 = vmatpush2.bf16.msra.mxu0 %v3379
        %3769 = vmatprep.subr.bf16.mxu0 0
        %3770 = vmatpush2.bf16.msra.mxu0 %v3378
        %3771 = vmatprep.subr.bf16.mxu0 0
        %3772 = vmatpush2.bf16.msra.mxu0 %v3377
        %3773 = vmatprep.subr.bf16.mxu0 0
        %3774 = vmatpush2.bf16.msra.mxu0 %v3376
        %3775 = vmatprep.subr.bf16.mxu0 0
        %3776 = vmatpush2.bf16.msra.mxu0 %v3375
        %3777 = vmatprep.subr.bf16.mxu0 0
        %3778 = vmatpush2.bf16.msra.mxu0 %v3374
        %3779 = vmatprep.subr.bf16.mxu0 0
        %3780 = vmatpush2.bf16.msra.mxu0 %v3373
        %3781 = vmatprep.subr.bf16.mxu0 0
        %3782 = vmatpush2.bf16.msra.mxu0 %v3372
        %3783 = vmatprep.mubr.bf16.mxu0 %v2487
        %3784 = vmatmul.mubr.bf16.gmra.mxu0 %v2470
        %v3785 = vpop.f32.mrf.mxu0
        %v3786 = vadd.f32 %v3689, %v3785
        %v3787 = vpop.f32.mrf.mxu0
        %v3788 = vpop.f32.mrf.mxu0
        %v3789 = vadd.f32 %v3692, %v3788
        %v3790 = vpop.f32.mrf.mxu0
        %3791 = vmatprep.mubr.bf16.mxu0 %v2560
        %3792 = vmatmul.mubr.bf16.gmra.mxu0 %v2551
        %v3793 = vpop.f32.mrf.mxu0
        %v3794 = vadd.f32 %v3697, %v3793
        %v3795 = vpop.f32.mrf.mxu0
        %v3796 = vpop.f32.mrf.mxu0
        %v3797 = vadd.f32 %v3700, %v3796
        %v3798 = vpop.f32.mrf.mxu0
        %3799 = vmatprep.mubr.bf16.mxu0 %v2623
        %3800 = vmatmul.mubr.bf16.gmra.mxu0 %v2614
        %v3801 = vpop.f32.mrf.mxu0
        %v3802 = vadd.f32 %v3705, %v3801
        %v3803 = vpop.f32.mrf.mxu0
        %v3804 = vpop.f32.mrf.mxu0
        %v3805 = vadd.f32 %v3708, %v3804
        %v3806 = vpop.f32.mrf.mxu0
        %3807 = vmatprep.mubr.bf16.mxu0 %v2686
        %3808 = vmatmul.mubr.bf16.gmra.mxu0 %v2677
        %v3809 = vpop.f32.mrf.mxu0
        %v3810 = vadd.f32 %v3713, %v3809
        %v3811 = vpop.f32.mrf.mxu0
        %v3812 = vpop.f32.mrf.mxu0
        %v3813 = vadd.f32 %v3716, %v3812
        %v3814 = vpop.f32.mrf.mxu0
        %3815 = vmatprep.mubr.bf16.mxu0 %v2749
        %3816 = vmatmul.mubr.bf16.gmra.mxu0 %v2740
        %v3817 = vpop.f32.mrf.mxu0
        %v3818 = vadd.f32 %v3721, %v3817
        %v3819 = vpop.f32.mrf.mxu0
        %v3820 = vpop.f32.mrf.mxu0
        %v3821 = vadd.f32 %v3724, %v3820
        %v3822 = vpop.f32.mrf.mxu0
        %3823 = vmatprep.mubr.bf16.mxu0 %v2812
        %3824 = vmatmul.mubr.bf16.gmra.mxu0 %v2803
        %v3825 = vpop.f32.mrf.mxu0
        %v3826 = vadd.f32 %v3729, %v3825
        %v3827 = vpop.f32.mrf.mxu0
        %v3828 = vpop.f32.mrf.mxu0
        %v3829 = vadd.f32 %v3732, %v3828
        %v3830 = vpop.f32.mrf.mxu0
        %3831 = vmatprep.mubr.bf16.mxu0 %v2875
        %3832 = vmatmul.mubr.bf16.gmra.mxu0 %v2866
        %v3833 = vpop.f32.mrf.mxu0
        %v3834 = vadd.f32 %v3737, %v3833
        %v3835 = vpop.f32.mrf.mxu0
        %v3836 = vpop.f32.mrf.mxu0
        %v3837 = vadd.f32 %v3740, %v3836
        %v3838 = vpop.f32.mrf.mxu0
        %3839 = vmatprep.mubr.bf16.mxu0 %v2956
        %3840 = vmatmul.mubr.bf16.gmra.mxu0 %v2947
        %v3841 = vpop.f32.mrf.mxu0
        %v3842 = vadd.f32 %v3745, %v3841
        %v3843 = vpop.f32.mrf.mxu0
        %v3844 = vpop.f32.mrf.mxu0
        %v3845 = vadd.f32 %v3748, %v3844
        %v3846 = vpop.f32.mrf.mxu0
        %3847 = vdwg.mxu0
        %3848 = vmatprep.subr.bf16.mxu0 0
        %3849 = vmatpush1.bf16.msra.mxu0 %v3387
        %3850 = vmatprep.subr.bf16.mxu0 0
        %3851 = vmatpush1.bf16.msra.mxu0 %v3386
        %3852 = vmatprep.subr.bf16.mxu0 0
        %3853 = vmatpush1.bf16.msra.mxu0 %v3385
        %3854 = vmatprep.subr.bf16.mxu0 0
        %3855 = vmatpush1.bf16.msra.mxu0 %v3384
        %3856 = vmatprep.subr.bf16.mxu0 0
        %3857 = vmatpush1.bf16.msra.mxu0 %v3383
        %3858 = vmatprep.subr.bf16.mxu0 0
        %3859 = vmatpush1.bf16.msra.mxu0 %v3382
        %3860 = vmatprep.subr.bf16.mxu0 0
        %3861 = vmatpush1.bf16.msra.mxu0 %v3381
        %3862 = vmatprep.subr.bf16.mxu0 0
        %3863 = vmatpush1.bf16.msra.mxu0 %v3380
        %3864 = vmatprep.subr.bf16.mxu0 0
        %3865 = vmatpush2.bf16.msra.mxu0 0
        %3866 = vmatprep.subr.bf16.mxu0 0
        %3867 = vmatpush2.bf16.msra.mxu0 0
        %3868 = vmatprep.subr.bf16.mxu0 0
        %3869 = vmatpush2.bf16.msra.mxu0 0
        %3870 = vmatprep.subr.bf16.mxu0 0
        %3871 = vmatpush2.bf16.msra.mxu0 0
        %3872 = vmatprep.subr.bf16.mxu0 0
        %3873 = vmatpush2.bf16.msra.mxu0 0
        %3874 = vmatprep.subr.bf16.mxu0 0
        %3875 = vmatpush2.bf16.msra.mxu0 0
        %3876 = vmatprep.subr.bf16.mxu0 0
        %3877 = vmatpush2.bf16.msra.mxu0 0
        %3878 = vmatprep.subr.bf16.mxu0 0
        %3879 = vmatpush2.bf16.msra.mxu0 0
        %3880 = vmatprep.mubr.bf16.mxu0 0
        %3881 = vmatmul.mubr.bf16.gmra.mxu0 %v2504
        %v3882 = vpop.f32.mrf.mxu0
        %v3883 = vadd.f32 %v3786, %v3882
        %v3884 = vpop.f32.mrf.mxu0
        %v3885 = vpop.f32.mrf.mxu0
        %v3886 = vadd.f32 %v3789, %v3885
        %v3887 = vpop.f32.mrf.mxu0
        %3888 = vmatprep.mubr.bf16.mxu0 0
        %3889 = vmatmul.mubr.bf16.gmra.mxu0 %v2569
        %v3890 = vpop.f32.mrf.mxu0
        %v3891 = vadd.f32 %v3794, %v3890
        %v3892 = vpop.f32.mrf.mxu0
        %v3893 = vpop.f32.mrf.mxu0
        %v3894 = vadd.f32 %v3797, %v3893
        %v3895 = vpop.f32.mrf.mxu0
        %3896 = vmatprep.mubr.bf16.mxu0 0
        %3897 = vmatmul.mubr.bf16.gmra.mxu0 %v2632
        %v3898 = vpop.f32.mrf.mxu0
        %v3899 = vadd.f32 %v3802, %v3898
        %v3900 = vpop.f32.mrf.mxu0
        %v3901 = vpop.f32.mrf.mxu0
        %v3902 = vadd.f32 %v3805, %v3901
        %v3903 = vpop.f32.mrf.mxu0
        %3904 = vmatprep.mubr.bf16.mxu0 0
        %3905 = vmatmul.mubr.bf16.gmra.mxu0 %v2695
        %v3906 = vpop.f32.mrf.mxu0
        %v3907 = vadd.f32 %v3810, %v3906
        %v3908 = vpop.f32.mrf.mxu0
        %v3909 = vpop.f32.mrf.mxu0
        %v3910 = vadd.f32 %v3813, %v3909
        %v3911 = vpop.f32.mrf.mxu0
        %3912 = vmatprep.mubr.bf16.mxu0 0
        %3913 = vmatmul.mubr.bf16.gmra.mxu0 %v2758
        %v3914 = vpop.f32.mrf.mxu0
        %v3915 = vadd.f32 %v3818, %v3914
        %v3916 = vpop.f32.mrf.mxu0
        %v3917 = vpop.f32.mrf.mxu0
        %v3918 = vadd.f32 %v3821, %v3917
        %v3919 = vpop.f32.mrf.mxu0
        %3920 = vmatprep.mubr.bf16.mxu0 0
        %3921 = vmatmul.mubr.bf16.gmra.mxu0 %v2821
        %v3922 = vpop.f32.mrf.mxu0
        %v3923 = vadd.f32 %v3826, %v3922
        %v3924 = vpop.f32.mrf.mxu0
        %v3925 = vpop.f32.mrf.mxu0
        %v3926 = vadd.f32 %v3829, %v3925
        %v3927 = vpop.f32.mrf.mxu0
        %3928 = vmatprep.mubr.bf16.mxu0 0
        %3929 = vmatmul.mubr.bf16.gmra.mxu0 %v2884
        %v3930 = vpop.f32.mrf.mxu0
        %v3931 = vadd.f32 %v3834, %v3930
        %v3932 = vpop.f32.mrf.mxu0
        %v3933 = vpop.f32.mrf.mxu0
        %v3934 = vadd.f32 %v3837, %v3933
        %v3935 = vpop.f32.mrf.mxu0
        %3936 = vmatprep.mubr.bf16.mxu0 0
        %3937 = vmatmul.mubr.bf16.gmra.mxu0 %v2965
        %v3938 = vpop.f32.mrf.mxu0
        %v3939 = vadd.f32 %v3842, %v3938
        %v3940 = vpop.f32.mrf.mxu0
        %v3941 = vpop.f32.mrf.mxu0
        %v3942 = vadd.f32 %v3845, %v3941
        %v3943 = vpop.f32.mrf.mxu0
        %3944 = vdwg.mxu0
        %v3945 = vmax.f32 %v3883, 0.0
        %v3946 = vmax.f32 %v3886, 0.0
        %v3947 = vmax.f32 %v3891, 0.0
        %v3948 = vmax.f32 %v3894, 0.0
        %v3949 = vmax.f32 %v3899, 0.0
        %v3950 = vmax.f32 %v3902, 0.0
        %v3951 = vmax.f32 %v3907, 0.0
        %v3952 = vmax.f32 %v3910, 0.0
        %v3953 = vmax.f32 %v3915, 0.0
        %v3954 = vmax.f32 %v3918, 0.0
        %v3955 = vmax.f32 %v3923, 0.0
        %v3956 = vmax.f32 %v3926, 0.0
        %v3957 = vmax.f32 %v3931, 0.0
        %v3958 = vmax.f32 %v3934, 0.0
        %v3959 = vmax.f32 %v3939, 0.0
        %v3960 = vmax.f32 %v3942, 0.0
        %v3961 = vpack.c.bf16 %v3946, %v3945
        %v3962 = vpack.c.bf16 %v3948, %v3947
        %v3963 = vpack.c.bf16 %v3950, %v3949
        %v3964 = vpack.c.bf16 %v3952, %v3951
        %v3965 = vpack.c.bf16 %v3954, %v3953
        %v3966 = vpack.c.bf16 %v3956, %v3955
        %v3967 = vpack.c.bf16 %v3958, %v3957
        %v3968 = vpack.c.bf16 %v3960, %v3959
        %v3969 = vld [vmem:[%s5] sm:$0xf]
        %v3970 = vld [vmem:[%s5 + $0x4] sm:$0xf]
        %v3971 = vld [vmem:[%s5 + $0x8] sm:$0xf]
        %v3972 = vld [vmem:[%s5 + $0xc] sm:$0xf]
        %v3973 = vld [vmem:[%s5 + $0x10] sm:$0xf]
        %v3974 = vld [vmem:[%s5 + $0x14] sm:$0xf]
        %v3975 = vld [vmem:[%s5 + $0x18] sm:$0xf]
        %v3976 = vld [vmem:[%s5 + $0x1c] sm:$0xf]
        %v3977 = vld [vmem:[%s5 + $0x20] sm:$0xf]
        %v3978 = vld [vmem:[%s5 + $0x24] sm:$0xf]
        %v3979 = vld [vmem:[%s5 + $0x28] sm:$0xf]
        %v3980 = vld [vmem:[%s5 + $0x2c] sm:$0xf]
        %v3981 = vld [vmem:[%s5 + $0x30] sm:$0xf]
        %v3982 = vld [vmem:[%s5 + $0x34] sm:$0xf]
        %v3983 = vld [vmem:[%s5 + $0x38] sm:$0xf]
        %v3984 = vld [vmem:[%s5 + $0x3c] sm:$0xf]
        %v3985 = vld [vmem:[%s6] sm:$0x1]
        %v3987 = vlaneseq
        %v3988 = vshrl.u32 %v3987, 7
        %v3989 = vsub.s32 0, %v3988
        %v3990 = vrot.slane %v3985, %v3989
        %v4008 = vunpack.c.l.b16 %v3969
        %v4009 = vunpack.c.l.b16 %v3970
        %v4010 = vunpack.c.l.b16 %v3971
        %v4011 = vunpack.c.l.b16 %v3972
        %v4012 = vunpack.c.l.b16 %v3973
        %v4013 = vunpack.c.l.b16 %v3974
        %v4014 = vunpack.c.l.b16 %v3975
        %v4015 = vunpack.c.l.b16 %v3976
        %v4016 = vunpack.c.l.b16 %v3977
        %v4017 = vunpack.c.l.b16 %v3978
        %v4018 = vunpack.c.l.b16 %v3979
        %v4019 = vunpack.c.l.b16 %v3980
        %v4020 = vunpack.c.l.b16 %v3981
        %v4021 = vunpack.c.l.b16 %v3982
        %v4022 = vunpack.c.l.b16 %v3983
        %v4023 = vunpack.c.l.b16 %v3984
        %v4024 = vpack.c.b16 %v4009, %v4008
        %v4025 = vpack.c.b16 %v4011, %v4010
        %v4026 = vpack.c.b16 %v4013, %v4012
        %v4027 = vpack.c.b16 %v4015, %v4014
        %v4028 = vpack.c.b16 %v4017, %v4016
        %v4029 = vpack.c.b16 %v4019, %v4018
        %v4030 = vpack.c.b16 %v4021, %v4020
        %v4031 = vpack.c.b16 %v4023, %v4022
        %4040 = vmatprep.subr.bf16.mxu0 0
        %4041 = vmatpush1.bf16.msra.mxu0 %v4031
        %4042 = vmatprep.subr.bf16.mxu0 0
        %4043 = vmatpush1.bf16.msra.mxu0 %v4030
        %4044 = vmatprep.subr.bf16.mxu0 0
        %4045 = vmatpush1.bf16.msra.mxu0 %v4029
        %4046 = vmatprep.subr.bf16.mxu0 0
        %4047 = vmatpush1.bf16.msra.mxu0 %v4028
        %4048 = vmatprep.subr.bf16.mxu0 0
        %4049 = vmatpush1.bf16.msra.mxu0 %v4027
        %4050 = vmatprep.subr.bf16.mxu0 0
        %4051 = vmatpush1.bf16.msra.mxu0 %v4026
        %4052 = vmatprep.subr.bf16.mxu0 0
        %4053 = vmatpush1.bf16.msra.mxu0 %v4025
        %4054 = vmatprep.subr.bf16.mxu0 0
        %4055 = vmatpush1.bf16.msra.mxu0 %v4024
        %4056 = vmatprep.subr.bf16.mxu0 0
        %4057 = vmatpush2.bf16.msra.mxu0 0
        %4058 = vmatprep.subr.bf16.mxu0 0
        %4059 = vmatpush2.bf16.msra.mxu0 0
        %4060 = vmatprep.subr.bf16.mxu0 0
        %4061 = vmatpush2.bf16.msra.mxu0 0
        %4062 = vmatprep.subr.bf16.mxu0 0
        %4063 = vmatpush2.bf16.msra.mxu0 0
        %4064 = vmatprep.subr.bf16.mxu0 0
        %4065 = vmatpush2.bf16.msra.mxu0 0
        %4066 = vmatprep.subr.bf16.mxu0 0
        %4067 = vmatpush2.bf16.msra.mxu0 0
        %4068 = vmatprep.subr.bf16.mxu0 0
        %4069 = vmatpush2.bf16.msra.mxu0 0
        %4070 = vmatprep.subr.bf16.mxu0 0
        %4071 = vmatpush2.bf16.msra.mxu0 0
        %4072 = vmatprep.mubr.bf16.mxu0 0
        %4073 = vmatmul.mubr.bf16.gmra.mxu0 %v3961
        %v4074 = vpop.f32.mrf.mxu0
        %v4075 = vadd.f32 %v3990, %v4074
        %v4076 = vpop.f32.mrf.mxu0
        %v4077 = vpop.f32.mrf.mxu0
        %v4078 = vadd.f32 %v3990, %v4077
        %v4079 = vpop.f32.mrf.mxu0
        %4080 = vmatprep.mubr.bf16.mxu0 0
        %4081 = vmatmul.mubr.bf16.gmra.mxu0 %v3962
        %v4082 = vpop.f32.mrf.mxu0
        %v4083 = vadd.f32 %v3990, %v4082
        %v4084 = vpop.f32.mrf.mxu0
        %v4085 = vpop.f32.mrf.mxu0
        %v4086 = vadd.f32 %v3990, %v4085
        %v4087 = vpop.f32.mrf.mxu0
        %4088 = vmatprep.mubr.bf16.mxu0 0
        %4089 = vmatmul.mubr.bf16.gmra.mxu0 %v3963
        %v4090 = vpop.f32.mrf.mxu0
        %v4091 = vadd.f32 %v3990, %v4090
        %v4092 = vpop.f32.mrf.mxu0
        %v4093 = vpop.f32.mrf.mxu0
        %v4094 = vadd.f32 %v3990, %v4093
        %v4095 = vpop.f32.mrf.mxu0
        %4096 = vmatprep.mubr.bf16.mxu0 0
        %4097 = vmatmul.mubr.bf16.gmra.mxu0 %v3964
        %v4098 = vpop.f32.mrf.mxu0
        %v4099 = vadd.f32 %v3990, %v4098
        %v4100 = vpop.f32.mrf.mxu0
        %v4101 = vpop.f32.mrf.mxu0
        %v4102 = vadd.f32 %v3990, %v4101
        %v4103 = vpop.f32.mrf.mxu0
        %4104 = vmatprep.mubr.bf16.mxu0 0
        %4105 = vmatmul.mubr.bf16.gmra.mxu0 %v3965
        %v4106 = vpop.f32.mrf.mxu0
        %v4107 = vadd.f32 %v3990, %v4106
        %v4108 = vpop.f32.mrf.mxu0
        %v4109 = vpop.f32.mrf.mxu0
        %v4110 = vadd.f32 %v3990, %v4109
        %v4111 = vpop.f32.mrf.mxu0
        %4112 = vmatprep.mubr.bf16.mxu0 0
        %4113 = vmatmul.mubr.bf16.gmra.mxu0 %v3966
        %v4114 = vpop.f32.mrf.mxu0
        %v4115 = vadd.f32 %v3990, %v4114
        %v4116 = vpop.f32.mrf.mxu0
        %v4117 = vpop.f32.mrf.mxu0
        %v4118 = vadd.f32 %v3990, %v4117
        %v4119 = vpop.f32.mrf.mxu0
        %4120 = vmatprep.mubr.bf16.mxu0 0
        %4121 = vmatmul.mubr.bf16.gmra.mxu0 %v3967
        %v4122 = vpop.f32.mrf.mxu0
        %v4123 = vadd.f32 %v3990, %v4122
        %v4124 = vpop.f32.mrf.mxu0
        %v4125 = vpop.f32.mrf.mxu0
        %v4126 = vadd.f32 %v3990, %v4125
        %v4127 = vpop.f32.mrf.mxu0
        %4128 = vmatprep.mubr.bf16.mxu0 0
        %4129 = vmatmul.mubr.bf16.gmra.mxu0 %v3968
        %v4130 = vpop.f32.mrf.mxu0
        %v4131 = vadd.f32 %v3990, %v4130
        %v4132 = vpop.f32.mrf.mxu0
        %v4133 = vpop.f32.mrf.mxu0
        %v4134 = vadd.f32 %v3990, %v4133
        %v4135 = vpop.f32.mrf.mxu0
        %4136 = vdwg.mxu0
        %v4137 = vmax.f32 %v4075, 0.0
        %v4138 = vmax.f32 %v4078, 0.0
        %v4139 = vmax.f32 %v4083, 0.0
        %v4140 = vmax.f32 %v4086, 0.0
        %v4141 = vmax.f32 %v4091, 0.0
        %v4142 = vmax.f32 %v4094, 0.0
        %v4143 = vmax.f32 %v4099, 0.0
        %v4144 = vmax.f32 %v4102, 0.0
        %v4145 = vmax.f32 %v4107, 0.0
        %v4146 = vmax.f32 %v4110, 0.0
        %v4147 = vmax.f32 %v4115, 0.0
        %v4148 = vmax.f32 %v4118, 0.0
        %v4149 = vmax.f32 %v4123, 0.0
        %v4150 = vmax.f32 %v4126, 0.0
        %v4151 = vmax.f32 %v4131, 0.0
        %v4152 = vmax.f32 %v4134, 0.0
        %v4153 = vld [vmem:[%s7] sm:$0xf]
        %v4154 = vld [vmem:[%s7 + $0x4] sm:$0xf]
        %v4155 = vld [vmem:[%s7 + $0x8] sm:$0xf]
        %v4156 = vld [vmem:[%s7 + $0xc] sm:$0xf]
        %v4157 = vld [vmem:[%s7 + $0x10] sm:$0xf]
        %v4158 = vld [vmem:[%s7 + $0x14] sm:$0xf]
        %v4159 = vld [vmem:[%s7 + $0x18] sm:$0xf]
        %v4160 = vld [vmem:[%s7 + $0x1c] sm:$0xf]
        %v4161 = vld [vmem:[%s7 + $0x20] sm:$0xf]
        %v4162 = vld [vmem:[%s7 + $0x24] sm:$0xf]
        %v4163 = vld [vmem:[%s7 + $0x28] sm:$0xf]
        %v4164 = vld [vmem:[%s7 + $0x2c] sm:$0xf]
        %v4165 = vld [vmem:[%s7 + $0x30] sm:$0xf]
        %v4166 = vld [vmem:[%s7 + $0x34] sm:$0xf]
        %v4167 = vld [vmem:[%s7 + $0x38] sm:$0xf]
        %v4168 = vld [vmem:[%s7 + $0x3c] sm:$0xf]
        %v4169 = vld [vmem:[%s8] sm:$0x1]
        %v4171 = vlaneseq
        %v4172 = vshrl.u32 %v4171, 7
        %v4173 = vsub.s32 0, %v4172
        %v4174 = vrot.slane %v4169, %v4173
        %v4192 = vunpack.c.l.b16 %v4153
        %v4193 = vunpack.c.l.b16 %v4154
        %v4194 = vunpack.c.l.b16 %v4155
        %v4195 = vunpack.c.l.b16 %v4156
        %v4196 = vunpack.c.l.b16 %v4157
        %v4197 = vunpack.c.l.b16 %v4158
        %v4198 = vunpack.c.l.b16 %v4159
        %v4199 = vunpack.c.l.b16 %v4160
        %v4200 = vunpack.c.l.b16 %v4161
        %v4201 = vunpack.c.l.b16 %v4162
        %v4202 = vunpack.c.l.b16 %v4163
        %v4203 = vunpack.c.l.b16 %v4164
        %v4204 = vunpack.c.l.b16 %v4165
        %v4205 = vunpack.c.l.b16 %v4166
        %v4206 = vunpack.c.l.b16 %v4167
        %v4207 = vunpack.c.l.b16 %v4168
        %v4208 = vpack.c.b16 %v4193, %v4192
        %v4209 = vpack.c.b16 %v4195, %v4194
        %v4210 = vpack.c.b16 %v4197, %v4196
        %v4211 = vpack.c.b16 %v4199, %v4198
        %v4212 = vpack.c.b16 %v4201, %v4200
        %v4213 = vpack.c.b16 %v4203, %v4202
        %v4214 = vpack.c.b16 %v4205, %v4204
        %v4215 = vpack.c.b16 %v4207, %v4206
        %4224 = vmatprep.subr.bf16.mxu0 0
        %4225 = vmatpush1.bf16.msra.mxu0 %v4215
        %4226 = vmatprep.subr.bf16.mxu0 0
        %4227 = vmatpush1.bf16.msra.mxu0 %v4214
        %4228 = vmatprep.subr.bf16.mxu0 0
        %4229 = vmatpush1.bf16.msra.mxu0 %v4213
        %4230 = vmatprep.subr.bf16.mxu0 0
        %4231 = vmatpush1.bf16.msra.mxu0 %v4212
        %4232 = vmatprep.subr.bf16.mxu0 0
        %4233 = vmatpush1.bf16.msra.mxu0 %v4211
        %4234 = vmatprep.subr.bf16.mxu0 0
        %4235 = vmatpush1.bf16.msra.mxu0 %v4210
        %4236 = vmatprep.subr.bf16.mxu0 0
        %4237 = vmatpush1.bf16.msra.mxu0 %v4209
        %4238 = vmatprep.subr.bf16.mxu0 0
        %4239 = vmatpush1.bf16.msra.mxu0 %v4208
        %4240 = vmatprep.subr.bf16.mxu0 0
        %4241 = vmatpush2.bf16.msra.mxu0 0
        %4242 = vmatprep.subr.bf16.mxu0 0
        %4243 = vmatpush2.bf16.msra.mxu0 0
        %4244 = vmatprep.subr.bf16.mxu0 0
        %4245 = vmatpush2.bf16.msra.mxu0 0
        %4246 = vmatprep.subr.bf16.mxu0 0
        %4247 = vmatpush2.bf16.msra.mxu0 0
        %4248 = vmatprep.subr.bf16.mxu0 0
        %4249 = vmatpush2.bf16.msra.mxu0 0
        %4250 = vmatprep.subr.bf16.mxu0 0
        %4251 = vmatpush2.bf16.msra.mxu0 0
        %4252 = vmatprep.subr.bf16.mxu0 0
        %4253 = vmatpush2.bf16.msra.mxu0 0
        %4254 = vmatprep.subr.bf16.mxu0 0
        %4255 = vmatpush2.bf16.msra.mxu0 0
        %4256 = vmatprep.mubr.bf16.mxu0 0
        %4257 = vmatmul.mubr.bf16.gmra.mxu0 %v447
        %v4258 = vpop.f32.mrf.mxu0
        %v4259 = vadd.f32 %v4174, %v4258
        %v4260 = vpop.f32.mrf.mxu0
        %v4261 = vpop.f32.mrf.mxu0
        %v4262 = vadd.f32 %v4174, %v4261
        %v4263 = vpop.f32.mrf.mxu0
        %4264 = vmatprep.mubr.bf16.mxu0 0
        %4265 = vmatmul.mubr.bf16.gmra.mxu0 %v448
        %v4266 = vpop.f32.mrf.mxu0
        %v4267 = vadd.f32 %v4174, %v4266
        %v4268 = vpop.f32.mrf.mxu0
        %v4269 = vpop.f32.mrf.mxu0
        %v4270 = vadd.f32 %v4174, %v4269
        %v4271 = vpop.f32.mrf.mxu0
        %4272 = vmatprep.mubr.bf16.mxu0 0
        %4273 = vmatmul.mubr.bf16.gmra.mxu0 %v449
        %v4274 = vpop.f32.mrf.mxu0
        %v4275 = vadd.f32 %v4174, %v4274
        %v4276 = vpop.f32.mrf.mxu0
        %v4277 = vpop.f32.mrf.mxu0
        %v4278 = vadd.f32 %v4174, %v4277
        %v4279 = vpop.f32.mrf.mxu0
        %4280 = vmatprep.mubr.bf16.mxu0 0
        %4281 = vmatmul.mubr.bf16.gmra.mxu0 %v450
        %v4282 = vpop.f32.mrf.mxu0
        %v4283 = vadd.f32 %v4174, %v4282
        %v4284 = vpop.f32.mrf.mxu0
        %v4285 = vpop.f32.mrf.mxu0
        %v4286 = vadd.f32 %v4174, %v4285
        %v4287 = vpop.f32.mrf.mxu0
        %4288 = vmatprep.mubr.bf16.mxu0 0
        %4289 = vmatmul.mubr.bf16.gmra.mxu0 %v451
        %v4290 = vpop.f32.mrf.mxu0
        %v4291 = vadd.f32 %v4174, %v4290
        %v4292 = vpop.f32.mrf.mxu0
        %v4293 = vpop.f32.mrf.mxu0
        %v4294 = vadd.f32 %v4174, %v4293
        %v4295 = vpop.f32.mrf.mxu0
        %4296 = vmatprep.mubr.bf16.mxu0 0
        %4297 = vmatmul.mubr.bf16.gmra.mxu0 %v452
        %v4298 = vpop.f32.mrf.mxu0
        %v4299 = vadd.f32 %v4174, %v4298
        %v4300 = vpop.f32.mrf.mxu0
        %v4301 = vpop.f32.mrf.mxu0
        %v4302 = vadd.f32 %v4174, %v4301
        %v4303 = vpop.f32.mrf.mxu0
        %4304 = vmatprep.mubr.bf16.mxu0 0
        %4305 = vmatmul.mubr.bf16.gmra.mxu0 %v453
        %v4306 = vpop.f32.mrf.mxu0
        %v4307 = vadd.f32 %v4174, %v4306
        %v4308 = vpop.f32.mrf.mxu0
        %v4309 = vpop.f32.mrf.mxu0
        %v4310 = vadd.f32 %v4174, %v4309
        %v4311 = vpop.f32.mrf.mxu0
        %4312 = vmatprep.mubr.bf16.mxu0 0
        %4313 = vmatmul.mubr.bf16.gmra.mxu0 %v454
        %v4314 = vpop.f32.mrf.mxu0
        %v4315 = vadd.f32 %v4174, %v4314
        %v4316 = vpop.f32.mrf.mxu0
        %v4317 = vpop.f32.mrf.mxu0
        %v4318 = vadd.f32 %v4174, %v4317
        %v4319 = vpop.f32.mrf.mxu0
        %4320 = vdwg.mxu0
        %v4321 = vadd.f32 %v4137, %v4259
        %v4322 = vadd.f32 %v4138, %v4262
        %v4323 = vadd.f32 %v4139, %v4267
        %v4324 = vadd.f32 %v4140, %v4270
        %v4325 = vadd.f32 %v4141, %v4275
        %v4326 = vadd.f32 %v4142, %v4278
        %v4327 = vadd.f32 %v4143, %v4283
        %v4328 = vadd.f32 %v4144, %v4286
        %v4329 = vadd.f32 %v4145, %v4291
        %v4330 = vadd.f32 %v4146, %v4294
        %v4331 = vadd.f32 %v4147, %v4299
        %v4332 = vadd.f32 %v4148, %v4302
        %v4333 = vadd.f32 %v4149, %v4307
        %v4334 = vadd.f32 %v4150, %v4310
        %v4335 = vadd.f32 %v4151, %v4315
        %v4336 = vadd.f32 %v4152, %v4318
        %4337 = vst [vmem:[%s349] sm:$0xff] %v4321
        %4338 = vst [vmem:[%s349 + $0x8] sm:$0xff] %v4322
        %4339 = vst [vmem:[%s349 + $0x10] sm:$0xff] %v4323
        %4340 = vst [vmem:[%s349 + $0x18] sm:$0xff] %v4324
        %4341 = vst [vmem:[%s349 + $0x20] sm:$0xff] %v4325
        %4342 = vst [vmem:[%s349 + $0x28] sm:$0xff] %v4326
        %4343 = vst [vmem:[%s349 + $0x30] sm:$0xff] %v4327
        %4344 = vst [vmem:[%s349 + $0x38] sm:$0xff] %v4328
        %4345 = vst [vmem:[%s349 + $0x40] sm:$0xff] %v4329
        %4346 = vst [vmem:[%s349 + $0x48] sm:$0xff] %v4330
        %4347 = vst [vmem:[%s349 + $0x50] sm:$0xff] %v4331
        %4348 = vst [vmem:[%s349 + $0x58] sm:$0xff] %v4332
        %4349 = vst [vmem:[%s349 + $0x60] sm:$0xff] %v4333
        %4350 = vst [vmem:[%s349 + $0x68] sm:$0xff] %v4334
        %4351 = vst [vmem:[%s349 + $0x70] sm:$0xff] %v4335
        %4352 = vst [vmem:[%s349 + $0x78] sm:$0xff] %v4336
        %s4353 = sand.u32 %s241, 1
        %s4354 = scalar_lea.sflag [#allocation4], %s4353
        %s4355 = sand.u32 %s241, 1
        %s4356 = smul.addr %s4355, 128
        %s4357 = scalar_lea.vmem [#allocation3], %s4356
        // Predicated region
        $region57: #{block_forward_pallas.1} parent=55 // pred_check
          %p4358 = pneg %p251
        $region58: #{block_forward_pallas.1} parent=55 // pred_check_branch
          %4360 = sbr.rel (%p4358) target = $region60
        $region59: #{block_forward_pallas.1} parent=55 // pred_region
          %s4361 = smul.u32 16, %s28
          %s4363 = ssub.s32 2048, 2048
          %4364 = vsyncadd %s4354, %s4363
          %s4365 = smul.addr %s27, 32
          %s4366 = sadd.s32 %s4361, %s4365
          %s4367 = smul.addr %s4366, 128
          %s4368 = scalar_lea.hbm %s9, %s4367
          %s4369 = sshll.u32 %s4357, 4
          %s4370 = int_to_ptr.vmem [resolvable:$true] %s4369
          %4375 = dma.vmem_to_hbm [thread:$0]  %s4370, 2048, %s4368, %s4354, 128, 128, 8
        $region60: #{block_forward_pallas.1} parent=55 // pred_fallthru
          _
      $region56: #{block_forward_pallas.1} parent=5 // pred_fallthru
        _
      %p4376 = scmp.le.s32.totalorder 2, %s18
      // Predicated region
      $region61: #{block_forward_pallas.1} parent=5 // pred_check
        %p4377 = pneg %p4376
      $region62: #{block_forward_pallas.1} parent=5 // pred_check_branch
        %4379 = sbr.rel (%p4377) target = $region64
      $region63: #{block_forward_pallas.1} parent=5 // pred_region
        %s4380 = ssub.s32 %s18, 2
        // Predicated region
        $region65: #{block_forward_pallas.1} parent=63 // pred_check
          %p4381 = pneg %p257
        $region66: #{block_forward_pallas.1} parent=63 // pred_check_branch
          %4383 = sbr.rel (%p4381) target = $region68
        $region67: #{block_forward_pallas.1} parent=63 // pred_region
          %s4384 = sand.u32 %s242, 1
          %s4385 = scalar_lea.sflag [#allocation4], %s4384
          %s4386 = sand.u32 %s242, 1
          %s4387 = smul.addr %s4386, 128
          %s4388 = scalar_lea.vmem [#allocation3], %s4387
          %4389 = dma.done %s4385, 2048
        $region68: #{block_forward_pallas.1} parent=63 // pred_fallthru
          _
      $region64: #{block_forward_pallas.1} parent=5 // pred_fallthru
        _
    $region6: #{block_forward_pallas.1} parent=1 // loop_footer
      %s22 = sadd.s32 1, %s18
    $region7: #{block_forward_pallas.1} parent=1 // loop_footer_branch
      %17 = sbr.rel target = $region3
    $region8: #{block_forward_pallas.1} parent=1 // loop_exit
      _
    %4390 = vsyncpa [#allocation4], 1
    %s4391 = scalar_lea.sflag [#allocation4], 1
    %4392 = vsyncpa %s4391, 1

</llo_original>
